<compile_context>
chip_gen: v7x
topology: tpu7x:2x2x1
jax: 0.10.0
libtpu: 0.0.40
codegen_flags: <defaults>
</compile_context>

<pallas_src>
import functools
import math

import jax
import jax.numpy as jnp
from jax import lax
from jax.experimental import pallas as pl
from jax.experimental.pallas import tpu as pltpu


# Packed gate-column layout (each block is H lanes, 8 blocks = 8H = 128 @ H=16):
#   0:i_fwd 1:i_bwd 2:f_fwd 3:f_bwd 4:o_fwd 5:o_bwd 6:g_fwd 7:g_bwd
_BLOCKS = [("i", 0), ("i", 1), ("f", 0), ("f", 1), ("o", 0), ("o", 1), ("g", 0), ("g", 1)]
_TORCH_GATE = {"i": 0, "f": 1, "g": 2, "o": 3}  # PyTorch row order of W_ih/W_hh


def _sigmoid_via_tanh(z):
    # sigmoid(z) = 0.5*(1 + tanh(z/2)): one EUP op, no divide on the critical path.
    return 0.5 * jnp.tanh(0.5 * z) + 0.5


def _reverse_time(v):
    # Static reverse along the leading (time) axis; W is a trace-time constant.
    W = v.shape[0]
    return jnp.concatenate([v[t:t + 1] for t in range(W - 1, -1, -1)], axis=0)


# ----------------------------------------------------------------------------
# Fused Pallas kernel: L-layer bidirectional LSTM + Linear(2H, 1)
# ----------------------------------------------------------------------------
def lstm_fc_kernel(x_ref, h0_ref, c0_ref, *refs, hidden, num_layers, seq_len):
    H = hidden
    W = seq_len
    G = 8 * H
    params = refs[:-3]
    out_ref, gx_ref, lo_ref = refs[-3], refs[-2], refs[-1]
    B = x_ref.shape[1]                       # time-major input (W, B, 1)

    cur = x_ref[...]                         # (W, B, in)
    idx = 0
    for layer in range(num_layers):
        w_ih = params[idx][...]              # (2*in, 8H)  rows 0:in -> fwd, in:2in -> bwd
        w_hh = params[idx + 1][...]          # (2H, 8H)    fused fwd+bwd recurrent weights
        b = params[idx + 2][...]             # (1, 8H)     b_ih + b_hh, both directions
        idx += 3
        in_size = cur.shape[-1]

        # --- non-recurrent projection, both directions, staged in VMEM scratch ---
        cur_rev = _reverse_time(cur)         # bwd direction consumes time W-1-t
        if in_size == 1:
            # layer 0: input_size == 1 -> broadcast multiply instead of a K=2 matmul
            gx = (cur * w_ih[0:1, :].reshape(1, 1, G)
                  + cur_rev * w_ih[1:2, :].reshape(1, 1, G))
        else:
            xx = jnp.concatenate([cur, cur_rev], axis=-1)          # (W, B, 2*in)
            gx = jnp.dot(xx.reshape(W * B, 2 * in_size), w_ih,
                         preferred_element_type=jnp.float32).reshape(W, B, G)
        gx_ref[...] = gx + b.reshape(1, 1, G)

        # --- shared time loop over both directions ---
        h_cat = jnp.concatenate([h0_ref[2 * layer], h0_ref[2 * layer + 1]], axis=-1)
        c_cat = jnp.concatenate([c0_ref[2 * layer], c0_ref[2 * layer + 1]], axis=-1)

        def step(t, carry, w_hh=w_hh):
            h_c, c_c = carry
            # ONE fused 128-lane recurrent matmul for both directions.
            gates = gx_ref[t] + jnp.dot(h_c, w_hh,
                                        preferred_element_type=jnp.float32)  # (B, 8H)
            s = _sigmoid_via_tanh(gates[:, 0:6 * H])    # [i_f,i_b,f_f,f_b,o_f,o_b]
            g = jnp.tanh(gates[:, 6 * H:8 * H])         # [g_f, g_b]
            c_n = s[:, 2 * H:4 * H] * c_c + s[:, 0:2 * H] * g
            h_n = s[:, 4 * H:6 * H] * jnp.tanh(c_n)
            # fwd half is output time t; bwd half is output time W-1-t.
            lo_ref[pl.ds(t, 1), :, 0:H] = h_n[None, :, 0:H]
            lo_ref[pl.ds(W - 1 - t, 1), :, H:2 * H] = h_n[None, :, H:2 * H]
            return (h_n, c_n)

        h_cat, c_cat = lax.fori_loop(0, W, step, (h_cat, c_cat), unroll=True)
        cur = lo_ref[...]                    # (W, B, 2H), real-time ordered [h_f | h_b]
        # nn.LSTM inter-layer dropout is identity in eval mode -> omitted.

    # --- final Linear(2H, 1) as a lane reduction ---
    fc_w = params[idx][...]                  # (1, 2H)
    fc_b = params[idx + 1][...]              # (1, 1)
    y = jnp.sum(cur * fc_w.reshape(1, 1, 2 * H), axis=-1) + fc_b   # (W, B)
    out_ref[...] = y.astype(out_ref.dtype)


# ----------------------------------------------------------------------------
# Wrapper: single gridless pallas_call, everything VMEM-resident.
# ----------------------------------------------------------------------------
def decoder_forward(x, h0, c0, kernel_params, *, hidden, num_layers):
    B, W, _ = x.shape
    x_t = jnp.transpose(x, (1, 0, 2))        # time-major (W, B, 1); layout-only, outside kernel
    out_wb = pl.pallas_call(
        functools.partial(lstm_fc_kernel, hidden=hidden,
                          num_layers=num_layers, seq_len=W),
        out_shape=jax.ShapeDtypeStruct((W, B), jnp.float32),
        scratch_shapes=[pltpu.VMEM((W, B, 8 * hidden), jnp.float32),   # staged gx
                        pltpu.VMEM((W, B, 2 * hidden), jnp.float32)],  # layer output
    )(x_t, h0, c0, *kernel_params)
    return jnp.transpose(out_wb)[..., None]  # (B, W, 1), matching the torch module


# ----------------------------------------------------------------------------
# Parameter init (PyTorch LSTM/Linear-style uniform, torch weight layout) and
# packing into the fused / column-permuted kernel layout.
# ----------------------------------------------------------------------------
def init_params(key, hidden, num_layers):
    H = hidden
    bound = 1.0 / math.sqrt(H)
    keys = iter(jax.random.split(key, num_layers * 2 * 4 + 2))
    layers = []
    in_size = 1
    for _ in range(num_layers):
        dirs = []
        for _d in range(2):
            w_ih = jax.random.uniform(next(keys), (4 * H, in_size), jnp.float32, -bound, bound)
            w_hh = jax.random.uniform(next(keys), (4 * H, H), jnp.float32, -bound, bound)
            b_ih = jax.random.uniform(next(keys), (4 * H,), jnp.float32, -bound, bound)
            b_hh = jax.random.uniform(next(keys), (4 * H,), jnp.float32, -bound, bound)
            dirs.append((w_ih, w_hh, b_ih, b_hh))
        layers.append(dirs)
        in_size = 2 * H
    fb = 1.0 / math.sqrt(2 * H)
    fc_w = jax.random.uniform(next(keys), (1, 2 * H), jnp.float32, -fb, fb)
    fc_b = jax.random.uniform(next(keys), (1,), jnp.float32, -fb, fb)
    return {"layers": layers, "fc_w": fc_w, "fc_b": fc_b}


def pack_params(params, hidden, num_layers):
    """Pack per-direction torch-layout weights into fused, column-permuted arrays."""
    H = hidden
    flat = []
    in_size = 1
    for layer in range(num_layers):
        dirs = params["layers"][layer]
        w_ih_pack = jnp.zeros((2 * in_size, 8 * H), jnp.float32)
        w_hh_pack = jnp.zeros((2 * H, 8 * H), jnp.float32)
        b_pack = jnp.zeros((1, 8 * H), jnp.float32)
        for blk, (gate, d) in enumerate(_BLOCKS):
            g = _TORCH_GATE[gate]
            w_ih, w_hh, b_ih, b_hh = dirs[d]
            col = slice(blk * H, (blk + 1) * H)
            grow = slice(g * H, (g + 1) * H)
            w_ih_pack = w_ih_pack.at[d * in_size:(d + 1) * in_size, col].set(w_ih[grow, :].T)
            w_hh_pack = w_hh_pack.at[d * H:(d + 1) * H, col].set(w_hh[grow, :].T)
            b_pack = b_pack.at[0, col].set(b_ih[grow] + b_hh[grow])
        flat += [w_ih_pack, w_hh_pack, b_pack]
        in_size = 2 * H
    flat += [params["fc_w"], params["fc_b"].reshape(1, 1)]
    return flat


# ----------------------------------------------------------------------------
# Independent pure-JAX reference (torch-layout params, lax.scan) for correctness.
# ----------------------------------------------------------------------------
def ref_forward(x, h0, c0, params, *, hidden, num_layers):
    H = hidden
    cur = x
    for layer in range(num_layers):
        dir_outs = []
        for d in range(2):
            w_ih, w_hh, b_ih, b_hh = params["layers"][layer][d]
            gx = jnp.einsum("bwi,gi->bwg", cur, w_ih) + b_ih + b_hh   # (B, W, 4H)

            def step(carry, gx_t, w_hh=w_hh):
                h, c = carry
                gates = gx_t + h @ w_hh.T
                i = jax.nn.sigmoid(gates[:, 0:H])
                f = jax.nn.sigmoid(gates[:, H:2 * H])
                g = jnp.tanh(gates[:, 2 * H:3 * H])
                o = jax.nn.sigmoid(gates[:, 3 * H:4 * H])
                c2 = f * c + i * g
                h2 = o * jnp.tanh(c2)
                return (h2, c2), h2

            _, hs = lax.scan(step, (h0[2 * layer + d], c0[2 * layer + d]),
                             jnp.swapaxes(gx, 0, 1), reverse=(d == 1))
            dir_outs.append(jnp.swapaxes(hs, 0, 1))                   # (B, W, H)
        cur = jnp.concatenate(dir_outs, axis=-1)                      # (B, W, 2H)
    return jnp.einsum("bwd,od->bwo", cur, params["fc_w"]) + params["fc_b"]


# ----------------------------------------------------------------------------
if __name__ == "__main__":
    hidden, num_layers = 16, 2       # 8*hidden = 128 -> one full lane width per step
    B, W = 2, 8

    key = jax.random.PRNGKey(0)
    kp, kx, kh, kc = jax.random.split(key, 4)
    raw_params = init_params(kp, hidden, num_layers)
    packed_params = pack_params(raw_params, hidden, num_layers)

    x = jax.random.normal(kx, (B, W, 1), dtype=jnp.float32)
    h0 = jax.random.normal(kh, (2 * num_layers, B, hidden), dtype=jnp.float32)
    c0 = jax.random.normal(kc, (2 * num_layers, B, hidden), dtype=jnp.float32)

    out = decoder_forward(x, h0, c0, packed_params,
                          hidden=hidden, num_layers=num_layers)
    out = jax.block_until_ready(out)
    assert out.shape == (B, W, 1), out.shape

    ref = jax.block_until_ready(
        ref_forward(x, h0, c0, raw_params, hidden=hidden, num_layers=num_layers))
    assert jnp.all(jnp.isfinite(out))
    assert jnp.allclose(out, ref, rtol=1e-4, atol=1e-4), (out, ref)

    print("KERNEL_OK")
</pallas_src>

<mosaic_0001>
module attributes {stable_mosaic.version = 11 : i64} {
  func.func @lstm_fc_kernel(%arg0: memref<8x2x1xf32, #tpu.memory_space<vmem>>, %arg1: memref<4x2x16xf32, #tpu.memory_space<vmem>>, %arg2: memref<4x2x16xf32, #tpu.memory_space<vmem>>, %arg3: memref<2x128xf32, #tpu.memory_space<vmem>>, %arg4: memref<32x128xf32, #tpu.memory_space<vmem>>, %arg5: memref<1x128xf32, #tpu.memory_space<vmem>>, %arg6: memref<64x128xf32, #tpu.memory_space<vmem>>, %arg7: memref<32x128xf32, #tpu.memory_space<vmem>>, %arg8: memref<1x128xf32, #tpu.memory_space<vmem>>, %arg9: memref<1x32xf32, #tpu.memory_space<vmem>>, %arg10: memref<1x1xf32, #tpu.memory_space<vmem>>, %arg11: memref<8x2xf32, #tpu.memory_space<vmem>>, %arg12: memref<8x2x128xf32, #tpu.memory_space<vmem>>, %arg13: memref<8x2x32xf32, #tpu.memory_space<vmem>>) attributes {dimension_semantics = [], scalar_prefetch = 0 : i64, scratch_operands = 2 : i64, tpu.core_type = #tpu.core_type<tc>} {
    %c0 = arith.constant 0 : index
    %c0_0 = arith.constant 0 : index
    %c0_1 = arith.constant 0 : index
    %0 = vector.load %arg0[%c0, %c0_0, %c0_1] : memref<8x2x1xf32, #tpu.memory_space<vmem>>, vector<8x2x1xf32>
    %c0_2 = arith.constant 0 : index
    %c0_3 = arith.constant 0 : index
    %1 = vector.load %arg3[%c0_2, %c0_3] : memref<2x128xf32, #tpu.memory_space<vmem>>, vector<2x128xf32>
    %c0_4 = arith.constant 0 : index
    %c0_5 = arith.constant 0 : index
    %2 = vector.load %arg4[%c0_4, %c0_5] : memref<32x128xf32, #tpu.memory_space<vmem>>, vector<32x128xf32>
    %c0_6 = arith.constant 0 : index
    %c0_7 = arith.constant 0 : index
    %3 = vector.load %arg5[%c0_6, %c0_7] : memref<1x128xf32, #tpu.memory_space<vmem>>, vector<1x128xf32>
    %4 = vector.extract_strided_slice %0 {offsets = [7, 0, 0], sizes = [1, 2, 1], strides = [1, 1, 1]} : vector<8x2x1xf32> to vector<1x2x1xf32>
    %5 = vector.extract_strided_slice %0 {offsets = [6, 0, 0], sizes = [1, 2, 1], strides = [1, 1, 1]} : vector<8x2x1xf32> to vector<1x2x1xf32>
    %6 = vector.extract_strided_slice %0 {offsets = [5, 0, 0], sizes = [1, 2, 1], strides = [1, 1, 1]} : vector<8x2x1xf32> to vector<1x2x1xf32>
    %7 = vector.extract_strided_slice %0 {offsets = [4, 0, 0], sizes = [1, 2, 1], strides = [1, 1, 1]} : vector<8x2x1xf32> to vector<1x2x1xf32>
    %8 = vector.extract_strided_slice %0 {offsets = [3, 0, 0], sizes = [1, 2, 1], strides = [1, 1, 1]} : vector<8x2x1xf32> to vector<1x2x1xf32>
    %9 = vector.extract_strided_slice %0 {offsets = [2, 0, 0], sizes = [1, 2, 1], strides = [1, 1, 1]} : vector<8x2x1xf32> to vector<1x2x1xf32>
    %10 = vector.extract_strided_slice %0 {offsets = [1, 0, 0], sizes = [1, 2, 1], strides = [1, 1, 1]} : vector<8x2x1xf32> to vector<1x2x1xf32>
    %11 = vector.extract_strided_slice %0 {offsets = [0, 0, 0], sizes = [1, 2, 1], strides = [1, 1, 1]} : vector<8x2x1xf32> to vector<1x2x1xf32>
    %12 = tpu.concatenate %4, %5, %6, %7, %8, %9, %10, %11 in 0 : vector<1x2x1xf32>, vector<1x2x1xf32>, vector<1x2x1xf32>, vector<1x2x1xf32>, vector<1x2x1xf32>, vector<1x2x1xf32>, vector<1x2x1xf32>, vector<1x2x1xf32> -> vector<8x2x1xf32>
    %13 = vector.extract_strided_slice %1 {offsets = [0, 0], sizes = [1, 128], strides = [1, 1]} : vector<2x128xf32> to vector<1x128xf32>
    %14 = vector.shape_cast %13 : vector<1x128xf32> to vector<1x1x128xf32>
    %15 = vector.broadcast %0 : vector<8x2x1xf32> to vector<8x2x128xf32>
    %16 = vector.broadcast %14 : vector<1x1x128xf32> to vector<8x2x128xf32>
    %17 = arith.mulf %15, %16 : vector<8x2x128xf32>
    %18 = vector.extract_strided_slice %1 {offsets = [1, 0], sizes = [1, 128], strides = [1, 1]} : vector<2x128xf32> to vector<1x128xf32>
    %19 = vector.shape_cast %18 : vector<1x128xf32> to vector<1x1x128xf32>
    %20 = vector.broadcast %12 : vector<8x2x1xf32> to vector<8x2x128xf32>
    %21 = vector.broadcast %19 : vector<1x1x128xf32> to vector<8x2x128xf32>
    %22 = arith.mulf %20, %21 : vector<8x2x128xf32>
    %23 = arith.addf %17, %22 : vector<8x2x128xf32>
    %24 = vector.shape_cast %3 : vector<1x128xf32> to vector<1x1x128xf32>
    %25 = vector.broadcast %24 : vector<1x1x128xf32> to vector<8x2x128xf32>
    %26 = arith.addf %23, %25 : vector<8x2x128xf32>
    %c0_8 = arith.constant 0 : index
    %c0_9 = arith.constant 0 : index
    %c0_10 = arith.constant 0 : index
    %27 = vector.load %arg12[%c0_8, %c0_9, %c0_10] : memref<8x2x128xf32, #tpu.memory_space<vmem>>, vector<8x2x128xf32>
    tpu.vector_store %arg12[%c0_8, %c0_9, %c0_10], %26 {strides = array<i32>} : memref<8x2x128xf32, #tpu.memory_space<vmem>>, vector<8x2x128xf32>,
    %c0_11 = arith.constant 0 : index
    %c0_12 = arith.constant 0 : index
    %c0_13 = arith.constant 0 : index
    %28 = vector.load %arg1[%c0_11, %c0_12, %c0_13] : memref<4x2x16xf32, #tpu.memory_space<vmem>>, vector<1x2x16xf32>
    %29 = vector.shape_cast %28 : vector<1x2x16xf32> to vector<2x16xf32>
    %c1 = arith.constant 1 : index
    %c0_14 = arith.constant 0 : index
    %c0_15 = arith.constant 0 : index
    %30 = vector.load %arg1[%c1, %c0_14, %c0_15] : memref<4x2x16xf32, #tpu.memory_space<vmem>>, vector<1x2x16xf32>
    %31 = vector.shape_cast %30 : vector<1x2x16xf32> to vector<2x16xf32>
    %32 = tpu.concatenate %29, %31 in 1 : vector<2x16xf32>, vector<2x16xf32> -> vector<2x32xf32>
    %c0_16 = arith.constant 0 : index
    %c0_17 = arith.constant 0 : index
    %c0_18 = arith.constant 0 : index
    %33 = vector.load %arg2[%c0_16, %c0_17, %c0_18] : memref<4x2x16xf32, #tpu.memory_space<vmem>>, vector<1x2x16xf32>
    %34 = vector.shape_cast %33 : vector<1x2x16xf32> to vector<2x16xf32>
    %c1_19 = arith.constant 1 : index
    %c0_20 = arith.constant 0 : index
    %c0_21 = arith.constant 0 : index
    %35 = vector.load %arg2[%c1_19, %c0_20, %c0_21] : memref<4x2x16xf32, #tpu.memory_space<vmem>>, vector<1x2x16xf32>
    %36 = vector.shape_cast %35 : vector<1x2x16xf32> to vector<2x16xf32>
    %37 = tpu.concatenate %34, %36 in 1 : vector<2x16xf32>, vector<2x16xf32> -> vector<2x32xf32>
    %c0_i32 = arith.constant 0 : i32
    %38 = arith.index_cast %c0_i32 : i32 to index
    %c0_22 = arith.constant 0 : index
    %c0_23 = arith.constant 0 : index
    %39 = vector.load %arg12[%38, %c0_22, %c0_23] : memref<8x2x128xf32, #tpu.memory_space<vmem>>, vector<1x2x128xf32>
    %40 = vector.shape_cast %39 : vector<1x2x128xf32> to vector<2x128xf32>
    %cst = arith.constant dense<0.000000e+00> : vector<2x128xf32>
    %41 = tpu.matmul %32, %2, %cst {dimension_numbers = #tpu.dot_dimension_numbers<[1], [0], [0], [1], [0, 0, 1, 1], [], []>} : vector<2x32xf32>, vector<32x128xf32>, vector<2x128xf32> -> vector<2x128xf32>
    %42 = arith.addf %40, %41 : vector<2x128xf32>
    %43 = vector.extract_strided_slice %42 {offsets = [0, 0], sizes = [2, 96], strides = [1, 1]} : vector<2x128xf32> to vector<2x96xf32>
    %cst_24 = arith.constant 5.000000e-01 : f32
    %44 = vector.broadcast %cst_24 : f32 to vector<2x96xf32>
    %45 = arith.mulf %44, %43 : vector<2x96xf32>
    %46 = math.tanh %45 : vector<2x96xf32>
    %cst_25 = arith.constant 5.000000e-01 : f32
    %47 = vector.broadcast %cst_25 : f32 to vector<2x96xf32>
    %48 = arith.mulf %47, %46 : vector<2x96xf32>
    %cst_26 = arith.constant 5.000000e-01 : f32
    %49 = vector.broadcast %cst_26 : f32 to vector<2x96xf32>
    %50 = arith.addf %48, %49 : vector<2x96xf32>
    %51 = vector.extract_strided_slice %42 {offsets = [0, 96], sizes = [2, 32], strides = [1, 1]} : vector<2x128xf32> to vector<2x32xf32>
    %52 = math.tanh %51 : vector<2x32xf32>
    %53 = vector.extract_strided_slice %50 {offsets = [0, 32], sizes = [2, 32], strides = [1, 1]} : vector<2x96xf32> to vector<2x32xf32>
    %54 = arith.mulf %53, %37 : vector<2x32xf32>
    %55 = vector.extract_strided_slice %50 {offsets = [0, 0], sizes = [2, 32], strides = [1, 1]} : vector<2x96xf32> to vector<2x32xf32>
    %56 = arith.mulf %55, %52 : vector<2x32xf32>
    %57 = arith.addf %54, %56 : vector<2x32xf32>
    %58 = vector.extract_strided_slice %50 {offsets = [0, 64], sizes = [2, 32], strides = [1, 1]} : vector<2x96xf32> to vector<2x32xf32>
    %59 = math.tanh %57 : vector<2x32xf32>
    %60 = arith.mulf %58, %59 : vector<2x32xf32>
    %61 = vector.extract_strided_slice %60 {offsets = [0, 0], sizes = [2, 16], strides = [1, 1]} : vector<2x32xf32> to vector<2x16xf32>
    %62 = vector.shape_cast %61 : vector<2x16xf32> to vector<1x2x16xf32>
    %63 = arith.index_cast %c0_i32 : i32 to index
    %c0_27 = arith.constant 0 : index
    %c0_28 = arith.constant 0 : index
    %64 = vector.load %arg13[%63, %c0_27, %c0_28] : memref<8x2x32xf32, #tpu.memory_space<vmem>>, vector<1x2x16xf32>
    tpu.vector_store %arg13[%63, %c0_27, %c0_28], %62 {strides = array<i32>} : memref<8x2x32xf32, #tpu.memory_space<vmem>>, vector<1x2x16xf32>,
    %65 = vector.extract_strided_slice %60 {offsets = [0, 16], sizes = [2, 16], strides = [1, 1]} : vector<2x32xf32> to vector<2x16xf32>
    %66 = vector.shape_cast %65 : vector<2x16xf32> to vector<1x2x16xf32>
    %c7_i32 = arith.constant 7 : i32
    %67 = arith.subi %c7_i32, %c0_i32 : i32
    %68 = arith.index_cast %67 : i32 to index
    %c0_29 = arith.constant 0 : index
    %c16 = arith.constant 16 : index
    %69 = vector.load %arg13[%68, %c0_29, %c16] : memref<8x2x32xf32, #tpu.memory_space<vmem>>, vector<1x2x16xf32>
    tpu.vector_store %arg13[%68, %c0_29, %c16], %66 {strides = array<i32>} : memref<8x2x32xf32, #tpu.memory_space<vmem>>, vector<1x2x16xf32>,
    %c1_i32 = arith.constant 1 : i32
    %70 = arith.index_cast %c1_i32 : i32 to index
    %c0_30 = arith.constant 0 : index
    %c0_31 = arith.constant 0 : index
    %71 = vector.load %arg12[%70, %c0_30, %c0_31] : memref<8x2x128xf32, #tpu.memory_space<vmem>>, vector<1x2x128xf32>
    %72 = vector.shape_cast %71 : vector<1x2x128xf32> to vector<2x128xf32>
    %cst_32 = arith.constant dense<0.000000e+00> : vector<2x128xf32>
    %73 = tpu.matmul %60, %2, %cst_32 {dimension_numbers = #tpu.dot_dimension_numbers<[1], [0], [0], [1], [0, 0, 1, 1], [], []>} : vector<2x32xf32>, vector<32x128xf32>, vector<2x128xf32> -> vector<2x128xf32>
    %74 = arith.addf %72, %73 : vector<2x128xf32>
    %75 = vector.extract_strided_slice %74 {offsets = [0, 0], sizes = [2, 96], strides = [1, 1]} : vector<2x128xf32> to vector<2x96xf32>
    %cst_33 = arith.constant 5.000000e-01 : f32
    %76 = vector.broadcast %cst_33 : f32 to vector<2x96xf32>
    %77 = arith.mulf %76, %75 : vector<2x96xf32>
    %78 = math.tanh %77 : vector<2x96xf32>
    %cst_34 = arith.constant 5.000000e-01 : f32
    %79 = vector.broadcast %cst_34 : f32 to vector<2x96xf32>
    %80 = arith.mulf %79, %78 : vector<2x96xf32>
    %cst_35 = arith.constant 5.000000e-01 : f32
    %81 = vector.broadcast %cst_35 : f32 to vector<2x96xf32>
    %82 = arith.addf %80, %81 : vector<2x96xf32>
    %83 = vector.extract_strided_slice %74 {offsets = [0, 96], sizes = [2, 32], strides = [1, 1]} : vector<2x128xf32> to vector<2x32xf32>
    %84 = math.tanh %83 : vector<2x32xf32>
    %85 = vector.extract_strided_slice %82 {offsets = [0, 32], sizes = [2, 32], strides = [1, 1]} : vector<2x96xf32> to vector<2x32xf32>
    %86 = arith.mulf %85, %57 : vector<2x32xf32>
    %87 = vector.extract_strided_slice %82 {offsets = [0, 0], sizes = [2, 32], strides = [1, 1]} : vector<2x96xf32> to vector<2x32xf32>
    %88 = arith.mulf %87, %84 : vector<2x32xf32>
    %89 = arith.addf %86, %88 : vector<2x32xf32>
    %90 = vector.extract_strided_slice %82 {offsets = [0, 64], sizes = [2, 32], strides = [1, 1]} : vector<2x96xf32> to vector<2x32xf32>
    %91 = math.tanh %89 : vector<2x32xf32>
    %92 = arith.mulf %90, %91 : vector<2x32xf32>
    %93 = vector.extract_strided_slice %92 {offsets = [0, 0], sizes = [2, 16], strides = [1, 1]} : vector<2x32xf32> to vector<2x16xf32>
    %94 = vector.shape_cast %93 : vector<2x16xf32> to vector<1x2x16xf32>
    %95 = arith.index_cast %c1_i32 : i32 to index
    %c0_36 = arith.constant 0 : index
    %c0_37 = arith.constant 0 : index
    %96 = vector.load %arg13[%95, %c0_36, %c0_37] : memref<8x2x32xf32, #tpu.memory_space<vmem>>, vector<1x2x16xf32>
    tpu.vector_store %arg13[%95, %c0_36, %c0_37], %94 {strides = array<i32>} : memref<8x2x32xf32, #tpu.memory_space<vmem>>, vector<1x2x16xf32>,
    %97 = vector.extract_strided_slice %92 {offsets = [0, 16], sizes = [2, 16], strides = [1, 1]} : vector<2x32xf32> to vector<2x16xf32>
    %98 = vector.shape_cast %97 : vector<2x16xf32> to vector<1x2x16xf32>
    %c7_i32_38 = arith.constant 7 : i32
    %99 = arith.subi %c7_i32_38, %c1_i32 : i32
    %100 = arith.index_cast %99 : i32 to index
    %c0_39 = arith.constant 0 : index
    %c16_40 = arith.constant 16 : index
    %101 = vector.load %arg13[%100, %c0_39, %c16_40] : memref<8x2x32xf32, #tpu.memory_space<vmem>>, vector<1x2x16xf32>
    tpu.vector_store %arg13[%100, %c0_39, %c16_40], %98 {strides = array<i32>} : memref<8x2x32xf32, #tpu.memory_space<vmem>>, vector<1x2x16xf32>,
    %c2_i32 = arith.constant 2 : i32
    %102 = arith.index_cast %c2_i32 : i32 to index
    %c0_41 = arith.constant 0 : index
    %c0_42 = arith.constant 0 : index
    %103 = vector.load %arg12[%102, %c0_41, %c0_42] : memref<8x2x128xf32, #tpu.memory_space<vmem>>, vector<1x2x128xf32>
    %104 = vector.shape_cast %103 : vector<1x2x128xf32> to vector<2x128xf32>
    %cst_43 = arith.constant dense<0.000000e+00> : vector<2x128xf32>
    %105 = tpu.matmul %92, %2, %cst_43 {dimension_numbers = #tpu.dot_dimension_numbers<[1], [0], [0], [1], [0, 0, 1, 1], [], []>} : vector<2x32xf32>, vector<32x128xf32>, vector<2x128xf32> -> vector<2x128xf32>
    %106 = arith.addf %104, %105 : vector<2x128xf32>
    %107 = vector.extract_strided_slice %106 {offsets = [0, 0], sizes = [2, 96], strides = [1, 1]} : vector<2x128xf32> to vector<2x96xf32>
    %cst_44 = arith.constant 5.000000e-01 : f32
    %108 = vector.broadcast %cst_44 : f32 to vector<2x96xf32>
    %109 = arith.mulf %108, %107 : vector<2x96xf32>
    %110 = math.tanh %109 : vector<2x96xf32>
    %cst_45 = arith.constant 5.000000e-01 : f32
    %111 = vector.broadcast %cst_45 : f32 to vector<2x96xf32>
    %112 = arith.mulf %111, %110 : vector<2x96xf32>
    %cst_46 = arith.constant 5.000000e-01 : f32
    %113 = vector.broadcast %cst_46 : f32 to vector<2x96xf32>
    %114 = arith.addf %112, %113 : vector<2x96xf32>
    %115 = vector.extract_strided_slice %106 {offsets = [0, 96], sizes = [2, 32], strides = [1, 1]} : vector<2x128xf32> to vector<2x32xf32>
    %116 = math.tanh %115 : vector<2x32xf32>
    %117 = vector.extract_strided_slice %114 {offsets = [0, 32], sizes = [2, 32], strides = [1, 1]} : vector<2x96xf32> to vector<2x32xf32>
    %118 = arith.mulf %117, %89 : vector<2x32xf32>
    %119 = vector.extract_strided_slice %114 {offsets = [0, 0], sizes = [2, 32], strides = [1, 1]} : vector<2x96xf32> to vector<2x32xf32>
    %120 = arith.mulf %119, %116 : vector<2x32xf32>
    %121 = arith.addf %118, %120 : vector<2x32xf32>
    %122 = vector.extract_strided_slice %114 {offsets = [0, 64], sizes = [2, 32], strides = [1, 1]} : vector<2x96xf32> to vector<2x32xf32>
    %123 = math.tanh %121 : vector<2x32xf32>
    %124 = arith.mulf %122, %123 : vector<2x32xf32>
    %125 = vector.extract_strided_slice %124 {offsets = [0, 0], sizes = [2, 16], strides = [1, 1]} : vector<2x32xf32> to vector<2x16xf32>
    %126 = vector.shape_cast %125 : vector<2x16xf32> to vector<1x2x16xf32>
    %127 = arith.index_cast %c2_i32 : i32 to index
    %c0_47 = arith.constant 0 : index
    %c0_48 = arith.constant 0 : index
    %128 = vector.load %arg13[%127, %c0_47, %c0_48] : memref<8x2x32xf32, #tpu.memory_space<vmem>>, vector<1x2x16xf32>
    tpu.vector_store %arg13[%127, %c0_47, %c0_48], %126 {strides = array<i32>} : memref<8x2x32xf32, #tpu.memory_space<vmem>>, vector<1x2x16xf32>,
    %129 = vector.extract_strided_slice %124 {offsets = [0, 16], sizes = [2, 16], strides = [1, 1]} : vector<2x32xf32> to vector<2x16xf32>
    %130 = vector.shape_cast %129 : vector<2x16xf32> to vector<1x2x16xf32>
    %c7_i32_49 = arith.constant 7 : i32
    %131 = arith.subi %c7_i32_49, %c2_i32 : i32
    %132 = arith.index_cast %131 : i32 to index
    %c0_50 = arith.constant 0 : index
    %c16_51 = arith.constant 16 : index
    %133 = vector.load %arg13[%132, %c0_50, %c16_51] : memref<8x2x32xf32, #tpu.memory_space<vmem>>, vector<1x2x16xf32>
    tpu.vector_store %arg13[%132, %c0_50, %c16_51], %130 {strides = array<i32>} : memref<8x2x32xf32, #tpu.memory_space<vmem>>, vector<1x2x16xf32>,
    %c3_i32 = arith.constant 3 : i32
    %134 = arith.index_cast %c3_i32 : i32 to index
    %c0_52 = arith.constant 0 : index
    %c0_53 = arith.constant 0 : index
    %135 = vector.load %arg12[%134, %c0_52, %c0_53] : memref<8x2x128xf32, #tpu.memory_space<vmem>>, vector<1x2x128xf32>
    %136 = vector.shape_cast %135 : vector<1x2x128xf32> to vector<2x128xf32>
    %cst_54 = arith.constant dense<0.000000e+00> : vector<2x128xf32>
    %137 = tpu.matmul %124, %2, %cst_54 {dimension_numbers = #tpu.dot_dimension_numbers<[1], [0], [0], [1], [0, 0, 1, 1], [], []>} : vector<2x32xf32>, vector<32x128xf32>, vector<2x128xf32> -> vector<2x128xf32>
    %138 = arith.addf %136, %137 : vector<2x128xf32>
    %139 = vector.extract_strided_slice %138 {offsets = [0, 0], sizes = [2, 96], strides = [1, 1]} : vector<2x128xf32> to vector<2x96xf32>
    %cst_55 = arith.constant 5.000000e-01 : f32
    %140 = vector.broadcast %cst_55 : f32 to vector<2x96xf32>
    %141 = arith.mulf %140, %139 : vector<2x96xf32>
    %142 = math.tanh %141 : vector<2x96xf32>
    %cst_56 = arith.constant 5.000000e-01 : f32
    %143 = vector.broadcast %cst_56 : f32 to vector<2x96xf32>
    %144 = arith.mulf %143, %142 : vector<2x96xf32>
    %cst_57 = arith.constant 5.000000e-01 : f32
    %145 = vector.broadcast %cst_57 : f32 to vector<2x96xf32>
    %146 = arith.addf %144, %145 : vector<2x96xf32>
    %147 = vector.extract_strided_slice %138 {offsets = [0, 96], sizes = [2, 32], strides = [1, 1]} : vector<2x128xf32> to vector<2x32xf32>
    %148 = math.tanh %147 : vector<2x32xf32>
    %149 = vector.extract_strided_slice %146 {offsets = [0, 32], sizes = [2, 32], strides = [1, 1]} : vector<2x96xf32> to vector<2x32xf32>
    %150 = arith.mulf %149, %121 : vector<2x32xf32>
    %151 = vector.extract_strided_slice %146 {offsets = [0, 0], sizes = [2, 32], strides = [1, 1]} : vector<2x96xf32> to vector<2x32xf32>
    %152 = arith.mulf %151, %148 : vector<2x32xf32>
    %153 = arith.addf %150, %152 : vector<2x32xf32>
    %154 = vector.extract_strided_slice %146 {offsets = [0, 64], sizes = [2, 32], strides = [1, 1]} : vector<2x96xf32> to vector<2x32xf32>
    %155 = math.tanh %153 : vector<2x32xf32>
    %156 = arith.mulf %154, %155 : vector<2x32xf32>
    %157 = vector.extract_strided_slice %156 {offsets = [0, 0], sizes = [2, 16], strides = [1, 1]} : vector<2x32xf32> to vector<2x16xf32>
    %158 = vector.shape_cast %157 : vector<2x16xf32> to vector<1x2x16xf32>
    %159 = arith.index_cast %c3_i32 : i32 to index
    %c0_58 = arith.constant 0 : index
    %c0_59 = arith.constant 0 : index
    %160 = vector.load %arg13[%159, %c0_58, %c0_59] : memref<8x2x32xf32, #tpu.memory_space<vmem>>, vector<1x2x16xf32>
    tpu.vector_store %arg13[%159, %c0_58, %c0_59], %158 {strides = array<i32>} : memref<8x2x32xf32, #tpu.memory_space<vmem>>, vector<1x2x16xf32>,
    %161 = vector.extract_strided_slice %156 {offsets = [0, 16], sizes = [2, 16], strides = [1, 1]} : vector<2x32xf32> to vector<2x16xf32>
    %162 = vector.shape_cast %161 : vector<2x16xf32> to vector<1x2x16xf32>
    %c7_i32_60 = arith.constant 7 : i32
    %163 = arith.subi %c7_i32_60, %c3_i32 : i32
    %164 = arith.index_cast %163 : i32 to index
    %c0_61 = arith.constant 0 : index
    %c16_62 = arith.constant 16 : index
    %165 = vector.load %arg13[%164, %c0_61, %c16_62] : memref<8x2x32xf32, #tpu.memory_space<vmem>>, vector<1x2x16xf32>
    tpu.vector_store %arg13[%164, %c0_61, %c16_62], %162 {strides = array<i32>} : memref<8x2x32xf32, #tpu.memory_space<vmem>>, vector<1x2x16xf32>,
    %c4_i32 = arith.constant 4 : i32
    %166 = arith.index_cast %c4_i32 : i32 to index
    %c0_63 = arith.constant 0 : index
    %c0_64 = arith.constant 0 : index
    %167 = vector.load %arg12[%166, %c0_63, %c0_64] : memref<8x2x128xf32, #tpu.memory_space<vmem>>, vector<1x2x128xf32>
    %168 = vector.shape_cast %167 : vector<1x2x128xf32> to vector<2x128xf32>
    %cst_65 = arith.constant dense<0.000000e+00> : vector<2x128xf32>
    %169 = tpu.matmul %156, %2, %cst_65 {dimension_numbers = #tpu.dot_dimension_numbers<[1], [0], [0], [1], [0, 0, 1, 1], [], []>} : vector<2x32xf32>, vector<32x128xf32>, vector<2x128xf32> -> vector<2x128xf32>
    %170 = arith.addf %168, %169 : vector<2x128xf32>
    %171 = vector.extract_strided_slice %170 {offsets = [0, 0], sizes = [2, 96], strides = [1, 1]} : vector<2x128xf32> to vector<2x96xf32>
    %cst_66 = arith.constant 5.000000e-01 : f32
    %172 = vector.broadcast %cst_66 : f32 to vector<2x96xf32>
    %173 = arith.mulf %172, %171 : vector<2x96xf32>
    %174 = math.tanh %173 : vector<2x96xf32>
    %cst_67 = arith.constant 5.000000e-01 : f32
    %175 = vector.broadcast %cst_67 : f32 to vector<2x96xf32>
    %176 = arith.mulf %175, %174 : vector<2x96xf32>
    %cst_68 = arith.constant 5.000000e-01 : f32
    %177 = vector.broadcast %cst_68 : f32 to vector<2x96xf32>
    %178 = arith.addf %176, %177 : vector<2x96xf32>
    %179 = vector.extract_strided_slice %170 {offsets = [0, 96], sizes = [2, 32], strides = [1, 1]} : vector<2x128xf32> to vector<2x32xf32>
    %180 = math.tanh %179 : vector<2x32xf32>
    %181 = vector.extract_strided_slice %178 {offsets = [0, 32], sizes = [2, 32], strides = [1, 1]} : vector<2x96xf32> to vector<2x32xf32>
    %182 = arith.mulf %181, %153 : vector<2x32xf32>
    %183 = vector.extract_strided_slice %178 {offsets = [0, 0], sizes = [2, 32], strides = [1, 1]} : vector<2x96xf32> to vector<2x32xf32>
    %184 = arith.mulf %183, %180 : vector<2x32xf32>
    %185 = arith.addf %182, %184 : vector<2x32xf32>
    %186 = vector.extract_strided_slice %178 {offsets = [0, 64], sizes = [2, 32], strides = [1, 1]} : vector<2x96xf32> to vector<2x32xf32>
    %187 = math.tanh %185 : vector<2x32xf32>
    %188 = arith.mulf %186, %187 : vector<2x32xf32>
    %189 = vector.extract_strided_slice %188 {offsets = [0, 0], sizes = [2, 16], strides = [1, 1]} : vector<2x32xf32> to vector<2x16xf32>
    %190 = vector.shape_cast %189 : vector<2x16xf32> to vector<1x2x16xf32>
    %191 = arith.index_cast %c4_i32 : i32 to index
    %c0_69 = arith.constant 0 : index
    %c0_70 = arith.constant 0 : index
    %192 = vector.load %arg13[%191, %c0_69, %c0_70] : memref<8x2x32xf32, #tpu.memory_space<vmem>>, vector<1x2x16xf32>
    tpu.vector_store %arg13[%191, %c0_69, %c0_70], %190 {strides = array<i32>} : memref<8x2x32xf32, #tpu.memory_space<vmem>>, vector<1x2x16xf32>,
    %193 = vector.extract_strided_slice %188 {offsets = [0, 16], sizes = [2, 16], strides = [1, 1]} : vector<2x32xf32> to vector<2x16xf32>
    %194 = vector.shape_cast %193 : vector<2x16xf32> to vector<1x2x16xf32>
    %c7_i32_71 = arith.constant 7 : i32
    %195 = arith.subi %c7_i32_71, %c4_i32 : i32
    %196 = arith.index_cast %195 : i32 to index
    %c0_72 = arith.constant 0 : index
    %c16_73 = arith.constant 16 : index
    %197 = vector.load %arg13[%196, %c0_72, %c16_73] : memref<8x2x32xf32, #tpu.memory_space<vmem>>, vector<1x2x16xf32>
    tpu.vector_store %arg13[%196, %c0_72, %c16_73], %194 {strides = array<i32>} : memref<8x2x32xf32, #tpu.memory_space<vmem>>, vector<1x2x16xf32>,
    %c5_i32 = arith.constant 5 : i32
    %198 = arith.index_cast %c5_i32 : i32 to index
    %c0_74 = arith.constant 0 : index
    %c0_75 = arith.constant 0 : index
    %199 = vector.load %arg12[%198, %c0_74, %c0_75] : memref<8x2x128xf32, #tpu.memory_space<vmem>>, vector<1x2x128xf32>
    %200 = vector.shape_cast %199 : vector<1x2x128xf32> to vector<2x128xf32>
    %cst_76 = arith.constant dense<0.000000e+00> : vector<2x128xf32>
    %201 = tpu.matmul %188, %2, %cst_76 {dimension_numbers = #tpu.dot_dimension_numbers<[1], [0], [0], [1], [0, 0, 1, 1], [], []>} : vector<2x32xf32>, vector<32x128xf32>, vector<2x128xf32> -> vector<2x128xf32>
    %202 = arith.addf %200, %201 : vector<2x128xf32>
    %203 = vector.extract_strided_slice %202 {offsets = [0, 0], sizes = [2, 96], strides = [1, 1]} : vector<2x128xf32> to vector<2x96xf32>
    %cst_77 = arith.constant 5.000000e-01 : f32
    %204 = vector.broadcast %cst_77 : f32 to vector<2x96xf32>
    %205 = arith.mulf %204, %203 : vector<2x96xf32>
    %206 = math.tanh %205 : vector<2x96xf32>
    %cst_78 = arith.constant 5.000000e-01 : f32
    %207 = vector.broadcast %cst_78 : f32 to vector<2x96xf32>
    %208 = arith.mulf %207, %206 : vector<2x96xf32>
    %cst_79 = arith.constant 5.000000e-01 : f32
    %209 = vector.broadcast %cst_79 : f32 to vector<2x96xf32>
    %210 = arith.addf %208, %209 : vector<2x96xf32>
    %211 = vector.extract_strided_slice %202 {offsets = [0, 96], sizes = [2, 32], strides = [1, 1]} : vector<2x128xf32> to vector<2x32xf32>
    %212 = math.tanh %211 : vector<2x32xf32>
    %213 = vector.extract_strided_slice %210 {offsets = [0, 32], sizes = [2, 32], strides = [1, 1]} : vector<2x96xf32> to vector<2x32xf32>
    %214 = arith.mulf %213, %185 : vector<2x32xf32>
    %215 = vector.extract_strided_slice %210 {offsets = [0, 0], sizes = [2, 32], strides = [1, 1]} : vector<2x96xf32> to vector<2x32xf32>
    %216 = arith.mulf %215, %212 : vector<2x32xf32>
    %217 = arith.addf %214, %216 : vector<2x32xf32>
    %218 = vector.extract_strided_slice %210 {offsets = [0, 64], sizes = [2, 32], strides = [1, 1]} : vector<2x96xf32> to vector<2x32xf32>
    %219 = math.tanh %217 : vector<2x32xf32>
    %220 = arith.mulf %218, %219 : vector<2x32xf32>
    %221 = vector.extract_strided_slice %220 {offsets = [0, 0], sizes = [2, 16], strides = [1, 1]} : vector<2x32xf32> to vector<2x16xf32>
    %222 = vector.shape_cast %221 : vector<2x16xf32> to vector<1x2x16xf32>
    %223 = arith.index_cast %c5_i32 : i32 to index
    %c0_80 = arith.constant 0 : index
    %c0_81 = arith.constant 0 : index
    %224 = vector.load %arg13[%223, %c0_80, %c0_81] : memref<8x2x32xf32, #tpu.memory_space<vmem>>, vector<1x2x16xf32>
    tpu.vector_store %arg13[%223, %c0_80, %c0_81], %222 {strides = array<i32>} : memref<8x2x32xf32, #tpu.memory_space<vmem>>, vector<1x2x16xf32>,
    %225 = vector.extract_strided_slice %220 {offsets = [0, 16], sizes = [2, 16], strides = [1, 1]} : vector<2x32xf32> to vector<2x16xf32>
    %226 = vector.shape_cast %225 : vector<2x16xf32> to vector<1x2x16xf32>
    %c7_i32_82 = arith.constant 7 : i32
    %227 = arith.subi %c7_i32_82, %c5_i32 : i32
    %228 = arith.index_cast %227 : i32 to index
    %c0_83 = arith.constant 0 : index
    %c16_84 = arith.constant 16 : index
    %229 = vector.load %arg13[%228, %c0_83, %c16_84] : memref<8x2x32xf32, #tpu.memory_space<vmem>>, vector<1x2x16xf32>
    tpu.vector_store %arg13[%228, %c0_83, %c16_84], %226 {strides = array<i32>} : memref<8x2x32xf32, #tpu.memory_space<vmem>>, vector<1x2x16xf32>,
    %c6_i32 = arith.constant 6 : i32
    %230 = arith.index_cast %c6_i32 : i32 to index
    %c0_85 = arith.constant 0 : index
    %c0_86 = arith.constant 0 : index
    %231 = vector.load %arg12[%230, %c0_85, %c0_86] : memref<8x2x128xf32, #tpu.memory_space<vmem>>, vector<1x2x128xf32>
    %232 = vector.shape_cast %231 : vector<1x2x128xf32> to vector<2x128xf32>
    %cst_87 = arith.constant dense<0.000000e+00> : vector<2x128xf32>
    %233 = tpu.matmul %220, %2, %cst_87 {dimension_numbers = #tpu.dot_dimension_numbers<[1], [0], [0], [1], [0, 0, 1, 1], [], []>} : vector<2x32xf32>, vector<32x128xf32>, vector<2x128xf32> -> vector<2x128xf32>
    %234 = arith.addf %232, %233 : vector<2x128xf32>
    %235 = vector.extract_strided_slice %234 {offsets = [0, 0], sizes = [2, 96], strides = [1, 1]} : vector<2x128xf32> to vector<2x96xf32>
    %cst_88 = arith.constant 5.000000e-01 : f32
    %236 = vector.broadcast %cst_88 : f32 to vector<2x96xf32>
    %237 = arith.mulf %236, %235 : vector<2x96xf32>
    %238 = math.tanh %237 : vector<2x96xf32>
    %cst_89 = arith.constant 5.000000e-01 : f32
    %239 = vector.broadcast %cst_89 : f32 to vector<2x96xf32>
    %240 = arith.mulf %239, %238 : vector<2x96xf32>
    %cst_90 = arith.constant 5.000000e-01 : f32
    %241 = vector.broadcast %cst_90 : f32 to vector<2x96xf32>
    %242 = arith.addf %240, %241 : vector<2x96xf32>
    %243 = vector.extract_strided_slice %234 {offsets = [0, 96], sizes = [2, 32], strides = [1, 1]} : vector<2x128xf32> to vector<2x32xf32>
    %244 = math.tanh %243 : vector<2x32xf32>
    %245 = vector.extract_strided_slice %242 {offsets = [0, 32], sizes = [2, 32], strides = [1, 1]} : vector<2x96xf32> to vector<2x32xf32>
    %246 = arith.mulf %245, %217 : vector<2x32xf32>
    %247 = vector.extract_strided_slice %242 {offsets = [0, 0], sizes = [2, 32], strides = [1, 1]} : vector<2x96xf32> to vector<2x32xf32>
    %248 = arith.mulf %247, %244 : vector<2x32xf32>
    %249 = arith.addf %246, %248 : vector<2x32xf32>
    %250 = vector.extract_strided_slice %242 {offsets = [0, 64], sizes = [2, 32], strides = [1, 1]} : vector<2x96xf32> to vector<2x32xf32>
    %251 = math.tanh %249 : vector<2x32xf32>
    %252 = arith.mulf %250, %251 : vector<2x32xf32>
    %253 = vector.extract_strided_slice %252 {offsets = [0, 0], sizes = [2, 16], strides = [1, 1]} : vector<2x32xf32> to vector<2x16xf32>
    %254 = vector.shape_cast %253 : vector<2x16xf32> to vector<1x2x16xf32>
    %255 = arith.index_cast %c6_i32 : i32 to index
    %c0_91 = arith.constant 0 : index
    %c0_92 = arith.constant 0 : index
    %256 = vector.load %arg13[%255, %c0_91, %c0_92] : memref<8x2x32xf32, #tpu.memory_space<vmem>>, vector<1x2x16xf32>
    tpu.vector_store %arg13[%255, %c0_91, %c0_92], %254 {strides = array<i32>} : memref<8x2x32xf32, #tpu.memory_space<vmem>>, vector<1x2x16xf32>,
    %257 = vector.extract_strided_slice %252 {offsets = [0, 16], sizes = [2, 16], strides = [1, 1]} : vector<2x32xf32> to vector<2x16xf32>
    %258 = vector.shape_cast %257 : vector<2x16xf32> to vector<1x2x16xf32>
    %c7_i32_93 = arith.constant 7 : i32
    %259 = arith.subi %c7_i32_93, %c6_i32 : i32
    %260 = arith.index_cast %259 : i32 to index
    %c0_94 = arith.constant 0 : index
    %c16_95 = arith.constant 16 : index
    %261 = vector.load %arg13[%260, %c0_94, %c16_95] : memref<8x2x32xf32, #tpu.memory_space<vmem>>, vector<1x2x16xf32>
    tpu.vector_store %arg13[%260, %c0_94, %c16_95], %258 {strides = array<i32>} : memref<8x2x32xf32, #tpu.memory_space<vmem>>, vector<1x2x16xf32>,
    %c7_i32_96 = arith.constant 7 : i32
    %262 = arith.index_cast %c7_i32_96 : i32 to index
    %c0_97 = arith.constant 0 : index
    %c0_98 = arith.constant 0 : index
    %263 = vector.load %arg12[%262, %c0_97, %c0_98] : memref<8x2x128xf32, #tpu.memory_space<vmem>>, vector<1x2x128xf32>
    %264 = vector.shape_cast %263 : vector<1x2x128xf32> to vector<2x128xf32>
    %cst_99 = arith.constant dense<0.000000e+00> : vector<2x128xf32>
    %265 = tpu.matmul %252, %2, %cst_99 {dimension_numbers = #tpu.dot_dimension_numbers<[1], [0], [0], [1], [0, 0, 1, 1], [], []>} : vector<2x32xf32>, vector<32x128xf32>, vector<2x128xf32> -> vector<2x128xf32>
    %266 = arith.addf %264, %265 : vector<2x128xf32>
    %267 = vector.extract_strided_slice %266 {offsets = [0, 0], sizes = [2, 96], strides = [1, 1]} : vector<2x128xf32> to vector<2x96xf32>
    %cst_100 = arith.constant 5.000000e-01 : f32
    %268 = vector.broadcast %cst_100 : f32 to vector<2x96xf32>
    %269 = arith.mulf %268, %267 : vector<2x96xf32>
    %270 = math.tanh %269 : vector<2x96xf32>
    %cst_101 = arith.constant 5.000000e-01 : f32
    %271 = vector.broadcast %cst_101 : f32 to vector<2x96xf32>
    %272 = arith.mulf %271, %270 : vector<2x96xf32>
    %cst_102 = arith.constant 5.000000e-01 : f32
    %273 = vector.broadcast %cst_102 : f32 to vector<2x96xf32>
    %274 = arith.addf %272, %273 : vector<2x96xf32>
    %275 = vector.extract_strided_slice %266 {offsets = [0, 96], sizes = [2, 32], strides = [1, 1]} : vector<2x128xf32> to vector<2x32xf32>
    %276 = math.tanh %275 : vector<2x32xf32>
    %277 = vector.extract_strided_slice %274 {offsets = [0, 32], sizes = [2, 32], strides = [1, 1]} : vector<2x96xf32> to vector<2x32xf32>
    %278 = arith.mulf %277, %249 : vector<2x32xf32>
    %279 = vector.extract_strided_slice %274 {offsets = [0, 0], sizes = [2, 32], strides = [1, 1]} : vector<2x96xf32> to vector<2x32xf32>
    %280 = arith.mulf %279, %276 : vector<2x32xf32>
    %281 = arith.addf %278, %280 : vector<2x32xf32>
    %282 = vector.extract_strided_slice %274 {offsets = [0, 64], sizes = [2, 32], strides = [1, 1]} : vector<2x96xf32> to vector<2x32xf32>
    %283 = math.tanh %281 : vector<2x32xf32>
    %284 = arith.mulf %282, %283 : vector<2x32xf32>
    %285 = vector.extract_strided_slice %284 {offsets = [0, 0], sizes = [2, 16], strides = [1, 1]} : vector<2x32xf32> to vector<2x16xf32>
    %286 = vector.shape_cast %285 : vector<2x16xf32> to vector<1x2x16xf32>
    %287 = arith.index_cast %c7_i32_96 : i32 to index
    %c0_103 = arith.constant 0 : index
    %c0_104 = arith.constant 0 : index
    %288 = vector.load %arg13[%287, %c0_103, %c0_104] : memref<8x2x32xf32, #tpu.memory_space<vmem>>, vector<1x2x16xf32>
    tpu.vector_store %arg13[%287, %c0_103, %c0_104], %286 {strides = array<i32>} : memref<8x2x32xf32, #tpu.memory_space<vmem>>, vector<1x2x16xf32>,
    %289 = vector.extract_strided_slice %284 {offsets = [0, 16], sizes = [2, 16], strides = [1, 1]} : vector<2x32xf32> to vector<2x16xf32>
    %290 = vector.shape_cast %289 : vector<2x16xf32> to vector<1x2x16xf32>
    %c7_i32_105 = arith.constant 7 : i32
    %291 = arith.subi %c7_i32_105, %c7_i32_96 : i32
    %292 = arith.index_cast %291 : i32 to index
    %c0_106 = arith.constant 0 : index
    %c16_107 = arith.constant 16 : index
    %293 = vector.load %arg13[%292, %c0_106, %c16_107] : memref<8x2x32xf32, #tpu.memory_space<vmem>>, vector<1x2x16xf32>
    tpu.vector_store %arg13[%292, %c0_106, %c16_107], %290 {strides = array<i32>} : memref<8x2x32xf32, #tpu.memory_space<vmem>>, vector<1x2x16xf32>,
    %c8_i32 = arith.constant 8 : i32
    %c0_108 = arith.constant 0 : index
    %c0_109 = arith.constant 0 : index
    %c0_110 = arith.constant 0 : index
    %294 = vector.load %arg13[%c0_108, %c0_109, %c0_110] : memref<8x2x32xf32, #tpu.memory_space<vmem>>, vector<8x2x32xf32>
    %c0_111 = arith.constant 0 : index
    %c0_112 = arith.constant 0 : index
    %295 = vector.load %arg6[%c0_111, %c0_112] : memref<64x128xf32, #tpu.memory_space<vmem>>, vector<64x128xf32>
    %c0_113 = arith.constant 0 : index
    %c0_114 = arith.constant 0 : index
    %296 = vector.load %arg7[%c0_113, %c0_114] : memref<32x128xf32, #tpu.memory_space<vmem>>, vector<32x128xf32>
    %c0_115 = arith.constant 0 : index
    %c0_116 = arith.constant 0 : index
    %297 = vector.load %arg8[%c0_115, %c0_116] : memref<1x128xf32, #tpu.memory_space<vmem>>, vector<1x128xf32>
    %298 = vector.extract_strided_slice %294 {offsets = [7, 0, 0], sizes = [1, 2, 32], strides = [1, 1, 1]} : vector<8x2x32xf32> to vector<1x2x32xf32>
    %299 = vector.extract_strided_slice %294 {offsets = [6, 0, 0], sizes = [1, 2, 32], strides = [1, 1, 1]} : vector<8x2x32xf32> to vector<1x2x32xf32>
    %300 = vector.extract_strided_slice %294 {offsets = [5, 0, 0], sizes = [1, 2, 32], strides = [1, 1, 1]} : vector<8x2x32xf32> to vector<1x2x32xf32>
    %301 = vector.extract_strided_slice %294 {offsets = [4, 0, 0], sizes = [1, 2, 32], strides = [1, 1, 1]} : vector<8x2x32xf32> to vector<1x2x32xf32>
    %302 = vector.extract_strided_slice %294 {offsets = [3, 0, 0], sizes = [1, 2, 32], strides = [1, 1, 1]} : vector<8x2x32xf32> to vector<1x2x32xf32>
    %303 = vector.extract_strided_slice %294 {offsets = [2, 0, 0], sizes = [1, 2, 32], strides = [1, 1, 1]} : vector<8x2x32xf32> to vector<1x2x32xf32>
    %304 = vector.extract_strided_slice %294 {offsets = [1, 0, 0], sizes = [1, 2, 32], strides = [1, 1, 1]} : vector<8x2x32xf32> to vector<1x2x32xf32>
    %305 = vector.extract_strided_slice %294 {offsets = [0, 0, 0], sizes = [1, 2, 32], strides = [1, 1, 1]} : vector<8x2x32xf32> to vector<1x2x32xf32>
    %306 = tpu.concatenate %298, %299, %300, %301, %302, %303, %304, %305 in 0 : vector<1x2x32xf32>, vector<1x2x32xf32>, vector<1x2x32xf32>, vector<1x2x32xf32>, vector<1x2x32xf32>, vector<1x2x32xf32>, vector<1x2x32xf32>, vector<1x2x32xf32> -> vector<8x2x32xf32>
    %307 = tpu.concatenate %294, %306 in 2 : vector<8x2x32xf32>, vector<8x2x32xf32> -> vector<8x2x64xf32>
    %308 = vector.shape_cast %307 : vector<8x2x64xf32> to vector<16x64xf32>
    %cst_117 = arith.constant dense<0.000000e+00> : vector<16x128xf32>
    %309 = tpu.matmul %308, %295, %cst_117 {dimension_numbers = #tpu.dot_dimension_numbers<[1], [0], [0], [1], [0, 0, 1, 1], [], []>} : vector<16x64xf32>, vector<64x128xf32>, vector<16x128xf32> -> vector<16x128xf32>
    %310 = vector.shape_cast %309 : vector<16x128xf32> to vector<8x2x128xf32>
    %311 = vector.shape_cast %297 : vector<1x128xf32> to vector<1x1x128xf32>
    %312 = vector.broadcast %311 : vector<1x1x128xf32> to vector<8x2x128xf32>
    %313 = arith.addf %310, %312 : vector<8x2x128xf32>
    %c0_118 = arith.constant 0 : index
    %c0_119 = arith.constant 0 : index
    %c0_120 = arith.constant 0 : index
    %314 = vector.load %arg12[%c0_118, %c0_119, %c0_120] : memref<8x2x128xf32, #tpu.memory_space<vmem>>, vector<8x2x128xf32>
    tpu.vector_store %arg12[%c0_118, %c0_119, %c0_120], %313 {strides = array<i32>} : memref<8x2x128xf32, #tpu.memory_space<vmem>>, vector<8x2x128xf32>,
    %c2 = arith.constant 2 : index
    %c0_121 = arith.constant 0 : index
    %c0_122 = arith.constant 0 : index
    %315 = vector.load %arg1[%c2, %c0_121, %c0_122] : memref<4x2x16xf32, #tpu.memory_space<vmem>>, vector<1x2x16xf32>
    %316 = vector.shape_cast %315 : vector<1x2x16xf32> to vector<2x16xf32>
    %c3 = arith.constant 3 : index
    %c0_123 = arith.constant 0 : index
    %c0_124 = arith.constant 0 : index
    %317 = vector.load %arg1[%c3, %c0_123, %c0_124] : memref<4x2x16xf32, #tpu.memory_space<vmem>>, vector<1x2x16xf32>
    %318 = vector.shape_cast %317 : vector<1x2x16xf32> to vector<2x16xf32>
    %319 = tpu.concatenate %316, %318 in 1 : vector<2x16xf32>, vector<2x16xf32> -> vector<2x32xf32>
    %c2_125 = arith.constant 2 : index
    %c0_126 = arith.constant 0 : index
    %c0_127 = arith.constant 0 : index
    %320 = vector.load %arg2[%c2_125, %c0_126, %c0_127] : memref<4x2x16xf32, #tpu.memory_space<vmem>>, vector<1x2x16xf32>
    %321 = vector.shape_cast %320 : vector<1x2x16xf32> to vector<2x16xf32>
    %c3_128 = arith.constant 3 : index
    %c0_129 = arith.constant 0 : index
    %c0_130 = arith.constant 0 : index
    %322 = vector.load %arg2[%c3_128, %c0_129, %c0_130] : memref<4x2x16xf32, #tpu.memory_space<vmem>>, vector<1x2x16xf32>
    %323 = vector.shape_cast %322 : vector<1x2x16xf32> to vector<2x16xf32>
    %324 = tpu.concatenate %321, %323 in 1 : vector<2x16xf32>, vector<2x16xf32> -> vector<2x32xf32>
    %c0_i32_131 = arith.constant 0 : i32
    %325 = arith.index_cast %c0_i32_131 : i32 to index
    %c0_132 = arith.constant 0 : index
    %c0_133 = arith.constant 0 : index
    %326 = vector.load %arg12[%325, %c0_132, %c0_133] : memref<8x2x128xf32, #tpu.memory_space<vmem>>, vector<1x2x128xf32>
    %327 = vector.shape_cast %326 : vector<1x2x128xf32> to vector<2x128xf32>
    %cst_134 = arith.constant dense<0.000000e+00> : vector<2x128xf32>
    %328 = tpu.matmul %319, %296, %cst_134 {dimension_numbers = #tpu.dot_dimension_numbers<[1], [0], [0], [1], [0, 0, 1, 1], [], []>} : vector<2x32xf32>, vector<32x128xf32>, vector<2x128xf32> -> vector<2x128xf32>
    %329 = arith.addf %327, %328 : vector<2x128xf32>
    %330 = vector.extract_strided_slice %329 {offsets = [0, 0], sizes = [2, 96], strides = [1, 1]} : vector<2x128xf32> to vector<2x96xf32>
    %cst_135 = arith.constant 5.000000e-01 : f32
    %331 = vector.broadcast %cst_135 : f32 to vector<2x96xf32>
    %332 = arith.mulf %331, %330 : vector<2x96xf32>
    %333 = math.tanh %332 : vector<2x96xf32>
    %cst_136 = arith.constant 5.000000e-01 : f32
    %334 = vector.broadcast %cst_136 : f32 to vector<2x96xf32>
    %335 = arith.mulf %334, %333 : vector<2x96xf32>
    %cst_137 = arith.constant 5.000000e-01 : f32
    %336 = vector.broadcast %cst_137 : f32 to vector<2x96xf32>
    %337 = arith.addf %335, %336 : vector<2x96xf32>
    %338 = vector.extract_strided_slice %329 {offsets = [0, 96], sizes = [2, 32], strides = [1, 1]} : vector<2x128xf32> to vector<2x32xf32>
    %339 = math.tanh %338 : vector<2x32xf32>
    %340 = vector.extract_strided_slice %337 {offsets = [0, 32], sizes = [2, 32], strides = [1, 1]} : vector<2x96xf32> to vector<2x32xf32>
    %341 = arith.mulf %340, %324 : vector<2x32xf32>
    %342 = vector.extract_strided_slice %337 {offsets = [0, 0], sizes = [2, 32], strides = [1, 1]} : vector<2x96xf32> to vector<2x32xf32>
    %343 = arith.mulf %342, %339 : vector<2x32xf32>
    %344 = arith.addf %341, %343 : vector<2x32xf32>
    %345 = vector.extract_strided_slice %337 {offsets = [0, 64], sizes = [2, 32], strides = [1, 1]} : vector<2x96xf32> to vector<2x32xf32>
    %346 = math.tanh %344 : vector<2x32xf32>
    %347 = arith.mulf %345, %346 : vector<2x32xf32>
    %348 = vector.extract_strided_slice %347 {offsets = [0, 0], sizes = [2, 16], strides = [1, 1]} : vector<2x32xf32> to vector<2x16xf32>
    %349 = vector.shape_cast %348 : vector<2x16xf32> to vector<1x2x16xf32>
    %350 = arith.index_cast %c0_i32_131 : i32 to index
    %c0_138 = arith.constant 0 : index
    %c0_139 = arith.constant 0 : index
    %351 = vector.load %arg13[%350, %c0_138, %c0_139] : memref<8x2x32xf32, #tpu.memory_space<vmem>>, vector<1x2x16xf32>
    tpu.vector_store %arg13[%350, %c0_138, %c0_139], %349 {strides = array<i32>} : memref<8x2x32xf32, #tpu.memory_space<vmem>>, vector<1x2x16xf32>,
    %352 = vector.extract_strided_slice %347 {offsets = [0, 16], sizes = [2, 16], strides = [1, 1]} : vector<2x32xf32> to vector<2x16xf32>
    %353 = vector.shape_cast %352 : vector<2x16xf32> to vector<1x2x16xf32>
    %c7_i32_140 = arith.constant 7 : i32
    %354 = arith.subi %c7_i32_140, %c0_i32_131 : i32
    %355 = arith.index_cast %354 : i32 to index
    %c0_141 = arith.constant 0 : index
    %c16_142 = arith.constant 16 : index
    %356 = vector.load %arg13[%355, %c0_141, %c16_142] : memref<8x2x32xf32, #tpu.memory_space<vmem>>, vector<1x2x16xf32>
    tpu.vector_store %arg13[%355, %c0_141, %c16_142], %353 {strides = array<i32>} : memref<8x2x32xf32, #tpu.memory_space<vmem>>, vector<1x2x16xf32>,
    %c1_i32_143 = arith.constant 1 : i32
    %357 = arith.index_cast %c1_i32_143 : i32 to index
    %c0_144 = arith.constant 0 : index
    %c0_145 = arith.constant 0 : index
    %358 = vector.load %arg12[%357, %c0_144, %c0_145] : memref<8x2x128xf32, #tpu.memory_space<vmem>>, vector<1x2x128xf32>
    %359 = vector.shape_cast %358 : vector<1x2x128xf32> to vector<2x128xf32>
    %cst_146 = arith.constant dense<0.000000e+00> : vector<2x128xf32>
    %360 = tpu.matmul %347, %296, %cst_146 {dimension_numbers = #tpu.dot_dimension_numbers<[1], [0], [0], [1], [0, 0, 1, 1], [], []>} : vector<2x32xf32>, vector<32x128xf32>, vector<2x128xf32> -> vector<2x128xf32>
    %361 = arith.addf %359, %360 : vector<2x128xf32>
    %362 = vector.extract_strided_slice %361 {offsets = [0, 0], sizes = [2, 96], strides = [1, 1]} : vector<2x128xf32> to vector<2x96xf32>
    %cst_147 = arith.constant 5.000000e-01 : f32
    %363 = vector.broadcast %cst_147 : f32 to vector<2x96xf32>
    %364 = arith.mulf %363, %362 : vector<2x96xf32>
    %365 = math.tanh %364 : vector<2x96xf32>
    %cst_148 = arith.constant 5.000000e-01 : f32
    %366 = vector.broadcast %cst_148 : f32 to vector<2x96xf32>
    %367 = arith.mulf %366, %365 : vector<2x96xf32>
    %cst_149 = arith.constant 5.000000e-01 : f32
    %368 = vector.broadcast %cst_149 : f32 to vector<2x96xf32>
    %369 = arith.addf %367, %368 : vector<2x96xf32>
    %370 = vector.extract_strided_slice %361 {offsets = [0, 96], sizes = [2, 32], strides = [1, 1]} : vector<2x128xf32> to vector<2x32xf32>
    %371 = math.tanh %370 : vector<2x32xf32>
    %372 = vector.extract_strided_slice %369 {offsets = [0, 32], sizes = [2, 32], strides = [1, 1]} : vector<2x96xf32> to vector<2x32xf32>
    %373 = arith.mulf %372, %344 : vector<2x32xf32>
    %374 = vector.extract_strided_slice %369 {offsets = [0, 0], sizes = [2, 32], strides = [1, 1]} : vector<2x96xf32> to vector<2x32xf32>
    %375 = arith.mulf %374, %371 : vector<2x32xf32>
    %376 = arith.addf %373, %375 : vector<2x32xf32>
    %377 = vector.extract_strided_slice %369 {offsets = [0, 64], sizes = [2, 32], strides = [1, 1]} : vector<2x96xf32> to vector<2x32xf32>
    %378 = math.tanh %376 : vector<2x32xf32>
    %379 = arith.mulf %377, %378 : vector<2x32xf32>
    %380 = vector.extract_strided_slice %379 {offsets = [0, 0], sizes = [2, 16], strides = [1, 1]} : vector<2x32xf32> to vector<2x16xf32>
    %381 = vector.shape_cast %380 : vector<2x16xf32> to vector<1x2x16xf32>
    %382 = arith.index_cast %c1_i32_143 : i32 to index
    %c0_150 = arith.constant 0 : index
    %c0_151 = arith.constant 0 : index
    %383 = vector.load %arg13[%382, %c0_150, %c0_151] : memref<8x2x32xf32, #tpu.memory_space<vmem>>, vector<1x2x16xf32>
    tpu.vector_store %arg13[%382, %c0_150, %c0_151], %381 {strides = array<i32>} : memref<8x2x32xf32, #tpu.memory_space<vmem>>, vector<1x2x16xf32>,
    %384 = vector.extract_strided_slice %379 {offsets = [0, 16], sizes = [2, 16], strides = [1, 1]} : vector<2x32xf32> to vector<2x16xf32>
    %385 = vector.shape_cast %384 : vector<2x16xf32> to vector<1x2x16xf32>
    %c7_i32_152 = arith.constant 7 : i32
    %386 = arith.subi %c7_i32_152, %c1_i32_143 : i32
    %387 = arith.index_cast %386 : i32 to index
    %c0_153 = arith.constant 0 : index
    %c16_154 = arith.constant 16 : index
    %388 = vector.load %arg13[%387, %c0_153, %c16_154] : memref<8x2x32xf32, #tpu.memory_space<vmem>>, vector<1x2x16xf32>
    tpu.vector_store %arg13[%387, %c0_153, %c16_154], %385 {strides = array<i32>} : memref<8x2x32xf32, #tpu.memory_space<vmem>>, vector<1x2x16xf32>,
    %c2_i32_155 = arith.constant 2 : i32
    %389 = arith.index_cast %c2_i32_155 : i32 to index
    %c0_156 = arith.constant 0 : index
    %c0_157 = arith.constant 0 : index
    %390 = vector.load %arg12[%389, %c0_156, %c0_157] : memref<8x2x128xf32, #tpu.memory_space<vmem>>, vector<1x2x128xf32>
    %391 = vector.shape_cast %390 : vector<1x2x128xf32> to vector<2x128xf32>
    %cst_158 = arith.constant dense<0.000000e+00> : vector<2x128xf32>
    %392 = tpu.matmul %379, %296, %cst_158 {dimension_numbers = #tpu.dot_dimension_numbers<[1], [0], [0], [1], [0, 0, 1, 1], [], []>} : vector<2x32xf32>, vector<32x128xf32>, vector<2x128xf32> -> vector<2x128xf32>
    %393 = arith.addf %391, %392 : vector<2x128xf32>
    %394 = vector.extract_strided_slice %393 {offsets = [0, 0], sizes = [2, 96], strides = [1, 1]} : vector<2x128xf32> to vector<2x96xf32>
    %cst_159 = arith.constant 5.000000e-01 : f32
    %395 = vector.broadcast %cst_159 : f32 to vector<2x96xf32>
    %396 = arith.mulf %395, %394 : vector<2x96xf32>
    %397 = math.tanh %396 : vector<2x96xf32>
    %cst_160 = arith.constant 5.000000e-01 : f32
    %398 = vector.broadcast %cst_160 : f32 to vector<2x96xf32>
    %399 = arith.mulf %398, %397 : vector<2x96xf32>
    %cst_161 = arith.constant 5.000000e-01 : f32
    %400 = vector.broadcast %cst_161 : f32 to vector<2x96xf32>
    %401 = arith.addf %399, %400 : vector<2x96xf32>
    %402 = vector.extract_strided_slice %393 {offsets = [0, 96], sizes = [2, 32], strides = [1, 1]} : vector<2x128xf32> to vector<2x32xf32>
    %403 = math.tanh %402 : vector<2x32xf32>
    %404 = vector.extract_strided_slice %401 {offsets = [0, 32], sizes = [2, 32], strides = [1, 1]} : vector<2x96xf32> to vector<2x32xf32>
    %405 = arith.mulf %404, %376 : vector<2x32xf32>
    %406 = vector.extract_strided_slice %401 {offsets = [0, 0], sizes = [2, 32], strides = [1, 1]} : vector<2x96xf32> to vector<2x32xf32>
    %407 = arith.mulf %406, %403 : vector<2x32xf32>
    %408 = arith.addf %405, %407 : vector<2x32xf32>
    %409 = vector.extract_strided_slice %401 {offsets = [0, 64], sizes = [2, 32], strides = [1, 1]} : vector<2x96xf32> to vector<2x32xf32>
    %410 = math.tanh %408 : vector<2x32xf32>
    %411 = arith.mulf %409, %410 : vector<2x32xf32>
    %412 = vector.extract_strided_slice %411 {offsets = [0, 0], sizes = [2, 16], strides = [1, 1]} : vector<2x32xf32> to vector<2x16xf32>
    %413 = vector.shape_cast %412 : vector<2x16xf32> to vector<1x2x16xf32>
    %414 = arith.index_cast %c2_i32_155 : i32 to index
    %c0_162 = arith.constant 0 : index
    %c0_163 = arith.constant 0 : index
    %415 = vector.load %arg13[%414, %c0_162, %c0_163] : memref<8x2x32xf32, #tpu.memory_space<vmem>>, vector<1x2x16xf32>
    tpu.vector_store %arg13[%414, %c0_162, %c0_163], %413 {strides = array<i32>} : memref<8x2x32xf32, #tpu.memory_space<vmem>>, vector<1x2x16xf32>,
    %416 = vector.extract_strided_slice %411 {offsets = [0, 16], sizes = [2, 16], strides = [1, 1]} : vector<2x32xf32> to vector<2x16xf32>
    %417 = vector.shape_cast %416 : vector<2x16xf32> to vector<1x2x16xf32>
    %c7_i32_164 = arith.constant 7 : i32
    %418 = arith.subi %c7_i32_164, %c2_i32_155 : i32
    %419 = arith.index_cast %418 : i32 to index
    %c0_165 = arith.constant 0 : index
    %c16_166 = arith.constant 16 : index
    %420 = vector.load %arg13[%419, %c0_165, %c16_166] : memref<8x2x32xf32, #tpu.memory_space<vmem>>, vector<1x2x16xf32>
    tpu.vector_store %arg13[%419, %c0_165, %c16_166], %417 {strides = array<i32>} : memref<8x2x32xf32, #tpu.memory_space<vmem>>, vector<1x2x16xf32>,
    %c3_i32_167 = arith.constant 3 : i32
    %421 = arith.index_cast %c3_i32_167 : i32 to index
    %c0_168 = arith.constant 0 : index
    %c0_169 = arith.constant 0 : index
    %422 = vector.load %arg12[%421, %c0_168, %c0_169] : memref<8x2x128xf32, #tpu.memory_space<vmem>>, vector<1x2x128xf32>
    %423 = vector.shape_cast %422 : vector<1x2x128xf32> to vector<2x128xf32>
    %cst_170 = arith.constant dense<0.000000e+00> : vector<2x128xf32>
    %424 = tpu.matmul %411, %296, %cst_170 {dimension_numbers = #tpu.dot_dimension_numbers<[1], [0], [0], [1], [0, 0, 1, 1], [], []>} : vector<2x32xf32>, vector<32x128xf32>, vector<2x128xf32> -> vector<2x128xf32>
    %425 = arith.addf %423, %424 : vector<2x128xf32>
    %426 = vector.extract_strided_slice %425 {offsets = [0, 0], sizes = [2, 96], strides = [1, 1]} : vector<2x128xf32> to vector<2x96xf32>
    %cst_171 = arith.constant 5.000000e-01 : f32
    %427 = vector.broadcast %cst_171 : f32 to vector<2x96xf32>
    %428 = arith.mulf %427, %426 : vector<2x96xf32>
    %429 = math.tanh %428 : vector<2x96xf32>
    %cst_172 = arith.constant 5.000000e-01 : f32
    %430 = vector.broadcast %cst_172 : f32 to vector<2x96xf32>
    %431 = arith.mulf %430, %429 : vector<2x96xf32>
    %cst_173 = arith.constant 5.000000e-01 : f32
    %432 = vector.broadcast %cst_173 : f32 to vector<2x96xf32>
    %433 = arith.addf %431, %432 : vector<2x96xf32>
    %434 = vector.extract_strided_slice %425 {offsets = [0, 96], sizes = [2, 32], strides = [1, 1]} : vector<2x128xf32> to vector<2x32xf32>
    %435 = math.tanh %434 : vector<2x32xf32>
    %436 = vector.extract_strided_slice %433 {offsets = [0, 32], sizes = [2, 32], strides = [1, 1]} : vector<2x96xf32> to vector<2x32xf32>
    %437 = arith.mulf %436, %408 : vector<2x32xf32>
    %438 = vector.extract_strided_slice %433 {offsets = [0, 0], sizes = [2, 32], strides = [1, 1]} : vector<2x96xf32> to vector<2x32xf32>
    %439 = arith.mulf %438, %435 : vector<2x32xf32>
    %440 = arith.addf %437, %439 : vector<2x32xf32>
    %441 = vector.extract_strided_slice %433 {offsets = [0, 64], sizes = [2, 32], strides = [1, 1]} : vector<2x96xf32> to vector<2x32xf32>
    %442 = math.tanh %440 : vector<2x32xf32>
    %443 = arith.mulf %441, %442 : vector<2x32xf32>
    %444 = vector.extract_strided_slice %443 {offsets = [0, 0], sizes = [2, 16], strides = [1, 1]} : vector<2x32xf32> to vector<2x16xf32>
    %445 = vector.shape_cast %444 : vector<2x16xf32> to vector<1x2x16xf32>
    %446 = arith.index_cast %c3_i32_167 : i32 to index
    %c0_174 = arith.constant 0 : index
    %c0_175 = arith.constant 0 : index
    %447 = vector.load %arg13[%446, %c0_174, %c0_175] : memref<8x2x32xf32, #tpu.memory_space<vmem>>, vector<1x2x16xf32>
    tpu.vector_store %arg13[%446, %c0_174, %c0_175], %445 {strides = array<i32>} : memref<8x2x32xf32, #tpu.memory_space<vmem>>, vector<1x2x16xf32>,
    %448 = vector.extract_strided_slice %443 {offsets = [0, 16], sizes = [2, 16], strides = [1, 1]} : vector<2x32xf32> to vector<2x16xf32>
    %449 = vector.shape_cast %448 : vector<2x16xf32> to vector<1x2x16xf32>
    %c7_i32_176 = arith.constant 7 : i32
    %450 = arith.subi %c7_i32_176, %c3_i32_167 : i32
    %451 = arith.index_cast %450 : i32 to index
    %c0_177 = arith.constant 0 : index
    %c16_178 = arith.constant 16 : index
    %452 = vector.load %arg13[%451, %c0_177, %c16_178] : memref<8x2x32xf32, #tpu.memory_space<vmem>>, vector<1x2x16xf32>
    tpu.vector_store %arg13[%451, %c0_177, %c16_178], %449 {strides = array<i32>} : memref<8x2x32xf32, #tpu.memory_space<vmem>>, vector<1x2x16xf32>,
    %c4_i32_179 = arith.constant 4 : i32
    %453 = arith.index_cast %c4_i32_179 : i32 to index
    %c0_180 = arith.constant 0 : index
    %c0_181 = arith.constant 0 : index
    %454 = vector.load %arg12[%453, %c0_180, %c0_181] : memref<8x2x128xf32, #tpu.memory_space<vmem>>, vector<1x2x128xf32>
    %455 = vector.shape_cast %454 : vector<1x2x128xf32> to vector<2x128xf32>
    %cst_182 = arith.constant dense<0.000000e+00> : vector<2x128xf32>
    %456 = tpu.matmul %443, %296, %cst_182 {dimension_numbers = #tpu.dot_dimension_numbers<[1], [0], [0], [1], [0, 0, 1, 1], [], []>} : vector<2x32xf32>, vector<32x128xf32>, vector<2x128xf32> -> vector<2x128xf32>
    %457 = arith.addf %455, %456 : vector<2x128xf32>
    %458 = vector.extract_strided_slice %457 {offsets = [0, 0], sizes = [2, 96], strides = [1, 1]} : vector<2x128xf32> to vector<2x96xf32>
    %cst_183 = arith.constant 5.000000e-01 : f32
    %459 = vector.broadcast %cst_183 : f32 to vector<2x96xf32>
    %460 = arith.mulf %459, %458 : vector<2x96xf32>
    %461 = math.tanh %460 : vector<2x96xf32>
    %cst_184 = arith.constant 5.000000e-01 : f32
    %462 = vector.broadcast %cst_184 : f32 to vector<2x96xf32>
    %463 = arith.mulf %462, %461 : vector<2x96xf32>
    %cst_185 = arith.constant 5.000000e-01 : f32
    %464 = vector.broadcast %cst_185 : f32 to vector<2x96xf32>
    %465 = arith.addf %463, %464 : vector<2x96xf32>
    %466 = vector.extract_strided_slice %457 {offsets = [0, 96], sizes = [2, 32], strides = [1, 1]} : vector<2x128xf32> to vector<2x32xf32>
    %467 = math.tanh %466 : vector<2x32xf32>
    %468 = vector.extract_strided_slice %465 {offsets = [0, 32], sizes = [2, 32], strides = [1, 1]} : vector<2x96xf32> to vector<2x32xf32>
    %469 = arith.mulf %468, %440 : vector<2x32xf32>
    %470 = vector.extract_strided_slice %465 {offsets = [0, 0], sizes = [2, 32], strides = [1, 1]} : vector<2x96xf32> to vector<2x32xf32>
    %471 = arith.mulf %470, %467 : vector<2x32xf32>
    %472 = arith.addf %469, %471 : vector<2x32xf32>
    %473 = vector.extract_strided_slice %465 {offsets = [0, 64], sizes = [2, 32], strides = [1, 1]} : vector<2x96xf32> to vector<2x32xf32>
    %474 = math.tanh %472 : vector<2x32xf32>
    %475 = arith.mulf %473, %474 : vector<2x32xf32>
    %476 = vector.extract_strided_slice %475 {offsets = [0, 0], sizes = [2, 16], strides = [1, 1]} : vector<2x32xf32> to vector<2x16xf32>
    %477 = vector.shape_cast %476 : vector<2x16xf32> to vector<1x2x16xf32>
    %478 = arith.index_cast %c4_i32_179 : i32 to index
    %c0_186 = arith.constant 0 : index
    %c0_187 = arith.constant 0 : index
    %479 = vector.load %arg13[%478, %c0_186, %c0_187] : memref<8x2x32xf32, #tpu.memory_space<vmem>>, vector<1x2x16xf32>
    tpu.vector_store %arg13[%478, %c0_186, %c0_187], %477 {strides = array<i32>} : memref<8x2x32xf32, #tpu.memory_space<vmem>>, vector<1x2x16xf32>,
    %480 = vector.extract_strided_slice %475 {offsets = [0, 16], sizes = [2, 16], strides = [1, 1]} : vector<2x32xf32> to vector<2x16xf32>
    %481 = vector.shape_cast %480 : vector<2x16xf32> to vector<1x2x16xf32>
    %c7_i32_188 = arith.constant 7 : i32
    %482 = arith.subi %c7_i32_188, %c4_i32_179 : i32
    %483 = arith.index_cast %482 : i32 to index
    %c0_189 = arith.constant 0 : index
    %c16_190 = arith.constant 16 : index
    %484 = vector.load %arg13[%483, %c0_189, %c16_190] : memref<8x2x32xf32, #tpu.memory_space<vmem>>, vector<1x2x16xf32>
    tpu.vector_store %arg13[%483, %c0_189, %c16_190], %481 {strides = array<i32>} : memref<8x2x32xf32, #tpu.memory_space<vmem>>, vector<1x2x16xf32>,
    %c5_i32_191 = arith.constant 5 : i32
    %485 = arith.index_cast %c5_i32_191 : i32 to index
    %c0_192 = arith.constant 0 : index
    %c0_193 = arith.constant 0 : index
    %486 = vector.load %arg12[%485, %c0_192, %c0_193] : memref<8x2x128xf32, #tpu.memory_space<vmem>>, vector<1x2x128xf32>
    %487 = vector.shape_cast %486 : vector<1x2x128xf32> to vector<2x128xf32>
    %cst_194 = arith.constant dense<0.000000e+00> : vector<2x128xf32>
    %488 = tpu.matmul %475, %296, %cst_194 {dimension_numbers = #tpu.dot_dimension_numbers<[1], [0], [0], [1], [0, 0, 1, 1], [], []>} : vector<2x32xf32>, vector<32x128xf32>, vector<2x128xf32> -> vector<2x128xf32>
    %489 = arith.addf %487, %488 : vector<2x128xf32>
    %490 = vector.extract_strided_slice %489 {offsets = [0, 0], sizes = [2, 96], strides = [1, 1]} : vector<2x128xf32> to vector<2x96xf32>
    %cst_195 = arith.constant 5.000000e-01 : f32
    %491 = vector.broadcast %cst_195 : f32 to vector<2x96xf32>
    %492 = arith.mulf %491, %490 : vector<2x96xf32>
    %493 = math.tanh %492 : vector<2x96xf32>
    %cst_196 = arith.constant 5.000000e-01 : f32
    %494 = vector.broadcast %cst_196 : f32 to vector<2x96xf32>
    %495 = arith.mulf %494, %493 : vector<2x96xf32>
    %cst_197 = arith.constant 5.000000e-01 : f32
    %496 = vector.broadcast %cst_197 : f32 to vector<2x96xf32>
    %497 = arith.addf %495, %496 : vector<2x96xf32>
    %498 = vector.extract_strided_slice %489 {offsets = [0, 96], sizes = [2, 32], strides = [1, 1]} : vector<2x128xf32> to vector<2x32xf32>
    %499 = math.tanh %498 : vector<2x32xf32>
    %500 = vector.extract_strided_slice %497 {offsets = [0, 32], sizes = [2, 32], strides = [1, 1]} : vector<2x96xf32> to vector<2x32xf32>
    %501 = arith.mulf %500, %472 : vector<2x32xf32>
    %502 = vector.extract_strided_slice %497 {offsets = [0, 0], sizes = [2, 32], strides = [1, 1]} : vector<2x96xf32> to vector<2x32xf32>
    %503 = arith.mulf %502, %499 : vector<2x32xf32>
    %504 = arith.addf %501, %503 : vector<2x32xf32>
    %505 = vector.extract_strided_slice %497 {offsets = [0, 64], sizes = [2, 32], strides = [1, 1]} : vector<2x96xf32> to vector<2x32xf32>
    %506 = math.tanh %504 : vector<2x32xf32>
    %507 = arith.mulf %505, %506 : vector<2x32xf32>
    %508 = vector.extract_strided_slice %507 {offsets = [0, 0], sizes = [2, 16], strides = [1, 1]} : vector<2x32xf32> to vector<2x16xf32>
    %509 = vector.shape_cast %508 : vector<2x16xf32> to vector<1x2x16xf32>
    %510 = arith.index_cast %c5_i32_191 : i32 to index
    %c0_198 = arith.constant 0 : index
    %c0_199 = arith.constant 0 : index
    %511 = vector.load %arg13[%510, %c0_198, %c0_199] : memref<8x2x32xf32, #tpu.memory_space<vmem>>, vector<1x2x16xf32>
    tpu.vector_store %arg13[%510, %c0_198, %c0_199], %509 {strides = array<i32>} : memref<8x2x32xf32, #tpu.memory_space<vmem>>, vector<1x2x16xf32>,
    %512 = vector.extract_strided_slice %507 {offsets = [0, 16], sizes = [2, 16], strides = [1, 1]} : vector<2x32xf32> to vector<2x16xf32>
    %513 = vector.shape_cast %512 : vector<2x16xf32> to vector<1x2x16xf32>
    %c7_i32_200 = arith.constant 7 : i32
    %514 = arith.subi %c7_i32_200, %c5_i32_191 : i32
    %515 = arith.index_cast %514 : i32 to index
    %c0_201 = arith.constant 0 : index
    %c16_202 = arith.constant 16 : index
    %516 = vector.load %arg13[%515, %c0_201, %c16_202] : memref<8x2x32xf32, #tpu.memory_space<vmem>>, vector<1x2x16xf32>
    tpu.vector_store %arg13[%515, %c0_201, %c16_202], %513 {strides = array<i32>} : memref<8x2x32xf32, #tpu.memory_space<vmem>>, vector<1x2x16xf32>,
    %c6_i32_203 = arith.constant 6 : i32
    %517 = arith.index_cast %c6_i32_203 : i32 to index
    %c0_204 = arith.constant 0 : index
    %c0_205 = arith.constant 0 : index
    %518 = vector.load %arg12[%517, %c0_204, %c0_205] : memref<8x2x128xf32, #tpu.memory_space<vmem>>, vector<1x2x128xf32>
    %519 = vector.shape_cast %518 : vector<1x2x128xf32> to vector<2x128xf32>
    %cst_206 = arith.constant dense<0.000000e+00> : vector<2x128xf32>
    %520 = tpu.matmul %507, %296, %cst_206 {dimension_numbers = #tpu.dot_dimension_numbers<[1], [0], [0], [1], [0, 0, 1, 1], [], []>} : vector<2x32xf32>, vector<32x128xf32>, vector<2x128xf32> -> vector<2x128xf32>
    %521 = arith.addf %519, %520 : vector<2x128xf32>
    %522 = vector.extract_strided_slice %521 {offsets = [0, 0], sizes = [2, 96], strides = [1, 1]} : vector<2x128xf32> to vector<2x96xf32>
    %cst_207 = arith.constant 5.000000e-01 : f32
    %523 = vector.broadcast %cst_207 : f32 to vector<2x96xf32>
    %524 = arith.mulf %523, %522 : vector<2x96xf32>
    %525 = math.tanh %524 : vector<2x96xf32>
    %cst_208 = arith.constant 5.000000e-01 : f32
    %526 = vector.broadcast %cst_208 : f32 to vector<2x96xf32>
    %527 = arith.mulf %526, %525 : vector<2x96xf32>
    %cst_209 = arith.constant 5.000000e-01 : f32
    %528 = vector.broadcast %cst_209 : f32 to vector<2x96xf32>
    %529 = arith.addf %527, %528 : vector<2x96xf32>
    %530 = vector.extract_strided_slice %521 {offsets = [0, 96], sizes = [2, 32], strides = [1, 1]} : vector<2x128xf32> to vector<2x32xf32>
    %531 = math.tanh %530 : vector<2x32xf32>
    %532 = vector.extract_strided_slice %529 {offsets = [0, 32], sizes = [2, 32], strides = [1, 1]} : vector<2x96xf32> to vector<2x32xf32>
    %533 = arith.mulf %532, %504 : vector<2x32xf32>
    %534 = vector.extract_strided_slice %529 {offsets = [0, 0], sizes = [2, 32], strides = [1, 1]} : vector<2x96xf32> to vector<2x32xf32>
    %535 = arith.mulf %534, %531 : vector<2x32xf32>
    %536 = arith.addf %533, %535 : vector<2x32xf32>
    %537 = vector.extract_strided_slice %529 {offsets = [0, 64], sizes = [2, 32], strides = [1, 1]} : vector<2x96xf32> to vector<2x32xf32>
    %538 = math.tanh %536 : vector<2x32xf32>
    %539 = arith.mulf %537, %538 : vector<2x32xf32>
    %540 = vector.extract_strided_slice %539 {offsets = [0, 0], sizes = [2, 16], strides = [1, 1]} : vector<2x32xf32> to vector<2x16xf32>
    %541 = vector.shape_cast %540 : vector<2x16xf32> to vector<1x2x16xf32>
    %542 = arith.index_cast %c6_i32_203 : i32 to index
    %c0_210 = arith.constant 0 : index
    %c0_211 = arith.constant 0 : index
    %543 = vector.load %arg13[%542, %c0_210, %c0_211] : memref<8x2x32xf32, #tpu.memory_space<vmem>>, vector<1x2x16xf32>
    tpu.vector_store %arg13[%542, %c0_210, %c0_211], %541 {strides = array<i32>} : memref<8x2x32xf32, #tpu.memory_space<vmem>>, vector<1x2x16xf32>,
    %544 = vector.extract_strided_slice %539 {offsets = [0, 16], sizes = [2, 16], strides = [1, 1]} : vector<2x32xf32> to vector<2x16xf32>
    %545 = vector.shape_cast %544 : vector<2x16xf32> to vector<1x2x16xf32>
    %c7_i32_212 = arith.constant 7 : i32
    %546 = arith.subi %c7_i32_212, %c6_i32_203 : i32
    %547 = arith.index_cast %546 : i32 to index
    %c0_213 = arith.constant 0 : index
    %c16_214 = arith.constant 16 : index
    %548 = vector.load %arg13[%547, %c0_213, %c16_214] : memref<8x2x32xf32, #tpu.memory_space<vmem>>, vector<1x2x16xf32>
    tpu.vector_store %arg13[%547, %c0_213, %c16_214], %545 {strides = array<i32>} : memref<8x2x32xf32, #tpu.memory_space<vmem>>, vector<1x2x16xf32>,
    %c7_i32_215 = arith.constant 7 : i32
    %549 = arith.index_cast %c7_i32_215 : i32 to index
    %c0_216 = arith.constant 0 : index
    %c0_217 = arith.constant 0 : index
    %550 = vector.load %arg12[%549, %c0_216, %c0_217] : memref<8x2x128xf32, #tpu.memory_space<vmem>>, vector<1x2x128xf32>
    %551 = vector.shape_cast %550 : vector<1x2x128xf32> to vector<2x128xf32>
    %cst_218 = arith.constant dense<0.000000e+00> : vector<2x128xf32>
    %552 = tpu.matmul %539, %296, %cst_218 {dimension_numbers = #tpu.dot_dimension_numbers<[1], [0], [0], [1], [0, 0, 1, 1], [], []>} : vector<2x32xf32>, vector<32x128xf32>, vector<2x128xf32> -> vector<2x128xf32>
    %553 = arith.addf %551, %552 : vector<2x128xf32>
    %554 = vector.extract_strided_slice %553 {offsets = [0, 0], sizes = [2, 96], strides = [1, 1]} : vector<2x128xf32> to vector<2x96xf32>
    %cst_219 = arith.constant 5.000000e-01 : f32
    %555 = vector.broadcast %cst_219 : f32 to vector<2x96xf32>
    %556 = arith.mulf %555, %554 : vector<2x96xf32>
    %557 = math.tanh %556 : vector<2x96xf32>
    %cst_220 = arith.constant 5.000000e-01 : f32
    %558 = vector.broadcast %cst_220 : f32 to vector<2x96xf32>
    %559 = arith.mulf %558, %557 : vector<2x96xf32>
    %cst_221 = arith.constant 5.000000e-01 : f32
    %560 = vector.broadcast %cst_221 : f32 to vector<2x96xf32>
    %561 = arith.addf %559, %560 : vector<2x96xf32>
    %562 = vector.extract_strided_slice %553 {offsets = [0, 96], sizes = [2, 32], strides = [1, 1]} : vector<2x128xf32> to vector<2x32xf32>
    %563 = math.tanh %562 : vector<2x32xf32>
    %564 = vector.extract_strided_slice %561 {offsets = [0, 32], sizes = [2, 32], strides = [1, 1]} : vector<2x96xf32> to vector<2x32xf32>
    %565 = arith.mulf %564, %536 : vector<2x32xf32>
    %566 = vector.extract_strided_slice %561 {offsets = [0, 0], sizes = [2, 32], strides = [1, 1]} : vector<2x96xf32> to vector<2x32xf32>
    %567 = arith.mulf %566, %563 : vector<2x32xf32>
    %568 = arith.addf %565, %567 : vector<2x32xf32>
    %569 = vector.extract_strided_slice %561 {offsets = [0, 64], sizes = [2, 32], strides = [1, 1]} : vector<2x96xf32> to vector<2x32xf32>
    %570 = math.tanh %568 : vector<2x32xf32>
    %571 = arith.mulf %569, %570 : vector<2x32xf32>
    %572 = vector.extract_strided_slice %571 {offsets = [0, 0], sizes = [2, 16], strides = [1, 1]} : vector<2x32xf32> to vector<2x16xf32>
    %573 = vector.shape_cast %572 : vector<2x16xf32> to vector<1x2x16xf32>
    %574 = arith.index_cast %c7_i32_215 : i32 to index
    %c0_222 = arith.constant 0 : index
    %c0_223 = arith.constant 0 : index
    %575 = vector.load %arg13[%574, %c0_222, %c0_223] : memref<8x2x32xf32, #tpu.memory_space<vmem>>, vector<1x2x16xf32>
    tpu.vector_store %arg13[%574, %c0_222, %c0_223], %573 {strides = array<i32>} : memref<8x2x32xf32, #tpu.memory_space<vmem>>, vector<1x2x16xf32>,
    %576 = vector.extract_strided_slice %571 {offsets = [0, 16], sizes = [2, 16], strides = [1, 1]} : vector<2x32xf32> to vector<2x16xf32>
    %577 = vector.shape_cast %576 : vector<2x16xf32> to vector<1x2x16xf32>
    %c7_i32_224 = arith.constant 7 : i32
    %578 = arith.subi %c7_i32_224, %c7_i32_215 : i32
    %579 = arith.index_cast %578 : i32 to index
    %c0_225 = arith.constant 0 : index
    %c16_226 = arith.constant 16 : index
    %580 = vector.load %arg13[%579, %c0_225, %c16_226] : memref<8x2x32xf32, #tpu.memory_space<vmem>>, vector<1x2x16xf32>
    tpu.vector_store %arg13[%579, %c0_225, %c16_226], %577 {strides = array<i32>} : memref<8x2x32xf32, #tpu.memory_space<vmem>>, vector<1x2x16xf32>,
    %c8_i32_227 = arith.constant 8 : i32
    %c0_228 = arith.constant 0 : index
    %c0_229 = arith.constant 0 : index
    %c0_230 = arith.constant 0 : index
    %581 = vector.load %arg13[%c0_228, %c0_229, %c0_230] : memref<8x2x32xf32, #tpu.memory_space<vmem>>, vector<8x2x32xf32>
    %c0_231 = arith.constant 0 : index
    %c0_232 = arith.constant 0 : index
    %582 = vector.load %arg9[%c0_231, %c0_232] : memref<1x32xf32, #tpu.memory_space<vmem>>, vector<1x32xf32>
    %c0_233 = arith.constant 0 : index
    %c0_234 = arith.constant 0 : index
    %583 = vector.load %arg10[%c0_233, %c0_234] : memref<1x1xf32, #tpu.memory_space<vmem>>, vector<1x1xf32>
    %584 = vector.shape_cast %582 : vector<1x32xf32> to vector<1x1x32xf32>
    %585 = vector.broadcast %584 : vector<1x1x32xf32> to vector<8x2x32xf32>
    %586 = arith.mulf %581, %585 : vector<8x2x32xf32>
    %cst_235 = arith.constant dense<0.000000e+00> : vector<8x2xf32>
    %587 = vector.multi_reduction <add>, %586, %cst_235 [2] : vector<8x2x32xf32> to vector<8x2xf32>
    %588 = vector.broadcast %583 : vector<1x1xf32> to vector<8x2xf32>
    %589 = arith.addf %587, %588 : vector<8x2xf32>
    %c0_236 = arith.constant 0 : index
    %c0_237 = arith.constant 0 : index
    %590 = vector.load %arg11[%c0_236, %c0_237] : memref<8x2xf32, #tpu.memory_space<vmem>>, vector<8x2xf32>
    tpu.vector_store %arg11[%c0_236, %c0_237], %589 {strides = array<i32>} : memref<8x2xf32, #tpu.memory_space<vmem>>, vector<8x2xf32>,
    return
  }
}

</mosaic_0001>

<llo_original>
// kernel: tpu_custom_call.1
$region0: #{tpu_custom_call.1}
  #allocation0 [shape = 'u32[]', space=smem, size = 0x4, offset = 0x4, fixed_abs, tag = 'smem constant byte address 0x4 - core index']
  #allocation1 [shape = 'u32[144,128]{1,0:T(1,128)}', space=vmem, size = 0x12000, scoped, tag = 'internal scratch']
  #allocation2 [shape = 'f32[8,2,128]{2,1,0:T(2,128)}', space=vmem, size = 0x2000, scoped, tag = 'scratch operand']
  #allocation3 [shape = 'f32[8,2,32]{2,1,0:T(2,128)}', space=vmem, size = 0x2000, scoped, tag = 'scratch operand']
  #allocation4 [shape = 'f32[1,1]{1,0:T(1,128)S(1)}', space=vmem, size = 0x200, scoped, tag = 'scoped memory for tpu_custom_call.1']
  %s0 = inlined_call_operand.vmem [shape: f32[8,2,1], index: 0, kind: input, shape index: {}]
  %s1 = inlined_call_operand.hbm [shape: f32[4,2,16], index: 1, kind: input, shape index: {}]
  %s2 = inlined_call_operand.hbm [shape: f32[4,2,16], index: 2, kind: input, shape index: {}]
  %s3 = inlined_call_operand.vmem [shape: f32[2,128], index: 3, kind: input, shape index: {}]
  %s4 = inlined_call_operand.vmem [shape: f32[32,128], index: 4, kind: input, shape index: {}]
  %s5 = inlined_call_operand.vmem [shape: f32[1,128], index: 5, kind: input, shape index: {}]
  %s6 = inlined_call_operand.hbm [shape: f32[64,128], index: 6, kind: input, shape index: {}]
  %s7 = inlined_call_operand.hbm [shape: f32[32,128], index: 7, kind: input, shape index: {}]
  %s8 = inlined_call_operand.vmem [shape: f32[1,128], index: 8, kind: input, shape index: {}]
  %s9 = inlined_call_operand.vmem [shape: f32[1,32], index: 9, kind: input, shape index: {}]
  %s10 = inlined_call_operand.<no memory space> [shape: f32[1,1], index: 10, kind: input, shape index: {}]
  %s11 = inlined_call_operand.vmem [shape: f32[8,2], index: 11, kind: output, shape index: {}]
  %s12 = sld [smem:[#allocation0]]
  $region70: #{tpu_custom_call.1} parent=0
    _
  %s14 = ssub.s32 1, %s12
  %s15 = scalar_select 0, %s14, %s12
  %v16 = vstv %s10
  %17 = vst [vmem:[#allocation4] sm:$0x1] %v16
  $region1: #{tpu_custom_call.1} parent=0
    #allocation5 [shape = 'u8[4096]{0}', space=vmem, size = 0x1000, scoped, tag = 'input window, operand 1, single buffered']
    #allocation6 [shape = 's32[1]{0}', space=sflag, size = 0x4, scoped, tag = 'scoped memory for tpu_custom_call.1']
    #allocation7 [shape = 'u8[4096]{0}', space=vmem, size = 0x1000, scoped, tag = 'input window, operand 2, single buffered']
    #allocation8 [shape = 's32[1]{0}', space=sflag, size = 0x4, scoped, tag = 'scoped memory for tpu_custom_call.1']
    #allocation9 [shape = 'u8[32768]{0}', space=vmem, size = 0x8000, scoped, tag = 'input window, operand 6, single buffered']
    #allocation10 [shape = 'u8[16384]{0}', space=vmem, size = 0x4000, scoped, tag = 'input window, operand 7, single buffered']
    #allocation11 [shape = 's32[1]{0}', space=sflag, size = 0x4, scoped, tag = 'scoped memory for tpu_custom_call.1']
    %18 = vsyncpa [#allocation6], 0
    %19 = vsyncpa [#allocation8], 0
    %20 = vsyncpa [#allocation11], 0
    // Predicated region
    $region2: #{tpu_custom_call.1} parent=1 // pred_check
      _
    $region3: #{tpu_custom_call.1} parent=1 // pred_check_branch
      %22 = sbr.rel (0) target = $region5
    $region4: #{tpu_custom_call.1} parent=1 // pred_region
      _
    $region5: #{tpu_custom_call.1} parent=1 // pred_fallthru
      _
    // Predicated region
    $region6: #{tpu_custom_call.1} parent=1 // pred_check
      _
    $region7: #{tpu_custom_call.1} parent=1 // pred_check_branch
      %24 = sbr.rel (0) target = $region9
    $region8: #{tpu_custom_call.1} parent=1 // pred_region
      %s26 = ssub.s32 128, 128
      %27 = vsyncadd [#allocation6], %s26
      %s28 = sshll.u32 [#allocation5], 4
      %s29 = int_to_ptr.vmem [resolvable:$true] %s28
      %34 = dma.hbm_to_vmem [thread:$0]  %s1, 128, %s29, [#allocation6], 32, 32, 2
    $region9: #{tpu_custom_call.1} parent=1 // pred_fallthru
      _
    // Predicated region
    $region10: #{tpu_custom_call.1} parent=1 // pred_check
      _
    $region11: #{tpu_custom_call.1} parent=1 // pred_check_branch
      %36 = sbr.rel (0) target = $region13
    $region12: #{tpu_custom_call.1} parent=1 // pred_region
      %s38 = ssub.s32 128, 128
      %39 = vsyncadd [#allocation8], %s38
      %s40 = sshll.u32 [#allocation7], 4
      %s41 = int_to_ptr.vmem [resolvable:$true] %s40
      %46 = dma.hbm_to_vmem [thread:$0]  %s2, 128, %s41, [#allocation8], 32, 32, 2
    $region13: #{tpu_custom_call.1} parent=1 // pred_fallthru
      _
    // Predicated region
    $region14: #{tpu_custom_call.1} parent=1 // pred_check
      _
    $region15: #{tpu_custom_call.1} parent=1 // pred_check_branch
      %48 = sbr.rel (0) target = $region17
    $region16: #{tpu_custom_call.1} parent=1 // pred_region
      _
    $region17: #{tpu_custom_call.1} parent=1 // pred_fallthru
      _
    // Predicated region
    $region18: #{tpu_custom_call.1} parent=1 // pred_check
      _
    $region19: #{tpu_custom_call.1} parent=1 // pred_check_branch
      %50 = sbr.rel (0) target = $region21
    $region20: #{tpu_custom_call.1} parent=1 // pred_region
      _
    $region21: #{tpu_custom_call.1} parent=1 // pred_fallthru
      _
    // Predicated region
    $region22: #{tpu_custom_call.1} parent=1 // pred_check
      _
    $region23: #{tpu_custom_call.1} parent=1 // pred_check_branch
      %52 = sbr.rel (0) target = $region25
    $region24: #{tpu_custom_call.1} parent=1 // pred_region
      _
    $region25: #{tpu_custom_call.1} parent=1 // pred_fallthru
      _
    // Predicated region
    $region26: #{tpu_custom_call.1} parent=1 // pred_check
      _
    $region27: #{tpu_custom_call.1} parent=1 // pred_check_branch
      %54 = sbr.rel (0) target = $region29
    $region28: #{tpu_custom_call.1} parent=1 // pred_region
      %s56 = ssub.s32 1024, 1024
      %57 = vsyncadd [#allocation8], %s56
      %s58 = sshll.u32 [#allocation9], 4
      %s59 = int_to_ptr.vmem [resolvable:$true] %s58
      %64 = dma.hbm_to_vmem [thread:$0]  %s6, 1024, %s59, [#allocation8], 128, 128, 8
    $region29: #{tpu_custom_call.1} parent=1 // pred_fallthru
      _
    // Predicated region
    $region30: #{tpu_custom_call.1} parent=1 // pred_check
      _
    $region31: #{tpu_custom_call.1} parent=1 // pred_check_branch
      %66 = sbr.rel (0) target = $region33
    $region32: #{tpu_custom_call.1} parent=1 // pred_region
      %s68 = ssub.s32 512, 512
      %69 = vsyncadd [#allocation11], %s68
      %s70 = sshll.u32 [#allocation10], 4
      %s71 = int_to_ptr.vmem [resolvable:$true] %s70
      %76 = dma.hbm_to_vmem [thread:$0]  %s7, 512, %s71, [#allocation11], 128, 128, 8
    $region33: #{tpu_custom_call.1} parent=1 // pred_fallthru
      _
    // Predicated region
    $region34: #{tpu_custom_call.1} parent=1 // pred_check
      _
    $region35: #{tpu_custom_call.1} parent=1 // pred_check_branch
      %78 = sbr.rel (0) target = $region37
    $region36: #{tpu_custom_call.1} parent=1 // pred_region
      _
    $region37: #{tpu_custom_call.1} parent=1 // pred_fallthru
      _
    // Predicated region
    $region38: #{tpu_custom_call.1} parent=1 // pred_check
      _
    $region39: #{tpu_custom_call.1} parent=1 // pred_check_branch
      %80 = sbr.rel (0) target = $region41
    $region40: #{tpu_custom_call.1} parent=1 // pred_region
      _
    $region41: #{tpu_custom_call.1} parent=1 // pred_fallthru
      _
    // Predicated region
    $region42: #{tpu_custom_call.1} parent=1 // pred_check
      _
    $region43: #{tpu_custom_call.1} parent=1 // pred_check_branch
      %82 = sbr.rel (0) target = $region45
    $region44: #{tpu_custom_call.1} parent=1 // pred_region
      _
    $region45: #{tpu_custom_call.1} parent=1 // pred_fallthru
      _
    // Predicated region
    $region46: #{tpu_custom_call.1} parent=1 // pred_check
      _
    $region47: #{tpu_custom_call.1} parent=1 // pred_check_branch
      %84 = sbr.rel (0) target = $region49
    $region48: #{tpu_custom_call.1} parent=1 // pred_region
      %85 = dma.done [#allocation6], 128
    $region49: #{tpu_custom_call.1} parent=1 // pred_fallthru
      _
    // Predicated region
    $region50: #{tpu_custom_call.1} parent=1 // pred_check
      _
    $region51: #{tpu_custom_call.1} parent=1 // pred_check_branch
      %87 = sbr.rel (0) target = $region53
    $region52: #{tpu_custom_call.1} parent=1 // pred_region
      %88 = dma.done [#allocation8], 128
    $region53: #{tpu_custom_call.1} parent=1 // pred_fallthru
      _
    // Predicated region
    $region54: #{tpu_custom_call.1} parent=1 // pred_check
      _
    $region55: #{tpu_custom_call.1} parent=1 // pred_check_branch
      %90 = sbr.rel (0) target = $region57
    $region56: #{tpu_custom_call.1} parent=1 // pred_region
      %91 = dma.done [#allocation8], 1024
    $region57: #{tpu_custom_call.1} parent=1 // pred_fallthru
      _
    // Predicated region
    $region58: #{tpu_custom_call.1} parent=1 // pred_check
      _
    $region59: #{tpu_custom_call.1} parent=1 // pred_check_branch
      %93 = sbr.rel (0) target = $region61
    $region60: #{tpu_custom_call.1} parent=1 // pred_region
      %94 = dma.done [#allocation11], 512
    $region61: #{tpu_custom_call.1} parent=1 // pred_fallthru
      _
    %v95 = vld [vmem:[%s0] sm:$0x3]
    %v96 = vld [vmem:[%s0 + $0x2] sm:$0x3]
    %v97 = vld [vmem:[%s0 + $0x4] sm:$0x3]
    %v98 = vld [vmem:[%s0 + $0x6] sm:$0x3]
    %v99 = vld [vmem:[%s0 + $0x8] sm:$0x3]
    %v100 = vld [vmem:[%s0 + $0xa] sm:$0x3]
    %v101 = vld [vmem:[%s0 + $0xc] sm:$0x3]
    %v102 = vld [vmem:[%s0 + $0xe] sm:$0x3]
    %v103 = vld [vmem:[%s3] sm:$0x3]
    %v104 = vld [vmem:[%s4] sm:$0xff]
    %v105 = vld [vmem:[%s4 + $0x8] sm:$0xff]
    %v106 = vld [vmem:[%s4 + $0x10] sm:$0xff]
    %v107 = vld [vmem:[%s4 + $0x18] sm:$0xff]
    %v108 = vld [vmem:[%s5] sm:$0x1]
    %110 = vset.pattern.permute.xlu0 0
    %111 = vperm.xlu0 %110, %v95
    %v112 = vpop.permute.xlu0 %111
    %115 = vset.pattern.permute.xlu0 0
    %116 = vperm.xlu0 %115, %v96
    %v117 = vpop.permute.xlu0 %116
    %120 = vset.pattern.permute.xlu0 0
    %121 = vperm.xlu0 %120, %v97
    %v122 = vpop.permute.xlu0 %121
    %125 = vset.pattern.permute.xlu0 0
    %126 = vperm.xlu0 %125, %v98
    %v127 = vpop.permute.xlu0 %126
    %130 = vset.pattern.permute.xlu0 0
    %131 = vperm.xlu0 %130, %v99
    %v132 = vpop.permute.xlu0 %131
    %135 = vset.pattern.permute.xlu0 0
    %136 = vperm.xlu0 %135, %v100
    %v137 = vpop.permute.xlu0 %136
    %140 = vset.pattern.permute.xlu0 0
    %141 = vperm.xlu0 %140, %v101
    %v142 = vpop.permute.xlu0 %141
    %145 = vset.pattern.permute.xlu0 0
    %146 = vperm.xlu0 %145, %v102
    %v147 = vpop.permute.xlu0 %146
    %v149 = vlaneseq
    %v150 = vshrl.u32 %v149, 7
    %v151 = vsub.s32 0, %v150
    %v152 = vrot.slane %v103, %v151
    %v153 = vmul.f32 %v112, %v152
    %v154 = vmul.f32 %v117, %v152
    %v155 = vmul.f32 %v122, %v152
    %v156 = vmul.f32 %v127, %v152
    %v157 = vmul.f32 %v132, %v152
    %v158 = vmul.f32 %v137, %v152
    %v159 = vmul.f32 %v142, %v152
    %v160 = vmul.f32 %v147, %v152
    %v161 = vlaneseq
    %v162 = vshrl.u32 %v161, 7
    %v163 = vsub.s32 1, %v162
    %v164 = vrot.slane %v103, %v163
    %v165 = vmul.f32 %v147, %v164
    %v166 = vmul.f32 %v142, %v164
    %v167 = vmul.f32 %v137, %v164
    %v168 = vmul.f32 %v132, %v164
    %v169 = vmul.f32 %v127, %v164
    %v170 = vmul.f32 %v122, %v164
    %v171 = vmul.f32 %v117, %v164
    %v172 = vmul.f32 %v112, %v164
    %v173 = vadd.f32 %v153, %v165
    %v174 = vadd.f32 %v154, %v166
    %v175 = vadd.f32 %v155, %v167
    %v176 = vadd.f32 %v156, %v168
    %v177 = vadd.f32 %v157, %v169
    %v178 = vadd.f32 %v158, %v170
    %v179 = vadd.f32 %v159, %v171
    %v180 = vadd.f32 %v160, %v172
    %v182 = vlaneseq
    %v183 = vshrl.u32 %v182, 7
    %v184 = vsub.s32 0, %v183
    %v185 = vrot.slane %v108, %v184
    %v187 = vadd.f32 %v173, %v185
    %v188 = vadd.f32 %v174, %v185
    %v189 = vadd.f32 %v175, %v185
    %v190 = vadd.f32 %v176, %v185
    %v191 = vadd.f32 %v177, %v185
    %v192 = vadd.f32 %v178, %v185
    %v193 = vadd.f32 %v179, %v185
    %v194 = vadd.f32 %v180, %v185
    %195 = vst [vmem:[#allocation2] sm:$0x3] %v187
    %196 = vst [vmem:[#allocation2 + $0x2] sm:$0x3] %v188
    %197 = vst [vmem:[#allocation2 + $0x4] sm:$0x3] %v189
    %198 = vst [vmem:[#allocation2 + $0x6] sm:$0x3] %v190
    %199 = vst [vmem:[#allocation2 + $0x8] sm:$0x3] %v191
    %200 = vst [vmem:[#allocation2 + $0xa] sm:$0x3] %v192
    %201 = vst [vmem:[#allocation2 + $0xc] sm:$0x3] %v193
    %202 = vst [vmem:[#allocation2 + $0xe] sm:$0x3] %v194
    %v203 = vld [vmem:[#allocation5] sm:$0x3]
    %s204 = scalar_lea.vmem [#allocation5], 2
    %v205 = vld [vmem:[%s204] sm:$0x3]
    %207 = vrot.lane.b32.xlu0 %v205, 16
    %v208 = vpop.permute.xlu0 %207
    %vm210 = vcmask 130048
    %v211 = vsel %vm210, %v203, %v208
    %v212 = vld [vmem:[#allocation7] sm:$0x3]
    %s213 = scalar_lea.vmem [#allocation7], 2
    %v214 = vld [vmem:[%s213] sm:$0x3]
    %216 = vrot.lane.b32.xlu0 %v214, 16
    %v217 = vpop.permute.xlu0 %216
    %v219 = vsel %vm210, %v212, %v217
    %v220 = vld [vmem:[#allocation2] sm:$0x3]
    %vm221 = vcmask 261120
    %v223 = vsel %vm221, %v211, 0
    %225 = vmatprep.subr.mxu0 0.0
    %226 = vmatpush1.msra.mxu0 %v104
    %227 = vmatprep.subr.mxu0 0.0
    %228 = vmatpush1.msra.mxu0 %v105
    %229 = vmatprep.subr.mxu0 0.0
    %230 = vmatpush1.msra.mxu0 %v106
    %231 = vmatprep.subr.mxu0 0.0
    %232 = vmatpush1.msra.mxu0 %v107
    %233 = vmatprep.subr.mxu0 0.0
    %234 = vmatpush1.msra.mxu0 0.0
    %235 = vmatprep.subr.mxu0 0.0
    %236 = vmatpush1.msra.mxu0 0.0
    %237 = vmatprep.subr.mxu0 0.0
    %238 = vmatpush1.msra.mxu0 0.0
    %239 = vmatprep.subr.mxu0 0.0
    %240 = vmatpush1.msra.mxu0 0.0
    %241 = vmatprep.subr.mxu0 0.0
    %242 = vmatpush1.msra.mxu0 0.0
    %243 = vmatprep.subr.mxu0 0.0
    %244 = vmatpush1.msra.mxu0 0.0
    %245 = vmatprep.subr.mxu0 0.0
    %246 = vmatpush1.msra.mxu0 0.0
    %247 = vmatprep.subr.mxu0 0.0
    %248 = vmatpush1.msra.mxu0 0.0
    %249 = vmatprep.subr.mxu0 0.0
    %250 = vmatpush1.msra.mxu0 0.0
    %251 = vmatprep.subr.mxu0 0.0
    %252 = vmatpush1.msra.mxu0 0.0
    %253 = vmatprep.subr.mxu0 0.0
    %254 = vmatpush1.msra.mxu0 0.0
    %255 = vmatprep.subr.mxu0 0.0
    %256 = vmatpush1.msra.mxu0 0.0
    %257 = vmatprep.subr.mxu0 0.0
    %258 = vmatpush1.msra.mxu0 0.0
    %259 = vmatprep.subr.mxu0 0.0
    %260 = vmatpush1.msra.mxu0 0.0
    %261 = vmatprep.subr.mxu0 0.0
    %262 = vmatpush1.msra.mxu0 0.0
    %263 = vmatprep.subr.mxu0 0.0
    %264 = vmatpush1.msra.mxu0 0.0
    %265 = vmatprep.subr.mxu0 0.0
    %266 = vmatpush1.msra.mxu0 0.0
    %267 = vmatprep.subr.mxu0 0.0
    %268 = vmatpush1.msra.mxu0 0.0
    %269 = vmatprep.subr.mxu0 0.0
    %270 = vmatpush1.msra.mxu0 0.0
    %271 = vmatprep.subr.mxu0 0.0
    %272 = vmatpush1.msra.mxu0 0.0
    %273 = vmatprep.subr.mxu0 0.0
    %274 = vmatpush1.msra.mxu0 0.0
    %275 = vmatprep.subr.mxu0 0.0
    %276 = vmatpush1.msra.mxu0 0.0
    %277 = vmatprep.subr.mxu0 0.0
    %278 = vmatpush1.msra.mxu0 0.0
    %279 = vmatprep.subr.mxu0 0.0
    %280 = vmatpush1.msra.mxu0 0.0
    %281 = vmatprep.subr.mxu0 0.0
    %282 = vmatpush1.msra.mxu0 0.0
    %283 = vmatprep.subr.mxu0 0.0
    %284 = vmatpush1.msra.mxu0 0.0
    %285 = vmatprep.subr.mxu0 0.0
    %286 = vmatpush1.msra.mxu0 0.0
    %287 = vmatprep.subr.mxu0 0.0
    %288 = vmatpush1.msra.mxu0 0.0
    %289 = vmatprep.mubr.f32.mxu0 0.0
    %290 = vmatmul.mubr.f32.gmra.mrb[0].mxu0 %v223
    %v291 = vpop.f32.mrb[0].mxu0
    %v292 = vadd.f32 0.0, %v291
    %v293 = vpop.f32.mrb[0].mxu0
    %294 = vdwg.mxu0
    %v295 = vadd.f32 %v220, %v292
    %v296 = vmul.f32 %v295, 0.5
    %v297 = vtanh.pop %v296
    %v298 = vmul.f32 %v297, 0.5
    %v299 = vadd.f32 %v298, 0.5
    %v300 = vtanh.pop %v295
    %302 = vrot.lane.b32.xlu0 %v219, 32
    %v303 = vpop.permute.xlu0 %302
    %v305 = vmul.f32 %v299, %v303
    %307 = vrot.lane.b32.xlu0 %v300, 32
    %v308 = vpop.permute.xlu0 %307
    %v310 = vmul.f32 %v299, %v308
    %312 = vrot.lane.b32.xlu0 %v310, 32
    %v313 = vpop.permute.xlu0 %312
    %v315 = vadd.f32 %v305, %v313
    %v316 = vtanh.pop %v315
    %318 = vrot.lane.b32.xlu0 %v316, 32
    %v319 = vpop.permute.xlu0 %318
    %v321 = vmul.f32 %v299, %v319
    %323 = vrot.lane.b32.xlu0 %v321, 64
    %v324 = vpop.permute.xlu0 %323
    %vm326 = vcmask 123904
    %327 = vst.msk [vmem:[#allocation3] sm:$0x3] %vm326, %v324
    %s328 = scalar_lea.vmem [#allocation3], 14
    %vm329 = vcmask 255104
    %330 = vst.msk [vmem:[%s328] sm:$0x3] %vm329, %v324
    %s331 = scalar_lea.vmem [#allocation2], 2
    %v332 = vld [vmem:[%s331] sm:$0x3]
    %v333 = vsel %vm221, %v324, 0
    %335 = vmatprep.subr.mxu0 0.0
    %336 = vmatpush1.msra.mxu0 %v104
    %337 = vmatprep.subr.mxu0 0.0
    %338 = vmatpush1.msra.mxu0 %v105
    %339 = vmatprep.subr.mxu0 0.0
    %340 = vmatpush1.msra.mxu0 %v106
    %341 = vmatprep.subr.mxu0 0.0
    %342 = vmatpush1.msra.mxu0 %v107
    %343 = vmatprep.subr.mxu0 0.0
    %344 = vmatpush1.msra.mxu0 0.0
    %345 = vmatprep.subr.mxu0 0.0
    %346 = vmatpush1.msra.mxu0 0.0
    %347 = vmatprep.subr.mxu0 0.0
    %348 = vmatpush1.msra.mxu0 0.0
    %349 = vmatprep.subr.mxu0 0.0
    %350 = vmatpush1.msra.mxu0 0.0
    %351 = vmatprep.subr.mxu0 0.0
    %352 = vmatpush1.msra.mxu0 0.0
    %353 = vmatprep.subr.mxu0 0.0
    %354 = vmatpush1.msra.mxu0 0.0
    %355 = vmatprep.subr.mxu0 0.0
    %356 = vmatpush1.msra.mxu0 0.0
    %357 = vmatprep.subr.mxu0 0.0
    %358 = vmatpush1.msra.mxu0 0.0
    %359 = vmatprep.subr.mxu0 0.0
    %360 = vmatpush1.msra.mxu0 0.0
    %361 = vmatprep.subr.mxu0 0.0
    %362 = vmatpush1.msra.mxu0 0.0
    %363 = vmatprep.subr.mxu0 0.0
    %364 = vmatpush1.msra.mxu0 0.0
    %365 = vmatprep.subr.mxu0 0.0
    %366 = vmatpush1.msra.mxu0 0.0
    %367 = vmatprep.subr.mxu0 0.0
    %368 = vmatpush1.msra.mxu0 0.0
    %369 = vmatprep.subr.mxu0 0.0
    %370 = vmatpush1.msra.mxu0 0.0
    %371 = vmatprep.subr.mxu0 0.0
    %372 = vmatpush1.msra.mxu0 0.0
    %373 = vmatprep.subr.mxu0 0.0
    %374 = vmatpush1.msra.mxu0 0.0
    %375 = vmatprep.subr.mxu0 0.0
    %376 = vmatpush1.msra.mxu0 0.0
    %377 = vmatprep.subr.mxu0 0.0
    %378 = vmatpush1.msra.mxu0 0.0
    %379 = vmatprep.subr.mxu0 0.0
    %380 = vmatpush1.msra.mxu0 0.0
    %381 = vmatprep.subr.mxu0 0.0
    %382 = vmatpush1.msra.mxu0 0.0
    %383 = vmatprep.subr.mxu0 0.0
    %384 = vmatpush1.msra.mxu0 0.0
    %385 = vmatprep.subr.mxu0 0.0
    %386 = vmatpush1.msra.mxu0 0.0
    %387 = vmatprep.subr.mxu0 0.0
    %388 = vmatpush1.msra.mxu0 0.0
    %389 = vmatprep.subr.mxu0 0.0
    %390 = vmatpush1.msra.mxu0 0.0
    %391 = vmatprep.subr.mxu0 0.0
    %392 = vmatpush1.msra.mxu0 0.0
    %393 = vmatprep.subr.mxu0 0.0
    %394 = vmatpush1.msra.mxu0 0.0
    %395 = vmatprep.subr.mxu0 0.0
    %396 = vmatpush1.msra.mxu0 0.0
    %397 = vmatprep.subr.mxu0 0.0
    %398 = vmatpush1.msra.mxu0 0.0
    %399 = vmatprep.mubr.f32.mxu0 0.0
    %400 = vmatmul.mubr.f32.gmra.mrb[0].mxu0 %v333
    %v401 = vpop.f32.mrb[0].mxu0
    %v402 = vadd.f32 0.0, %v401
    %v403 = vpop.f32.mrb[0].mxu0
    %404 = vdwg.mxu0
    %v405 = vadd.f32 %v332, %v402
    %v406 = vmul.f32 %v405, 0.5
    %v407 = vtanh.pop %v406
    %v408 = vmul.f32 %v407, 0.5
    %v409 = vadd.f32 %v408, 0.5
    %v410 = vtanh.pop %v405
    %v411 = vmul.f32 %v409, %v315
    %413 = vrot.lane.b32.xlu0 %v410, 32
    %v414 = vpop.permute.xlu0 %413
    %v416 = vmul.f32 %v409, %v414
    %418 = vrot.lane.b32.xlu0 %v416, 32
    %v419 = vpop.permute.xlu0 %418
    %v421 = vadd.f32 %v411, %v419
    %v422 = vtanh.pop %v421
    %424 = vrot.lane.b32.xlu0 %v422, 32
    %v425 = vpop.permute.xlu0 %424
    %v427 = vmul.f32 %v409, %v425
    %429 = vrot.lane.b32.xlu0 %v427, 64
    %v430 = vpop.permute.xlu0 %429
    %s432 = scalar_lea.vmem [#allocation3], 2
    %433 = vst.msk [vmem:[%s432] sm:$0x3] %vm326, %v430
    %s434 = scalar_lea.vmem [#allocation3], 12
    %435 = vst.msk [vmem:[%s434] sm:$0x3] %vm329, %v430
    %s436 = scalar_lea.vmem [#allocation2], 4
    %v437 = vld [vmem:[%s436] sm:$0x3]
    %v438 = vsel %vm221, %v430, 0
    %440 = vmatprep.subr.mxu0 0.0
    %441 = vmatpush1.msra.mxu0 %v104
    %442 = vmatprep.subr.mxu0 0.0
    %443 = vmatpush1.msra.mxu0 %v105
    %444 = vmatprep.subr.mxu0 0.0
    %445 = vmatpush1.msra.mxu0 %v106
    %446 = vmatprep.subr.mxu0 0.0
    %447 = vmatpush1.msra.mxu0 %v107
    %448 = vmatprep.subr.mxu0 0.0
    %449 = vmatpush1.msra.mxu0 0.0
    %450 = vmatprep.subr.mxu0 0.0
    %451 = vmatpush1.msra.mxu0 0.0
    %452 = vmatprep.subr.mxu0 0.0
    %453 = vmatpush1.msra.mxu0 0.0
    %454 = vmatprep.subr.mxu0 0.0
    %455 = vmatpush1.msra.mxu0 0.0
    %456 = vmatprep.subr.mxu0 0.0
    %457 = vmatpush1.msra.mxu0 0.0
    %458 = vmatprep.subr.mxu0 0.0
    %459 = vmatpush1.msra.mxu0 0.0
    %460 = vmatprep.subr.mxu0 0.0
    %461 = vmatpush1.msra.mxu0 0.0
    %462 = vmatprep.subr.mxu0 0.0
    %463 = vmatpush1.msra.mxu0 0.0
    %464 = vmatprep.subr.mxu0 0.0
    %465 = vmatpush1.msra.mxu0 0.0
    %466 = vmatprep.subr.mxu0 0.0
    %467 = vmatpush1.msra.mxu0 0.0
    %468 = vmatprep.subr.mxu0 0.0
    %469 = vmatpush1.msra.mxu0 0.0
    %470 = vmatprep.subr.mxu0 0.0
    %471 = vmatpush1.msra.mxu0 0.0
    %472 = vmatprep.subr.mxu0 0.0
    %473 = vmatpush1.msra.mxu0 0.0
    %474 = vmatprep.subr.mxu0 0.0
    %475 = vmatpush1.msra.mxu0 0.0
    %476 = vmatprep.subr.mxu0 0.0
    %477 = vmatpush1.msra.mxu0 0.0
    %478 = vmatprep.subr.mxu0 0.0
    %479 = vmatpush1.msra.mxu0 0.0
    %480 = vmatprep.subr.mxu0 0.0
    %481 = vmatpush1.msra.mxu0 0.0
    %482 = vmatprep.subr.mxu0 0.0
    %483 = vmatpush1.msra.mxu0 0.0
    %484 = vmatprep.subr.mxu0 0.0
    %485 = vmatpush1.msra.mxu0 0.0
    %486 = vmatprep.subr.mxu0 0.0
    %487 = vmatpush1.msra.mxu0 0.0
    %488 = vmatprep.subr.mxu0 0.0
    %489 = vmatpush1.msra.mxu0 0.0
    %490 = vmatprep.subr.mxu0 0.0
    %491 = vmatpush1.msra.mxu0 0.0
    %492 = vmatprep.subr.mxu0 0.0
    %493 = vmatpush1.msra.mxu0 0.0
    %494 = vmatprep.subr.mxu0 0.0
    %495 = vmatpush1.msra.mxu0 0.0
    %496 = vmatprep.subr.mxu0 0.0
    %497 = vmatpush1.msra.mxu0 0.0
    %498 = vmatprep.subr.mxu0 0.0
    %499 = vmatpush1.msra.mxu0 0.0
    %500 = vmatprep.subr.mxu0 0.0
    %501 = vmatpush1.msra.mxu0 0.0
    %502 = vmatprep.subr.mxu0 0.0
    %503 = vmatpush1.msra.mxu0 0.0
    %504 = vmatprep.mubr.f32.mxu0 0.0
    %505 = vmatmul.mubr.f32.gmra.mrb[0].mxu0 %v438
    %v506 = vpop.f32.mrb[0].mxu0
    %v507 = vadd.f32 0.0, %v506
    %v508 = vpop.f32.mrb[0].mxu0
    %509 = vdwg.mxu0
    %v510 = vadd.f32 %v437, %v507
    %v511 = vmul.f32 %v510, 0.5
    %v512 = vtanh.pop %v511
    %v513 = vmul.f32 %v512, 0.5
    %v514 = vadd.f32 %v513, 0.5
    %v515 = vtanh.pop %v510
    %v516 = vmul.f32 %v514, %v421
    %518 = vrot.lane.b32.xlu0 %v515, 32
    %v519 = vpop.permute.xlu0 %518
    %v521 = vmul.f32 %v514, %v519
    %523 = vrot.lane.b32.xlu0 %v521, 32
    %v524 = vpop.permute.xlu0 %523
    %v526 = vadd.f32 %v516, %v524
    %v527 = vtanh.pop %v526
    %529 = vrot.lane.b32.xlu0 %v527, 32
    %v530 = vpop.permute.xlu0 %529
    %v532 = vmul.f32 %v514, %v530
    %534 = vrot.lane.b32.xlu0 %v532, 64
    %v535 = vpop.permute.xlu0 %534
    %s537 = scalar_lea.vmem [#allocation3], 4
    %538 = vst.msk [vmem:[%s537] sm:$0x3] %vm326, %v535
    %s539 = scalar_lea.vmem [#allocation3], 10
    %540 = vst.msk [vmem:[%s539] sm:$0x3] %vm329, %v535
    %s541 = scalar_lea.vmem [#allocation2], 6
    %v542 = vld [vmem:[%s541] sm:$0x3]
    %v543 = vsel %vm221, %v535, 0
    %545 = vmatprep.subr.mxu0 0.0
    %546 = vmatpush1.msra.mxu0 %v104
    %547 = vmatprep.subr.mxu0 0.0
    %548 = vmatpush1.msra.mxu0 %v105
    %549 = vmatprep.subr.mxu0 0.0
    %550 = vmatpush1.msra.mxu0 %v106
    %551 = vmatprep.subr.mxu0 0.0
    %552 = vmatpush1.msra.mxu0 %v107
    %553 = vmatprep.subr.mxu0 0.0
    %554 = vmatpush1.msra.mxu0 0.0
    %555 = vmatprep.subr.mxu0 0.0
    %556 = vmatpush1.msra.mxu0 0.0
    %557 = vmatprep.subr.mxu0 0.0
    %558 = vmatpush1.msra.mxu0 0.0
    %559 = vmatprep.subr.mxu0 0.0
    %560 = vmatpush1.msra.mxu0 0.0
    %561 = vmatprep.subr.mxu0 0.0
    %562 = vmatpush1.msra.mxu0 0.0
    %563 = vmatprep.subr.mxu0 0.0
    %564 = vmatpush1.msra.mxu0 0.0
    %565 = vmatprep.subr.mxu0 0.0
    %566 = vmatpush1.msra.mxu0 0.0
    %567 = vmatprep.subr.mxu0 0.0
    %568 = vmatpush1.msra.mxu0 0.0
    %569 = vmatprep.subr.mxu0 0.0
    %570 = vmatpush1.msra.mxu0 0.0
    %571 = vmatprep.subr.mxu0 0.0
    %572 = vmatpush1.msra.mxu0 0.0
    %573 = vmatprep.subr.mxu0 0.0
    %574 = vmatpush1.msra.mxu0 0.0
    %575 = vmatprep.subr.mxu0 0.0
    %576 = vmatpush1.msra.mxu0 0.0
    %577 = vmatprep.subr.mxu0 0.0
    %578 = vmatpush1.msra.mxu0 0.0
    %579 = vmatprep.subr.mxu0 0.0
    %580 = vmatpush1.msra.mxu0 0.0
    %581 = vmatprep.subr.mxu0 0.0
    %582 = vmatpush1.msra.mxu0 0.0
    %583 = vmatprep.subr.mxu0 0.0
    %584 = vmatpush1.msra.mxu0 0.0
    %585 = vmatprep.subr.mxu0 0.0
    %586 = vmatpush1.msra.mxu0 0.0
    %587 = vmatprep.subr.mxu0 0.0
    %588 = vmatpush1.msra.mxu0 0.0
    %589 = vmatprep.subr.mxu0 0.0
    %590 = vmatpush1.msra.mxu0 0.0
    %591 = vmatprep.subr.mxu0 0.0
    %592 = vmatpush1.msra.mxu0 0.0
    %593 = vmatprep.subr.mxu0 0.0
    %594 = vmatpush1.msra.mxu0 0.0
    %595 = vmatprep.subr.mxu0 0.0
    %596 = vmatpush1.msra.mxu0 0.0
    %597 = vmatprep.subr.mxu0 0.0
    %598 = vmatpush1.msra.mxu0 0.0
    %599 = vmatprep.subr.mxu0 0.0
    %600 = vmatpush1.msra.mxu0 0.0
    %601 = vmatprep.subr.mxu0 0.0
    %602 = vmatpush1.msra.mxu0 0.0
    %603 = vmatprep.subr.mxu0 0.0
    %604 = vmatpush1.msra.mxu0 0.0
    %605 = vmatprep.subr.mxu0 0.0
    %606 = vmatpush1.msra.mxu0 0.0
    %607 = vmatprep.subr.mxu0 0.0
    %608 = vmatpush1.msra.mxu0 0.0
    %609 = vmatprep.mubr.f32.mxu0 0.0
    %610 = vmatmul.mubr.f32.gmra.mrb[0].mxu0 %v543
    %v611 = vpop.f32.mrb[0].mxu0
    %v612 = vadd.f32 0.0, %v611
    %v613 = vpop.f32.mrb[0].mxu0
    %614 = vdwg.mxu0
    %v615 = vadd.f32 %v542, %v612
    %v616 = vmul.f32 %v615, 0.5
    %v617 = vtanh.pop %v616
    %v618 = vmul.f32 %v617, 0.5
    %v619 = vadd.f32 %v618, 0.5
    %v620 = vtanh.pop %v615
    %v621 = vmul.f32 %v619, %v526
    %623 = vrot.lane.b32.xlu0 %v620, 32
    %v624 = vpop.permute.xlu0 %623
    %v626 = vmul.f32 %v619, %v624
    %628 = vrot.lane.b32.xlu0 %v626, 32
    %v629 = vpop.permute.xlu0 %628
    %v631 = vadd.f32 %v621, %v629
    %v632 = vtanh.pop %v631
    %634 = vrot.lane.b32.xlu0 %v632, 32
    %v635 = vpop.permute.xlu0 %634
    %v637 = vmul.f32 %v619, %v635
    %639 = vrot.lane.b32.xlu0 %v637, 64
    %v640 = vpop.permute.xlu0 %639
    %s642 = scalar_lea.vmem [#allocation3], 6
    %643 = vst.msk [vmem:[%s642] sm:$0x3] %vm326, %v640
    %s644 = scalar_lea.vmem [#allocation3], 8
    %645 = vst.msk [vmem:[%s644] sm:$0x3] %vm329, %v640
    %s646 = scalar_lea.vmem [#allocation2], 8
    %v647 = vld [vmem:[%s646] sm:$0x3]
    %v648 = vsel %vm221, %v640, 0
    %650 = vmatprep.subr.mxu0 0.0
    %651 = vmatpush1.msra.mxu0 %v104
    %652 = vmatprep.subr.mxu0 0.0
    %653 = vmatpush1.msra.mxu0 %v105
    %654 = vmatprep.subr.mxu0 0.0
    %655 = vmatpush1.msra.mxu0 %v106
    %656 = vmatprep.subr.mxu0 0.0
    %657 = vmatpush1.msra.mxu0 %v107
    %658 = vmatprep.subr.mxu0 0.0
    %659 = vmatpush1.msra.mxu0 0.0
    %660 = vmatprep.subr.mxu0 0.0
    %661 = vmatpush1.msra.mxu0 0.0
    %662 = vmatprep.subr.mxu0 0.0
    %663 = vmatpush1.msra.mxu0 0.0
    %664 = vmatprep.subr.mxu0 0.0
    %665 = vmatpush1.msra.mxu0 0.0
    %666 = vmatprep.subr.mxu0 0.0
    %667 = vmatpush1.msra.mxu0 0.0
    %668 = vmatprep.subr.mxu0 0.0
    %669 = vmatpush1.msra.mxu0 0.0
    %670 = vmatprep.subr.mxu0 0.0
    %671 = vmatpush1.msra.mxu0 0.0
    %672 = vmatprep.subr.mxu0 0.0
    %673 = vmatpush1.msra.mxu0 0.0
    %674 = vmatprep.subr.mxu0 0.0
    %675 = vmatpush1.msra.mxu0 0.0
    %676 = vmatprep.subr.mxu0 0.0
    %677 = vmatpush1.msra.mxu0 0.0
    %678 = vmatprep.subr.mxu0 0.0
    %679 = vmatpush1.msra.mxu0 0.0
    %680 = vmatprep.subr.mxu0 0.0
    %681 = vmatpush1.msra.mxu0 0.0
    %682 = vmatprep.subr.mxu0 0.0
    %683 = vmatpush1.msra.mxu0 0.0
    %684 = vmatprep.subr.mxu0 0.0
    %685 = vmatpush1.msra.mxu0 0.0
    %686 = vmatprep.subr.mxu0 0.0
    %687 = vmatpush1.msra.mxu0 0.0
    %688 = vmatprep.subr.mxu0 0.0
    %689 = vmatpush1.msra.mxu0 0.0
    %690 = vmatprep.subr.mxu0 0.0
    %691 = vmatpush1.msra.mxu0 0.0
    %692 = vmatprep.subr.mxu0 0.0
    %693 = vmatpush1.msra.mxu0 0.0
    %694 = vmatprep.subr.mxu0 0.0
    %695 = vmatpush1.msra.mxu0 0.0
    %696 = vmatprep.subr.mxu0 0.0
    %697 = vmatpush1.msra.mxu0 0.0
    %698 = vmatprep.subr.mxu0 0.0
    %699 = vmatpush1.msra.mxu0 0.0
    %700 = vmatprep.subr.mxu0 0.0
    %701 = vmatpush1.msra.mxu0 0.0
    %702 = vmatprep.subr.mxu0 0.0
    %703 = vmatpush1.msra.mxu0 0.0
    %704 = vmatprep.subr.mxu0 0.0
    %705 = vmatpush1.msra.mxu0 0.0
    %706 = vmatprep.subr.mxu0 0.0
    %707 = vmatpush1.msra.mxu0 0.0
    %708 = vmatprep.subr.mxu0 0.0
    %709 = vmatpush1.msra.mxu0 0.0
    %710 = vmatprep.subr.mxu0 0.0
    %711 = vmatpush1.msra.mxu0 0.0
    %712 = vmatprep.subr.mxu0 0.0
    %713 = vmatpush1.msra.mxu0 0.0
    %714 = vmatprep.mubr.f32.mxu0 0.0
    %715 = vmatmul.mubr.f32.gmra.mrb[0].mxu0 %v648
    %v716 = vpop.f32.mrb[0].mxu0
    %v717 = vadd.f32 0.0, %v716
    %v718 = vpop.f32.mrb[0].mxu0
    %719 = vdwg.mxu0
    %v720 = vadd.f32 %v647, %v717
    %v721 = vmul.f32 %v720, 0.5
    %v722 = vtanh.pop %v721
    %v723 = vmul.f32 %v722, 0.5
    %v724 = vadd.f32 %v723, 0.5
    %v725 = vtanh.pop %v720
    %v726 = vmul.f32 %v724, %v631
    %728 = vrot.lane.b32.xlu0 %v725, 32
    %v729 = vpop.permute.xlu0 %728
    %v731 = vmul.f32 %v724, %v729
    %733 = vrot.lane.b32.xlu0 %v731, 32
    %v734 = vpop.permute.xlu0 %733
    %v736 = vadd.f32 %v726, %v734
    %v737 = vtanh.pop %v736
    %739 = vrot.lane.b32.xlu0 %v737, 32
    %v740 = vpop.permute.xlu0 %739
    %v742 = vmul.f32 %v724, %v740
    %744 = vrot.lane.b32.xlu0 %v742, 64
    %v745 = vpop.permute.xlu0 %744
    %747 = vst.msk [vmem:[%s644] sm:$0x3] %vm326, %v745
    %748 = vst.msk [vmem:[%s642] sm:$0x3] %vm329, %v745
    %s749 = scalar_lea.vmem [#allocation2], 10
    %v750 = vld [vmem:[%s749] sm:$0x3]
    %v751 = vsel %vm221, %v745, 0
    %753 = vmatprep.subr.mxu0 0.0
    %754 = vmatpush1.msra.mxu0 %v104
    %755 = vmatprep.subr.mxu0 0.0
    %756 = vmatpush1.msra.mxu0 %v105
    %757 = vmatprep.subr.mxu0 0.0
    %758 = vmatpush1.msra.mxu0 %v106
    %759 = vmatprep.subr.mxu0 0.0
    %760 = vmatpush1.msra.mxu0 %v107
    %761 = vmatprep.subr.mxu0 0.0
    %762 = vmatpush1.msra.mxu0 0.0
    %763 = vmatprep.subr.mxu0 0.0
    %764 = vmatpush1.msra.mxu0 0.0
    %765 = vmatprep.subr.mxu0 0.0
    %766 = vmatpush1.msra.mxu0 0.0
    %767 = vmatprep.subr.mxu0 0.0
    %768 = vmatpush1.msra.mxu0 0.0
    %769 = vmatprep.subr.mxu0 0.0
    %770 = vmatpush1.msra.mxu0 0.0
    %771 = vmatprep.subr.mxu0 0.0
    %772 = vmatpush1.msra.mxu0 0.0
    %773 = vmatprep.subr.mxu0 0.0
    %774 = vmatpush1.msra.mxu0 0.0
    %775 = vmatprep.subr.mxu0 0.0
    %776 = vmatpush1.msra.mxu0 0.0
    %777 = vmatprep.subr.mxu0 0.0
    %778 = vmatpush1.msra.mxu0 0.0
    %779 = vmatprep.subr.mxu0 0.0
    %780 = vmatpush1.msra.mxu0 0.0
    %781 = vmatprep.subr.mxu0 0.0
    %782 = vmatpush1.msra.mxu0 0.0
    %783 = vmatprep.subr.mxu0 0.0
    %784 = vmatpush1.msra.mxu0 0.0
    %785 = vmatprep.subr.mxu0 0.0
    %786 = vmatpush1.msra.mxu0 0.0
    %787 = vmatprep.subr.mxu0 0.0
    %788 = vmatpush1.msra.mxu0 0.0
    %789 = vmatprep.subr.mxu0 0.0
    %790 = vmatpush1.msra.mxu0 0.0
    %791 = vmatprep.subr.mxu0 0.0
    %792 = vmatpush1.msra.mxu0 0.0
    %793 = vmatprep.subr.mxu0 0.0
    %794 = vmatpush1.msra.mxu0 0.0
    %795 = vmatprep.subr.mxu0 0.0
    %796 = vmatpush1.msra.mxu0 0.0
    %797 = vmatprep.subr.mxu0 0.0
    %798 = vmatpush1.msra.mxu0 0.0
    %799 = vmatprep.subr.mxu0 0.0
    %800 = vmatpush1.msra.mxu0 0.0
    %801 = vmatprep.subr.mxu0 0.0
    %802 = vmatpush1.msra.mxu0 0.0
    %803 = vmatprep.subr.mxu0 0.0
    %804 = vmatpush1.msra.mxu0 0.0
    %805 = vmatprep.subr.mxu0 0.0
    %806 = vmatpush1.msra.mxu0 0.0
    %807 = vmatprep.subr.mxu0 0.0
    %808 = vmatpush1.msra.mxu0 0.0
    %809 = vmatprep.subr.mxu0 0.0
    %810 = vmatpush1.msra.mxu0 0.0
    %811 = vmatprep.subr.mxu0 0.0
    %812 = vmatpush1.msra.mxu0 0.0
    %813 = vmatprep.subr.mxu0 0.0
    %814 = vmatpush1.msra.mxu0 0.0
    %815 = vmatprep.subr.mxu0 0.0
    %816 = vmatpush1.msra.mxu0 0.0
    %817 = vmatprep.mubr.f32.mxu0 0.0
    %818 = vmatmul.mubr.f32.gmra.mrb[0].mxu0 %v751
    %v819 = vpop.f32.mrb[0].mxu0
    %v820 = vadd.f32 0.0, %v819
    %v821 = vpop.f32.mrb[0].mxu0
    %822 = vdwg.mxu0
    %v823 = vadd.f32 %v750, %v820
    %v824 = vmul.f32 %v823, 0.5
    %v825 = vtanh.pop %v824
    %v826 = vmul.f32 %v825, 0.5
    %v827 = vadd.f32 %v826, 0.5
    %v828 = vtanh.pop %v823
    %v829 = vmul.f32 %v827, %v736
    %831 = vrot.lane.b32.xlu0 %v828, 32
    %v832 = vpop.permute.xlu0 %831
    %v834 = vmul.f32 %v827, %v832
    %836 = vrot.lane.b32.xlu0 %v834, 32
    %v837 = vpop.permute.xlu0 %836
    %v839 = vadd.f32 %v829, %v837
    %v840 = vtanh.pop %v839
    %842 = vrot.lane.b32.xlu0 %v840, 32
    %v843 = vpop.permute.xlu0 %842
    %v845 = vmul.f32 %v827, %v843
    %847 = vrot.lane.b32.xlu0 %v845, 64
    %v848 = vpop.permute.xlu0 %847
    %850 = vst.msk [vmem:[%s539] sm:$0x3] %vm326, %v848
    %851 = vst.msk [vmem:[%s537] sm:$0x3] %vm329, %v848
    %s852 = scalar_lea.vmem [#allocation2], 12
    %v853 = vld [vmem:[%s852] sm:$0x3]
    %v854 = vsel %vm221, %v848, 0
    %856 = vmatprep.subr.mxu0 0.0
    %857 = vmatpush1.msra.mxu0 %v104
    %858 = vmatprep.subr.mxu0 0.0
    %859 = vmatpush1.msra.mxu0 %v105
    %860 = vmatprep.subr.mxu0 0.0
    %861 = vmatpush1.msra.mxu0 %v106
    %862 = vmatprep.subr.mxu0 0.0
    %863 = vmatpush1.msra.mxu0 %v107
    %864 = vmatprep.subr.mxu0 0.0
    %865 = vmatpush1.msra.mxu0 0.0
    %866 = vmatprep.subr.mxu0 0.0
    %867 = vmatpush1.msra.mxu0 0.0
    %868 = vmatprep.subr.mxu0 0.0
    %869 = vmatpush1.msra.mxu0 0.0
    %870 = vmatprep.subr.mxu0 0.0
    %871 = vmatpush1.msra.mxu0 0.0
    %872 = vmatprep.subr.mxu0 0.0
    %873 = vmatpush1.msra.mxu0 0.0
    %874 = vmatprep.subr.mxu0 0.0
    %875 = vmatpush1.msra.mxu0 0.0
    %876 = vmatprep.subr.mxu0 0.0
    %877 = vmatpush1.msra.mxu0 0.0
    %878 = vmatprep.subr.mxu0 0.0
    %879 = vmatpush1.msra.mxu0 0.0
    %880 = vmatprep.subr.mxu0 0.0
    %881 = vmatpush1.msra.mxu0 0.0
    %882 = vmatprep.subr.mxu0 0.0
    %883 = vmatpush1.msra.mxu0 0.0
    %884 = vmatprep.subr.mxu0 0.0
    %885 = vmatpush1.msra.mxu0 0.0
    %886 = vmatprep.subr.mxu0 0.0
    %887 = vmatpush1.msra.mxu0 0.0
    %888 = vmatprep.subr.mxu0 0.0
    %889 = vmatpush1.msra.mxu0 0.0
    %890 = vmatprep.subr.mxu0 0.0
    %891 = vmatpush1.msra.mxu0 0.0
    %892 = vmatprep.subr.mxu0 0.0
    %893 = vmatpush1.msra.mxu0 0.0
    %894 = vmatprep.subr.mxu0 0.0
    %895 = vmatpush1.msra.mxu0 0.0
    %896 = vmatprep.subr.mxu0 0.0
    %897 = vmatpush1.msra.mxu0 0.0
    %898 = vmatprep.subr.mxu0 0.0
    %899 = vmatpush1.msra.mxu0 0.0
    %900 = vmatprep.subr.mxu0 0.0
    %901 = vmatpush1.msra.mxu0 0.0
    %902 = vmatprep.subr.mxu0 0.0
    %903 = vmatpush1.msra.mxu0 0.0
    %904 = vmatprep.subr.mxu0 0.0
    %905 = vmatpush1.msra.mxu0 0.0
    %906 = vmatprep.subr.mxu0 0.0
    %907 = vmatpush1.msra.mxu0 0.0
    %908 = vmatprep.subr.mxu0 0.0
    %909 = vmatpush1.msra.mxu0 0.0
    %910 = vmatprep.subr.mxu0 0.0
    %911 = vmatpush1.msra.mxu0 0.0
    %912 = vmatprep.subr.mxu0 0.0
    %913 = vmatpush1.msra.mxu0 0.0
    %914 = vmatprep.subr.mxu0 0.0
    %915 = vmatpush1.msra.mxu0 0.0
    %916 = vmatprep.subr.mxu0 0.0
    %917 = vmatpush1.msra.mxu0 0.0
    %918 = vmatprep.subr.mxu0 0.0
    %919 = vmatpush1.msra.mxu0 0.0
    %920 = vmatprep.mubr.f32.mxu0 0.0
    %921 = vmatmul.mubr.f32.gmra.mrb[0].mxu0 %v854
    %v922 = vpop.f32.mrb[0].mxu0
    %v923 = vadd.f32 0.0, %v922
    %v924 = vpop.f32.mrb[0].mxu0
    %925 = vdwg.mxu0
    %v926 = vadd.f32 %v853, %v923
    %v927 = vmul.f32 %v926, 0.5
    %v928 = vtanh.pop %v927
    %v929 = vmul.f32 %v928, 0.5
    %v930 = vadd.f32 %v929, 0.5
    %v931 = vtanh.pop %v926
    %v932 = vmul.f32 %v930, %v839
    %934 = vrot.lane.b32.xlu0 %v931, 32
    %v935 = vpop.permute.xlu0 %934
    %v937 = vmul.f32 %v930, %v935
    %939 = vrot.lane.b32.xlu0 %v937, 32
    %v940 = vpop.permute.xlu0 %939
    %v942 = vadd.f32 %v932, %v940
    %v943 = vtanh.pop %v942
    %945 = vrot.lane.b32.xlu0 %v943, 32
    %v946 = vpop.permute.xlu0 %945
    %v948 = vmul.f32 %v930, %v946
    %950 = vrot.lane.b32.xlu0 %v948, 64
    %v951 = vpop.permute.xlu0 %950
    %953 = vst.msk [vmem:[%s434] sm:$0x3] %vm326, %v951
    %954 = vst.msk [vmem:[%s432] sm:$0x3] %vm329, %v951
    %s955 = scalar_lea.vmem [#allocation2], 14
    %v956 = vld [vmem:[%s955] sm:$0x3]
    %v957 = vsel %vm221, %v951, 0
    %959 = vmatprep.subr.mxu0 0.0
    %960 = vmatpush1.msra.mxu0 %v104
    %961 = vmatprep.subr.mxu0 0.0
    %962 = vmatpush1.msra.mxu0 %v105
    %963 = vmatprep.subr.mxu0 0.0
    %964 = vmatpush1.msra.mxu0 %v106
    %965 = vmatprep.subr.mxu0 0.0
    %966 = vmatpush1.msra.mxu0 %v107
    %967 = vmatprep.subr.mxu0 0.0
    %968 = vmatpush1.msra.mxu0 0.0
    %969 = vmatprep.subr.mxu0 0.0
    %970 = vmatpush1.msra.mxu0 0.0
    %971 = vmatprep.subr.mxu0 0.0
    %972 = vmatpush1.msra.mxu0 0.0
    %973 = vmatprep.subr.mxu0 0.0
    %974 = vmatpush1.msra.mxu0 0.0
    %975 = vmatprep.subr.mxu0 0.0
    %976 = vmatpush1.msra.mxu0 0.0
    %977 = vmatprep.subr.mxu0 0.0
    %978 = vmatpush1.msra.mxu0 0.0
    %979 = vmatprep.subr.mxu0 0.0
    %980 = vmatpush1.msra.mxu0 0.0
    %981 = vmatprep.subr.mxu0 0.0
    %982 = vmatpush1.msra.mxu0 0.0
    %983 = vmatprep.subr.mxu0 0.0
    %984 = vmatpush1.msra.mxu0 0.0
    %985 = vmatprep.subr.mxu0 0.0
    %986 = vmatpush1.msra.mxu0 0.0
    %987 = vmatprep.subr.mxu0 0.0
    %988 = vmatpush1.msra.mxu0 0.0
    %989 = vmatprep.subr.mxu0 0.0
    %990 = vmatpush1.msra.mxu0 0.0
    %991 = vmatprep.subr.mxu0 0.0
    %992 = vmatpush1.msra.mxu0 0.0
    %993 = vmatprep.subr.mxu0 0.0
    %994 = vmatpush1.msra.mxu0 0.0
    %995 = vmatprep.subr.mxu0 0.0
    %996 = vmatpush1.msra.mxu0 0.0
    %997 = vmatprep.subr.mxu0 0.0
    %998 = vmatpush1.msra.mxu0 0.0
    %999 = vmatprep.subr.mxu0 0.0
    %1000 = vmatpush1.msra.mxu0 0.0
    %1001 = vmatprep.subr.mxu0 0.0
    %1002 = vmatpush1.msra.mxu0 0.0
    %1003 = vmatprep.subr.mxu0 0.0
    %1004 = vmatpush1.msra.mxu0 0.0
    %1005 = vmatprep.subr.mxu0 0.0
    %1006 = vmatpush1.msra.mxu0 0.0
    %1007 = vmatprep.subr.mxu0 0.0
    %1008 = vmatpush1.msra.mxu0 0.0
    %1009 = vmatprep.subr.mxu0 0.0
    %1010 = vmatpush1.msra.mxu0 0.0
    %1011 = vmatprep.subr.mxu0 0.0
    %1012 = vmatpush1.msra.mxu0 0.0
    %1013 = vmatprep.subr.mxu0 0.0
    %1014 = vmatpush1.msra.mxu0 0.0
    %1015 = vmatprep.subr.mxu0 0.0
    %1016 = vmatpush1.msra.mxu0 0.0
    %1017 = vmatprep.subr.mxu0 0.0
    %1018 = vmatpush1.msra.mxu0 0.0
    %1019 = vmatprep.subr.mxu0 0.0
    %1020 = vmatpush1.msra.mxu0 0.0
    %1021 = vmatprep.subr.mxu0 0.0
    %1022 = vmatpush1.msra.mxu0 0.0
    %1023 = vmatprep.mubr.f32.mxu0 0.0
    %1024 = vmatmul.mubr.f32.gmra.mrb[0].mxu0 %v957
    %v1025 = vpop.f32.mrb[0].mxu0
    %v1026 = vadd.f32 0.0, %v1025
    %v1027 = vpop.f32.mrb[0].mxu0
    %1028 = vdwg.mxu0
    %v1029 = vadd.f32 %v956, %v1026
    %v1030 = vmul.f32 %v1029, 0.5
    %v1031 = vtanh.pop %v1030
    %v1032 = vmul.f32 %v1031, 0.5
    %v1033 = vadd.f32 %v1032, 0.5
    %v1034 = vtanh.pop %v1029
    %v1035 = vmul.f32 %v1033, %v942
    %1037 = vrot.lane.b32.xlu0 %v1034, 32
    %v1038 = vpop.permute.xlu0 %1037
    %v1040 = vmul.f32 %v1033, %v1038
    %1042 = vrot.lane.b32.xlu0 %v1040, 32
    %v1043 = vpop.permute.xlu0 %1042
    %v1045 = vadd.f32 %v1035, %v1043
    %v1046 = vtanh.pop %v1045
    %1048 = vrot.lane.b32.xlu0 %v1046, 32
    %v1049 = vpop.permute.xlu0 %1048
    %v1051 = vmul.f32 %v1033, %v1049
    %1053 = vrot.lane.b32.xlu0 %v1051, 64
    %v1054 = vpop.permute.xlu0 %1053
    %1056 = vst.msk [vmem:[%s328] sm:$0x3] %vm326, %v1054
    %1057 = vst.msk [vmem:[#allocation3] sm:$0x3] %vm329, %v1054
    %v1058 = vld [vmem:[#allocation3] sm:$0x3]
    %v1059 = vld [vmem:[#allocation3 + $0x2] sm:$0x3]
    %v1060 = vld [vmem:[#allocation3 + $0x4] sm:$0x3]
    %v1061 = vld [vmem:[#allocation3 + $0x6] sm:$0x3]
    %v1062 = vld [vmem:[#allocation3 + $0x8] sm:$0x3]
    %v1063 = vld [vmem:[#allocation3 + $0xa] sm:$0x3]
    %v1064 = vld [vmem:[#allocation3 + $0xc] sm:$0x3]
    %v1065 = vld [vmem:[#allocation3 + $0xe] sm:$0x3]
    %v1066 = vld [vmem:[#allocation9] sm:$0xff]
    %v1067 = vld [vmem:[#allocation9 + $0x8] sm:$0xff]
    %v1068 = vld [vmem:[#allocation9 + $0x10] sm:$0xff]
    %v1069 = vld [vmem:[#allocation9 + $0x18] sm:$0xff]
    %v1070 = vld [vmem:[#allocation9 + $0x20] sm:$0xff]
    %v1071 = vld [vmem:[#allocation9 + $0x28] sm:$0xff]
    %v1072 = vld [vmem:[#allocation9 + $0x30] sm:$0xff]
    %v1073 = vld [vmem:[#allocation9 + $0x38] sm:$0xff]
    %v1074 = vld [vmem:[#allocation10] sm:$0xff]
    %v1075 = vld [vmem:[#allocation10 + $0x8] sm:$0xff]
    %v1076 = vld [vmem:[#allocation10 + $0x10] sm:$0xff]
    %v1077 = vld [vmem:[#allocation10 + $0x18] sm:$0xff]
    %v1078 = vld [vmem:[%s8] sm:$0x1]
    %1087 = vrot.lane.b32.xlu0 %v1065, 32
    %v1088 = vpop.permute.xlu0 %1087
    %1089 = vrot.lane.b32.xlu0 %v1064, 32
    %v1090 = vpop.permute.xlu0 %1089
    %1091 = vrot.lane.b32.xlu0 %v1063, 32
    %v1092 = vpop.permute.xlu0 %1091
    %1093 = vrot.lane.b32.xlu0 %v1062, 32
    %v1094 = vpop.permute.xlu0 %1093
    %1095 = vrot.lane.b32.xlu0 %v1061, 32
    %v1096 = vpop.permute.xlu0 %1095
    %1097 = vrot.lane.b32.xlu0 %v1060, 32
    %v1098 = vpop.permute.xlu0 %1097
    %1099 = vrot.lane.b32.xlu0 %v1059, 32
    %v1100 = vpop.permute.xlu0 %1099
    %1101 = vrot.lane.b32.xlu0 %v1058, 32
    %v1102 = vpop.permute.xlu0 %1101
    %v1111 = vsel %vm221, %v1058, %v1088
    %v1112 = vsel %vm221, %v1059, %v1090
    %v1113 = vsel %vm221, %v1060, %v1092
    %v1114 = vsel %vm221, %v1061, %v1094
    %v1115 = vsel %vm221, %v1062, %v1096
    %v1116 = vsel %vm221, %v1063, %v1098
    %v1117 = vsel %vm221, %v1064, %v1100
    %v1118 = vsel %vm221, %v1065, %v1102
    %v1127 = vcombine.low %v1111, %v1112
    %v1128 = vcombine.low %v1113, %v1114
    %v1130 = vunpack.c.l.s4 1983009808
    %v1131 = vunpack.c.0.s8 %v1130
    %v1132 = vlaneseq
    %v1133 = vshrl.u32 %v1132, 7
    %v1134 = vsub.s32 %v1131, %v1133
    %v1135 = vrot.slane %v1127, %v1134
    %v1137 = vunpack.c.l.s4 1983009808
    %v1138 = vunpack.c.0.s8 %v1137
    %v1139 = vlaneseq
    %v1140 = vshrl.u32 %v1139, 7
    %v1141 = vsub.s32 %v1138, %v1140
    %v1142 = vrot.slane %v1128, %v1141
    %v1143 = vcombine.low %v1135, %v1142
    %v1144 = vcombine.low %v1115, %v1116
    %v1145 = vcombine.low %v1117, %v1118
    %v1147 = vunpack.c.l.s4 1983009808
    %v1148 = vunpack.c.0.s8 %v1147
    %v1149 = vlaneseq
    %v1150 = vshrl.u32 %v1149, 7
    %v1151 = vsub.s32 %v1148, %v1150
    %v1152 = vrot.slane %v1144, %v1151
    %v1154 = vunpack.c.l.s4 1983009808
    %v1155 = vunpack.c.0.s8 %v1154
    %v1156 = vlaneseq
    %v1157 = vshrl.u32 %v1156, 7
    %v1158 = vsub.s32 %v1155, %v1157
    %v1159 = vrot.slane %v1145, %v1158
    %v1160 = vcombine.low %v1152, %v1159
    %vm1161 = vcmask 523264
    %v1162 = vsel %vm1161, %v1143, 0
    %v1164 = vsel %vm1161, %v1160, 0
    %1166 = vmatprep.subr.mxu0 0.0
    %1167 = vmatpush1.msra.mxu0 %v1066
    %1168 = vmatprep.subr.mxu0 0.0
    %1169 = vmatpush1.msra.mxu0 %v1067
    %1170 = vmatprep.subr.mxu0 0.0
    %1171 = vmatpush1.msra.mxu0 %v1068
    %1172 = vmatprep.subr.mxu0 0.0
    %1173 = vmatpush1.msra.mxu0 %v1069
    %1174 = vmatprep.subr.mxu0 0.0
    %1175 = vmatpush1.msra.mxu0 %v1070
    %1176 = vmatprep.subr.mxu0 0.0
    %1177 = vmatpush1.msra.mxu0 %v1071
    %1178 = vmatprep.subr.mxu0 0.0
    %1179 = vmatpush1.msra.mxu0 %v1072
    %1180 = vmatprep.subr.mxu0 0.0
    %1181 = vmatpush1.msra.mxu0 %v1073
    %1182 = vmatprep.subr.mxu0 0.0
    %1183 = vmatpush1.msra.mxu0 0.0
    %1184 = vmatprep.subr.mxu0 0.0
    %1185 = vmatpush1.msra.mxu0 0.0
    %1186 = vmatprep.subr.mxu0 0.0
    %1187 = vmatpush1.msra.mxu0 0.0
    %1188 = vmatprep.subr.mxu0 0.0
    %1189 = vmatpush1.msra.mxu0 0.0
    %1190 = vmatprep.subr.mxu0 0.0
    %1191 = vmatpush1.msra.mxu0 0.0
    %1192 = vmatprep.subr.mxu0 0.0
    %1193 = vmatpush1.msra.mxu0 0.0
    %1194 = vmatprep.subr.mxu0 0.0
    %1195 = vmatpush1.msra.mxu0 0.0
    %1196 = vmatprep.subr.mxu0 0.0
    %1197 = vmatpush1.msra.mxu0 0.0
    %1198 = vmatprep.subr.mxu0 0.0
    %1199 = vmatpush1.msra.mxu0 0.0
    %1200 = vmatprep.subr.mxu0 0.0
    %1201 = vmatpush1.msra.mxu0 0.0
    %1202 = vmatprep.subr.mxu0 0.0
    %1203 = vmatpush1.msra.mxu0 0.0
    %1204 = vmatprep.subr.mxu0 0.0
    %1205 = vmatpush1.msra.mxu0 0.0
    %1206 = vmatprep.subr.mxu0 0.0
    %1207 = vmatpush1.msra.mxu0 0.0
    %1208 = vmatprep.subr.mxu0 0.0
    %1209 = vmatpush1.msra.mxu0 0.0
    %1210 = vmatprep.subr.mxu0 0.0
    %1211 = vmatpush1.msra.mxu0 0.0
    %1212 = vmatprep.subr.mxu0 0.0
    %1213 = vmatpush1.msra.mxu0 0.0
    %1214 = vmatprep.subr.mxu0 0.0
    %1215 = vmatpush1.msra.mxu0 0.0
    %1216 = vmatprep.subr.mxu0 0.0
    %1217 = vmatpush1.msra.mxu0 0.0
    %1218 = vmatprep.subr.mxu0 0.0
    %1219 = vmatpush1.msra.mxu0 0.0
    %1220 = vmatprep.subr.mxu0 0.0
    %1221 = vmatpush1.msra.mxu0 0.0
    %1222 = vmatprep.subr.mxu0 0.0
    %1223 = vmatpush1.msra.mxu0 0.0
    %1224 = vmatprep.subr.mxu0 0.0
    %1225 = vmatpush1.msra.mxu0 0.0
    %1226 = vmatprep.subr.mxu0 0.0
    %1227 = vmatpush1.msra.mxu0 0.0
    %1228 = vmatprep.subr.mxu0 0.0
    %1229 = vmatpush1.msra.mxu0 0.0
    %1230 = vmatprep.mubr.f32.mxu0 0.0
    %1231 = vmatmul.mubr.f32.gmra.mrb[0].mxu0 %v1162
    %v1232 = vpop.f32.mrb[0].mxu0
    %v1233 = vadd.f32 0.0, %v1232
    %v1234 = vpop.f32.mrb[0].mxu0
    %1235 = vmatprep.mubr.f32.mxu0 0.0
    %1236 = vmatmul.mubr.f32.gmra.mrb[0].mxu0 %v1164
    %v1237 = vpop.f32.mrb[0].mxu0
    %v1238 = vadd.f32 0.0, %v1237
    %v1239 = vpop.f32.mrb[0].mxu0
    %1240 = vdwg.mxu0
    %v1243 = vcombine.high %v1233, %v1233
    %v1245 = vunpack.c.l.s4 1983009808
    %v1246 = vunpack.c.0.s8 %v1245
    %v1247 = vlaneseq
    %v1248 = vshrl.u32 %v1247, 7
    %v1249 = vsub.s32 %v1246, %v1248
    %v1250 = vrot.slane %v1233, %v1249
    %v1252 = vunpack.c.l.s4 1983009808
    %v1253 = vunpack.c.0.s8 %v1252
    %v1254 = vlaneseq
    %v1255 = vshrl.u32 %v1254, 7
    %v1256 = vsub.s32 %v1253, %v1255
    %v1257 = vrot.slane %v1243, %v1256
    %v1258 = vcombine.high %v1250, %v1250
    %v1259 = vcombine.high %v1257, %v1257
    %v1260 = vcombine.high %v1238, %v1238
    %v1262 = vunpack.c.l.s4 1983009808
    %v1263 = vunpack.c.0.s8 %v1262
    %v1264 = vlaneseq
    %v1265 = vshrl.u32 %v1264, 7
    %v1266 = vsub.s32 %v1263, %v1265
    %v1267 = vrot.slane %v1238, %v1266
    %v1269 = vunpack.c.l.s4 1983009808
    %v1270 = vunpack.c.0.s8 %v1269
    %v1271 = vlaneseq
    %v1272 = vshrl.u32 %v1271, 7
    %v1273 = vsub.s32 %v1270, %v1272
    %v1274 = vrot.slane %v1260, %v1273
    %v1275 = vcombine.high %v1267, %v1267
    %v1276 = vcombine.high %v1274, %v1274
    %v1286 = vlaneseq
    %v1287 = vshrl.u32 %v1286, 7
    %v1288 = vsub.s32 0, %v1287
    %v1289 = vrot.slane %v1078, %v1288
    %v1291 = vadd.f32 %v1250, %v1289
    %v1292 = vadd.f32 %v1258, %v1289
    %v1293 = vadd.f32 %v1257, %v1289
    %v1294 = vadd.f32 %v1259, %v1289
    %v1295 = vadd.f32 %v1267, %v1289
    %v1296 = vadd.f32 %v1275, %v1289
    %v1297 = vadd.f32 %v1274, %v1289
    %v1298 = vadd.f32 %v1276, %v1289
    %1299 = vst [vmem:[#allocation2] sm:$0x3] %v1291
    %1300 = vst [vmem:[#allocation2 + $0x2] sm:$0x3] %v1292
    %1301 = vst [vmem:[#allocation2 + $0x4] sm:$0x3] %v1293
    %1302 = vst [vmem:[#allocation2 + $0x6] sm:$0x3] %v1294
    %1303 = vst [vmem:[#allocation2 + $0x8] sm:$0x3] %v1295
    %1304 = vst [vmem:[#allocation2 + $0xa] sm:$0x3] %v1296
    %1305 = vst [vmem:[#allocation2 + $0xc] sm:$0x3] %v1297
    %1306 = vst [vmem:[#allocation2 + $0xe] sm:$0x3] %v1298
    %s1307 = scalar_lea.vmem [#allocation5], 4
    %v1308 = vld [vmem:[%s1307] sm:$0x3]
    %s1309 = scalar_lea.vmem [#allocation5], 6
    %v1310 = vld [vmem:[%s1309] sm:$0x3]
    %1312 = vrot.lane.b32.xlu0 %v1310, 16
    %v1313 = vpop.permute.xlu0 %1312
    %v1315 = vsel %vm210, %v1308, %v1313
    %s1316 = scalar_lea.vmem [#allocation7], 4
    %v1317 = vld [vmem:[%s1316] sm:$0x3]
    %s1318 = scalar_lea.vmem [#allocation7], 6
    %v1319 = vld [vmem:[%s1318] sm:$0x3]
    %1321 = vrot.lane.b32.xlu0 %v1319, 16
    %v1322 = vpop.permute.xlu0 %1321
    %v1324 = vsel %vm210, %v1317, %v1322
    %v1325 = vld [vmem:[#allocation2] sm:$0x3]
    %v1327 = vsel %vm221, %v1315, 0
    %1329 = vmatprep.subr.mxu0 0.0
    %1330 = vmatpush1.msra.mxu0 %v1074
    %1331 = vmatprep.subr.mxu0 0.0
    %1332 = vmatpush1.msra.mxu0 %v1075
    %1333 = vmatprep.subr.mxu0 0.0
    %1334 = vmatpush1.msra.mxu0 %v1076
    %1335 = vmatprep.subr.mxu0 0.0
    %1336 = vmatpush1.msra.mxu0 %v1077
    %1337 = vmatprep.subr.mxu0 0.0
    %1338 = vmatpush1.msra.mxu0 0.0
    %1339 = vmatprep.subr.mxu0 0.0
    %1340 = vmatpush1.msra.mxu0 0.0
    %1341 = vmatprep.subr.mxu0 0.0
    %1342 = vmatpush1.msra.mxu0 0.0
    %1343 = vmatprep.subr.mxu0 0.0
    %1344 = vmatpush1.msra.mxu0 0.0
    %1345 = vmatprep.subr.mxu0 0.0
    %1346 = vmatpush1.msra.mxu0 0.0
    %1347 = vmatprep.subr.mxu0 0.0
    %1348 = vmatpush1.msra.mxu0 0.0
    %1349 = vmatprep.subr.mxu0 0.0
    %1350 = vmatpush1.msra.mxu0 0.0
    %1351 = vmatprep.subr.mxu0 0.0
    %1352 = vmatpush1.msra.mxu0 0.0
    %1353 = vmatprep.subr.mxu0 0.0
    %1354 = vmatpush1.msra.mxu0 0.0
    %1355 = vmatprep.subr.mxu0 0.0
    %1356 = vmatpush1.msra.mxu0 0.0
    %1357 = vmatprep.subr.mxu0 0.0
    %1358 = vmatpush1.msra.mxu0 0.0
    %1359 = vmatprep.subr.mxu0 0.0
    %1360 = vmatpush1.msra.mxu0 0.0
    %1361 = vmatprep.subr.mxu0 0.0
    %1362 = vmatpush1.msra.mxu0 0.0
    %1363 = vmatprep.subr.mxu0 0.0
    %1364 = vmatpush1.msra.mxu0 0.0
    %1365 = vmatprep.subr.mxu0 0.0
    %1366 = vmatpush1.msra.mxu0 0.0
    %1367 = vmatprep.subr.mxu0 0.0
    %1368 = vmatpush1.msra.mxu0 0.0
    %1369 = vmatprep.subr.mxu0 0.0
    %1370 = vmatpush1.msra.mxu0 0.0
    %1371 = vmatprep.subr.mxu0 0.0
    %1372 = vmatpush1.msra.mxu0 0.0
    %1373 = vmatprep.subr.mxu0 0.0
    %1374 = vmatpush1.msra.mxu0 0.0
    %1375 = vmatprep.subr.mxu0 0.0
    %1376 = vmatpush1.msra.mxu0 0.0
    %1377 = vmatprep.subr.mxu0 0.0
    %1378 = vmatpush1.msra.mxu0 0.0
    %1379 = vmatprep.subr.mxu0 0.0
    %1380 = vmatpush1.msra.mxu0 0.0
    %1381 = vmatprep.subr.mxu0 0.0
    %1382 = vmatpush1.msra.mxu0 0.0
    %1383 = vmatprep.subr.mxu0 0.0
    %1384 = vmatpush1.msra.mxu0 0.0
    %1385 = vmatprep.subr.mxu0 0.0
    %1386 = vmatpush1.msra.mxu0 0.0
    %1387 = vmatprep.subr.mxu0 0.0
    %1388 = vmatpush1.msra.mxu0 0.0
    %1389 = vmatprep.subr.mxu0 0.0
    %1390 = vmatpush1.msra.mxu0 0.0
    %1391 = vmatprep.subr.mxu0 0.0
    %1392 = vmatpush1.msra.mxu0 0.0
    %1393 = vmatprep.mubr.f32.mxu0 0.0
    %1394 = vmatmul.mubr.f32.gmra.mrb[0].mxu0 %v1327
    %v1395 = vpop.f32.mrb[0].mxu0
    %v1396 = vadd.f32 0.0, %v1395
    %v1397 = vpop.f32.mrb[0].mxu0
    %1398 = vdwg.mxu0
    %v1399 = vadd.f32 %v1325, %v1396
    %v1400 = vmul.f32 %v1399, 0.5
    %v1401 = vtanh.pop %v1400
    %v1402 = vmul.f32 %v1401, 0.5
    %v1403 = vadd.f32 %v1402, 0.5
    %v1404 = vtanh.pop %v1399
    %1406 = vrot.lane.b32.xlu0 %v1324, 32
    %v1407 = vpop.permute.xlu0 %1406
    %v1409 = vmul.f32 %v1403, %v1407
    %1411 = vrot.lane.b32.xlu0 %v1404, 32
    %v1412 = vpop.permute.xlu0 %1411
    %v1414 = vmul.f32 %v1403, %v1412
    %1416 = vrot.lane.b32.xlu0 %v1414, 32
    %v1417 = vpop.permute.xlu0 %1416
    %v1419 = vadd.f32 %v1409, %v1417
    %v1420 = vtanh.pop %v1419
    %1422 = vrot.lane.b32.xlu0 %v1420, 32
    %v1423 = vpop.permute.xlu0 %1422
    %v1425 = vmul.f32 %v1403, %v1423
    %1427 = vrot.lane.b32.xlu0 %v1425, 64
    %v1428 = vpop.permute.xlu0 %1427
    %1430 = vst.msk [vmem:[#allocation3] sm:$0x3] %vm326, %v1428
    %1431 = vst.msk [vmem:[%s328] sm:$0x3] %vm329, %v1428
    %v1432 = vld [vmem:[%s331] sm:$0x3]
    %v1433 = vsel %vm221, %v1428, 0
    %1435 = vmatprep.subr.mxu0 0.0
    %1436 = vmatpush1.msra.mxu0 %v1074
    %1437 = vmatprep.subr.mxu0 0.0
    %1438 = vmatpush1.msra.mxu0 %v1075
    %1439 = vmatprep.subr.mxu0 0.0
    %1440 = vmatpush1.msra.mxu0 %v1076
    %1441 = vmatprep.subr.mxu0 0.0
    %1442 = vmatpush1.msra.mxu0 %v1077
    %1443 = vmatprep.subr.mxu0 0.0
    %1444 = vmatpush1.msra.mxu0 0.0
    %1445 = vmatprep.subr.mxu0 0.0
    %1446 = vmatpush1.msra.mxu0 0.0
    %1447 = vmatprep.subr.mxu0 0.0
    %1448 = vmatpush1.msra.mxu0 0.0
    %1449 = vmatprep.subr.mxu0 0.0
    %1450 = vmatpush1.msra.mxu0 0.0
    %1451 = vmatprep.subr.mxu0 0.0
    %1452 = vmatpush1.msra.mxu0 0.0
    %1453 = vmatprep.subr.mxu0 0.0
    %1454 = vmatpush1.msra.mxu0 0.0
    %1455 = vmatprep.subr.mxu0 0.0
    %1456 = vmatpush1.msra.mxu0 0.0
    %1457 = vmatprep.subr.mxu0 0.0
    %1458 = vmatpush1.msra.mxu0 0.0
    %1459 = vmatprep.subr.mxu0 0.0
    %1460 = vmatpush1.msra.mxu0 0.0
    %1461 = vmatprep.subr.mxu0 0.0
    %1462 = vmatpush1.msra.mxu0 0.0
    %1463 = vmatprep.subr.mxu0 0.0
    %1464 = vmatpush1.msra.mxu0 0.0
    %1465 = vmatprep.subr.mxu0 0.0
    %1466 = vmatpush1.msra.mxu0 0.0
    %1467 = vmatprep.subr.mxu0 0.0
    %1468 = vmatpush1.msra.mxu0 0.0
    %1469 = vmatprep.subr.mxu0 0.0
    %1470 = vmatpush1.msra.mxu0 0.0
    %1471 = vmatprep.subr.mxu0 0.0
    %1472 = vmatpush1.msra.mxu0 0.0
    %1473 = vmatprep.subr.mxu0 0.0
    %1474 = vmatpush1.msra.mxu0 0.0
    %1475 = vmatprep.subr.mxu0 0.0
    %1476 = vmatpush1.msra.mxu0 0.0
    %1477 = vmatprep.subr.mxu0 0.0
    %1478 = vmatpush1.msra.mxu0 0.0
    %1479 = vmatprep.subr.mxu0 0.0
    %1480 = vmatpush1.msra.mxu0 0.0
    %1481 = vmatprep.subr.mxu0 0.0
    %1482 = vmatpush1.msra.mxu0 0.0
    %1483 = vmatprep.subr.mxu0 0.0
    %1484 = vmatpush1.msra.mxu0 0.0
    %1485 = vmatprep.subr.mxu0 0.0
    %1486 = vmatpush1.msra.mxu0 0.0
    %1487 = vmatprep.subr.mxu0 0.0
    %1488 = vmatpush1.msra.mxu0 0.0
    %1489 = vmatprep.subr.mxu0 0.0
    %1490 = vmatpush1.msra.mxu0 0.0
    %1491 = vmatprep.subr.mxu0 0.0
    %1492 = vmatpush1.msra.mxu0 0.0
    %1493 = vmatprep.subr.mxu0 0.0
    %1494 = vmatpush1.msra.mxu0 0.0
    %1495 = vmatprep.subr.mxu0 0.0
    %1496 = vmatpush1.msra.mxu0 0.0
    %1497 = vmatprep.subr.mxu0 0.0
    %1498 = vmatpush1.msra.mxu0 0.0
    %1499 = vmatprep.mubr.f32.mxu0 0.0
    %1500 = vmatmul.mubr.f32.gmra.mrb[0].mxu0 %v1433
    %v1501 = vpop.f32.mrb[0].mxu0
    %v1502 = vadd.f32 0.0, %v1501
    %v1503 = vpop.f32.mrb[0].mxu0
    %1504 = vdwg.mxu0
    %v1505 = vadd.f32 %v1432, %v1502
    %v1506 = vmul.f32 %v1505, 0.5
    %v1507 = vtanh.pop %v1506
    %v1508 = vmul.f32 %v1507, 0.5
    %v1509 = vadd.f32 %v1508, 0.5
    %v1510 = vtanh.pop %v1505
    %v1511 = vmul.f32 %v1509, %v1419
    %1513 = vrot.lane.b32.xlu0 %v1510, 32
    %v1514 = vpop.permute.xlu0 %1513
    %v1516 = vmul.f32 %v1509, %v1514
    %1518 = vrot.lane.b32.xlu0 %v1516, 32
    %v1519 = vpop.permute.xlu0 %1518
    %v1521 = vadd.f32 %v1511, %v1519
    %v1522 = vtanh.pop %v1521
    %1524 = vrot.lane.b32.xlu0 %v1522, 32
    %v1525 = vpop.permute.xlu0 %1524
    %v1527 = vmul.f32 %v1509, %v1525
    %1529 = vrot.lane.b32.xlu0 %v1527, 64
    %v1530 = vpop.permute.xlu0 %1529
    %1532 = vst.msk [vmem:[%s432] sm:$0x3] %vm326, %v1530
    %1533 = vst.msk [vmem:[%s434] sm:$0x3] %vm329, %v1530
    %v1534 = vld [vmem:[%s436] sm:$0x3]
    %v1535 = vsel %vm221, %v1530, 0
    %1537 = vmatprep.subr.mxu0 0.0
    %1538 = vmatpush1.msra.mxu0 %v1074
    %1539 = vmatprep.subr.mxu0 0.0
    %1540 = vmatpush1.msra.mxu0 %v1075
    %1541 = vmatprep.subr.mxu0 0.0
    %1542 = vmatpush1.msra.mxu0 %v1076
    %1543 = vmatprep.subr.mxu0 0.0
    %1544 = vmatpush1.msra.mxu0 %v1077
    %1545 = vmatprep.subr.mxu0 0.0
    %1546 = vmatpush1.msra.mxu0 0.0
    %1547 = vmatprep.subr.mxu0 0.0
    %1548 = vmatpush1.msra.mxu0 0.0
    %1549 = vmatprep.subr.mxu0 0.0
    %1550 = vmatpush1.msra.mxu0 0.0
    %1551 = vmatprep.subr.mxu0 0.0
    %1552 = vmatpush1.msra.mxu0 0.0
    %1553 = vmatprep.subr.mxu0 0.0
    %1554 = vmatpush1.msra.mxu0 0.0
    %1555 = vmatprep.subr.mxu0 0.0
    %1556 = vmatpush1.msra.mxu0 0.0
    %1557 = vmatprep.subr.mxu0 0.0
    %1558 = vmatpush1.msra.mxu0 0.0
    %1559 = vmatprep.subr.mxu0 0.0
    %1560 = vmatpush1.msra.mxu0 0.0
    %1561 = vmatprep.subr.mxu0 0.0
    %1562 = vmatpush1.msra.mxu0 0.0
    %1563 = vmatprep.subr.mxu0 0.0
    %1564 = vmatpush1.msra.mxu0 0.0
    %1565 = vmatprep.subr.mxu0 0.0
    %1566 = vmatpush1.msra.mxu0 0.0
    %1567 = vmatprep.subr.mxu0 0.0
    %1568 = vmatpush1.msra.mxu0 0.0
    %1569 = vmatprep.subr.mxu0 0.0
    %1570 = vmatpush1.msra.mxu0 0.0
    %1571 = vmatprep.subr.mxu0 0.0
    %1572 = vmatpush1.msra.mxu0 0.0
    %1573 = vmatprep.subr.mxu0 0.0
    %1574 = vmatpush1.msra.mxu0 0.0
    %1575 = vmatprep.subr.mxu0 0.0
    %1576 = vmatpush1.msra.mxu0 0.0
    %1577 = vmatprep.subr.mxu0 0.0
    %1578 = vmatpush1.msra.mxu0 0.0
    %1579 = vmatprep.subr.mxu0 0.0
    %1580 = vmatpush1.msra.mxu0 0.0
    %1581 = vmatprep.subr.mxu0 0.0
    %1582 = vmatpush1.msra.mxu0 0.0
    %1583 = vmatprep.subr.mxu0 0.0
    %1584 = vmatpush1.msra.mxu0 0.0
    %1585 = vmatprep.subr.mxu0 0.0
    %1586 = vmatpush1.msra.mxu0 0.0
    %1587 = vmatprep.subr.mxu0 0.0
    %1588 = vmatpush1.msra.mxu0 0.0
    %1589 = vmatprep.subr.mxu0 0.0
    %1590 = vmatpush1.msra.mxu0 0.0
    %1591 = vmatprep.subr.mxu0 0.0
    %1592 = vmatpush1.msra.mxu0 0.0
    %1593 = vmatprep.subr.mxu0 0.0
    %1594 = vmatpush1.msra.mxu0 0.0
    %1595 = vmatprep.subr.mxu0 0.0
    %1596 = vmatpush1.msra.mxu0 0.0
    %1597 = vmatprep.subr.mxu0 0.0
    %1598 = vmatpush1.msra.mxu0 0.0
    %1599 = vmatprep.subr.mxu0 0.0
    %1600 = vmatpush1.msra.mxu0 0.0
    %1601 = vmatprep.mubr.f32.mxu0 0.0
    %1602 = vmatmul.mubr.f32.gmra.mrb[0].mxu0 %v1535
    %v1603 = vpop.f32.mrb[0].mxu0
    %v1604 = vadd.f32 0.0, %v1603
    %v1605 = vpop.f32.mrb[0].mxu0
    %1606 = vdwg.mxu0
    %v1607 = vadd.f32 %v1534, %v1604
    %v1608 = vmul.f32 %v1607, 0.5
    %v1609 = vtanh.pop %v1608
    %v1610 = vmul.f32 %v1609, 0.5
    %v1611 = vadd.f32 %v1610, 0.5
    %v1612 = vtanh.pop %v1607
    %v1613 = vmul.f32 %v1611, %v1521
    %1615 = vrot.lane.b32.xlu0 %v1612, 32
    %v1616 = vpop.permute.xlu0 %1615
    %v1618 = vmul.f32 %v1611, %v1616
    %1620 = vrot.lane.b32.xlu0 %v1618, 32
    %v1621 = vpop.permute.xlu0 %1620
    %v1623 = vadd.f32 %v1613, %v1621
    %v1624 = vtanh.pop %v1623
    %1626 = vrot.lane.b32.xlu0 %v1624, 32
    %v1627 = vpop.permute.xlu0 %1626
    %v1629 = vmul.f32 %v1611, %v1627
    %1631 = vrot.lane.b32.xlu0 %v1629, 64
    %v1632 = vpop.permute.xlu0 %1631
    %1634 = vst.msk [vmem:[%s537] sm:$0x3] %vm326, %v1632
    %1635 = vst.msk [vmem:[%s539] sm:$0x3] %vm329, %v1632
    %v1636 = vld [vmem:[%s541] sm:$0x3]
    %v1637 = vsel %vm221, %v1632, 0
    %1639 = vmatprep.subr.mxu0 0.0
    %1640 = vmatpush1.msra.mxu0 %v1074
    %1641 = vmatprep.subr.mxu0 0.0
    %1642 = vmatpush1.msra.mxu0 %v1075
    %1643 = vmatprep.subr.mxu0 0.0
    %1644 = vmatpush1.msra.mxu0 %v1076
    %1645 = vmatprep.subr.mxu0 0.0
    %1646 = vmatpush1.msra.mxu0 %v1077
    %1647 = vmatprep.subr.mxu0 0.0
    %1648 = vmatpush1.msra.mxu0 0.0
    %1649 = vmatprep.subr.mxu0 0.0
    %1650 = vmatpush1.msra.mxu0 0.0
    %1651 = vmatprep.subr.mxu0 0.0
    %1652 = vmatpush1.msra.mxu0 0.0
    %1653 = vmatprep.subr.mxu0 0.0
    %1654 = vmatpush1.msra.mxu0 0.0
    %1655 = vmatprep.subr.mxu0 0.0
    %1656 = vmatpush1.msra.mxu0 0.0
    %1657 = vmatprep.subr.mxu0 0.0
    %1658 = vmatpush1.msra.mxu0 0.0
    %1659 = vmatprep.subr.mxu0 0.0
    %1660 = vmatpush1.msra.mxu0 0.0
    %1661 = vmatprep.subr.mxu0 0.0
    %1662 = vmatpush1.msra.mxu0 0.0
    %1663 = vmatprep.subr.mxu0 0.0
    %1664 = vmatpush1.msra.mxu0 0.0
    %1665 = vmatprep.subr.mxu0 0.0
    %1666 = vmatpush1.msra.mxu0 0.0
    %1667 = vmatprep.subr.mxu0 0.0
    %1668 = vmatpush1.msra.mxu0 0.0
    %1669 = vmatprep.subr.mxu0 0.0
    %1670 = vmatpush1.msra.mxu0 0.0
    %1671 = vmatprep.subr.mxu0 0.0
    %1672 = vmatpush1.msra.mxu0 0.0
    %1673 = vmatprep.subr.mxu0 0.0
    %1674 = vmatpush1.msra.mxu0 0.0
    %1675 = vmatprep.subr.mxu0 0.0
    %1676 = vmatpush1.msra.mxu0 0.0
    %1677 = vmatprep.subr.mxu0 0.0
    %1678 = vmatpush1.msra.mxu0 0.0
    %1679 = vmatprep.subr.mxu0 0.0
    %1680 = vmatpush1.msra.mxu0 0.0
    %1681 = vmatprep.subr.mxu0 0.0
    %1682 = vmatpush1.msra.mxu0 0.0
    %1683 = vmatprep.subr.mxu0 0.0
    %1684 = vmatpush1.msra.mxu0 0.0
    %1685 = vmatprep.subr.mxu0 0.0
    %1686 = vmatpush1.msra.mxu0 0.0
    %1687 = vmatprep.subr.mxu0 0.0
    %1688 = vmatpush1.msra.mxu0 0.0
    %1689 = vmatprep.subr.mxu0 0.0
    %1690 = vmatpush1.msra.mxu0 0.0
    %1691 = vmatprep.subr.mxu0 0.0
    %1692 = vmatpush1.msra.mxu0 0.0
    %1693 = vmatprep.subr.mxu0 0.0
    %1694 = vmatpush1.msra.mxu0 0.0
    %1695 = vmatprep.subr.mxu0 0.0
    %1696 = vmatpush1.msra.mxu0 0.0
    %1697 = vmatprep.subr.mxu0 0.0
    %1698 = vmatpush1.msra.mxu0 0.0
    %1699 = vmatprep.subr.mxu0 0.0
    %1700 = vmatpush1.msra.mxu0 0.0
    %1701 = vmatprep.subr.mxu0 0.0
    %1702 = vmatpush1.msra.mxu0 0.0
    %1703 = vmatprep.mubr.f32.mxu0 0.0
    %1704 = vmatmul.mubr.f32.gmra.mrb[0].mxu0 %v1637
    %v1705 = vpop.f32.mrb[0].mxu0
    %v1706 = vadd.f32 0.0, %v1705
    %v1707 = vpop.f32.mrb[0].mxu0
    %1708 = vdwg.mxu0
    %v1709 = vadd.f32 %v1636, %v1706
    %v1710 = vmul.f32 %v1709, 0.5
    %v1711 = vtanh.pop %v1710
    %v1712 = vmul.f32 %v1711, 0.5
    %v1713 = vadd.f32 %v1712, 0.5
    %v1714 = vtanh.pop %v1709
    %v1715 = vmul.f32 %v1713, %v1623
    %1717 = vrot.lane.b32.xlu0 %v1714, 32
    %v1718 = vpop.permute.xlu0 %1717
    %v1720 = vmul.f32 %v1713, %v1718
    %1722 = vrot.lane.b32.xlu0 %v1720, 32
    %v1723 = vpop.permute.xlu0 %1722
    %v1725 = vadd.f32 %v1715, %v1723
    %v1726 = vtanh.pop %v1725
    %1728 = vrot.lane.b32.xlu0 %v1726, 32
    %v1729 = vpop.permute.xlu0 %1728
    %v1731 = vmul.f32 %v1713, %v1729
    %1733 = vrot.lane.b32.xlu0 %v1731, 64
    %v1734 = vpop.permute.xlu0 %1733
    %1736 = vst.msk [vmem:[%s642] sm:$0x3] %vm326, %v1734
    %1737 = vst.msk [vmem:[%s644] sm:$0x3] %vm329, %v1734
    %v1738 = vld [vmem:[%s646] sm:$0x3]
    %v1739 = vsel %vm221, %v1734, 0
    %1741 = vmatprep.subr.mxu0 0.0
    %1742 = vmatpush1.msra.mxu0 %v1074
    %1743 = vmatprep.subr.mxu0 0.0
    %1744 = vmatpush1.msra.mxu0 %v1075
    %1745 = vmatprep.subr.mxu0 0.0
    %1746 = vmatpush1.msra.mxu0 %v1076
    %1747 = vmatprep.subr.mxu0 0.0
    %1748 = vmatpush1.msra.mxu0 %v1077
    %1749 = vmatprep.subr.mxu0 0.0
    %1750 = vmatpush1.msra.mxu0 0.0
    %1751 = vmatprep.subr.mxu0 0.0
    %1752 = vmatpush1.msra.mxu0 0.0
    %1753 = vmatprep.subr.mxu0 0.0
    %1754 = vmatpush1.msra.mxu0 0.0
    %1755 = vmatprep.subr.mxu0 0.0
    %1756 = vmatpush1.msra.mxu0 0.0
    %1757 = vmatprep.subr.mxu0 0.0
    %1758 = vmatpush1.msra.mxu0 0.0
    %1759 = vmatprep.subr.mxu0 0.0
    %1760 = vmatpush1.msra.mxu0 0.0
    %1761 = vmatprep.subr.mxu0 0.0
    %1762 = vmatpush1.msra.mxu0 0.0
    %1763 = vmatprep.subr.mxu0 0.0
    %1764 = vmatpush1.msra.mxu0 0.0
    %1765 = vmatprep.subr.mxu0 0.0
    %1766 = vmatpush1.msra.mxu0 0.0
    %1767 = vmatprep.subr.mxu0 0.0
    %1768 = vmatpush1.msra.mxu0 0.0
    %1769 = vmatprep.subr.mxu0 0.0
    %1770 = vmatpush1.msra.mxu0 0.0
    %1771 = vmatprep.subr.mxu0 0.0
    %1772 = vmatpush1.msra.mxu0 0.0
    %1773 = vmatprep.subr.mxu0 0.0
    %1774 = vmatpush1.msra.mxu0 0.0
    %1775 = vmatprep.subr.mxu0 0.0
    %1776 = vmatpush1.msra.mxu0 0.0
    %1777 = vmatprep.subr.mxu0 0.0
    %1778 = vmatpush1.msra.mxu0 0.0
    %1779 = vmatprep.subr.mxu0 0.0
    %1780 = vmatpush1.msra.mxu0 0.0
    %1781 = vmatprep.subr.mxu0 0.0
    %1782 = vmatpush1.msra.mxu0 0.0
    %1783 = vmatprep.subr.mxu0 0.0
    %1784 = vmatpush1.msra.mxu0 0.0
    %1785 = vmatprep.subr.mxu0 0.0
    %1786 = vmatpush1.msra.mxu0 0.0
    %1787 = vmatprep.subr.mxu0 0.0
    %1788 = vmatpush1.msra.mxu0 0.0
    %1789 = vmatprep.subr.mxu0 0.0
    %1790 = vmatpush1.msra.mxu0 0.0
    %1791 = vmatprep.subr.mxu0 0.0
    %1792 = vmatpush1.msra.mxu0 0.0
    %1793 = vmatprep.subr.mxu0 0.0
    %1794 = vmatpush1.msra.mxu0 0.0
    %1795 = vmatprep.subr.mxu0 0.0
    %1796 = vmatpush1.msra.mxu0 0.0
    %1797 = vmatprep.subr.mxu0 0.0
    %1798 = vmatpush1.msra.mxu0 0.0
    %1799 = vmatprep.subr.mxu0 0.0
    %1800 = vmatpush1.msra.mxu0 0.0
    %1801 = vmatprep.subr.mxu0 0.0
    %1802 = vmatpush1.msra.mxu0 0.0
    %1803 = vmatprep.subr.mxu0 0.0
    %1804 = vmatpush1.msra.mxu0 0.0
    %1805 = vmatprep.mubr.f32.mxu0 0.0
    %1806 = vmatmul.mubr.f32.gmra.mrb[0].mxu0 %v1739
    %v1807 = vpop.f32.mrb[0].mxu0
    %v1808 = vadd.f32 0.0, %v1807
    %v1809 = vpop.f32.mrb[0].mxu0
    %1810 = vdwg.mxu0
    %v1811 = vadd.f32 %v1738, %v1808
    %v1812 = vmul.f32 %v1811, 0.5
    %v1813 = vtanh.pop %v1812
    %v1814 = vmul.f32 %v1813, 0.5
    %v1815 = vadd.f32 %v1814, 0.5
    %v1816 = vtanh.pop %v1811
    %v1817 = vmul.f32 %v1815, %v1725
    %1819 = vrot.lane.b32.xlu0 %v1816, 32
    %v1820 = vpop.permute.xlu0 %1819
    %v1822 = vmul.f32 %v1815, %v1820
    %1824 = vrot.lane.b32.xlu0 %v1822, 32
    %v1825 = vpop.permute.xlu0 %1824
    %v1827 = vadd.f32 %v1817, %v1825
    %v1828 = vtanh.pop %v1827
    %1830 = vrot.lane.b32.xlu0 %v1828, 32
    %v1831 = vpop.permute.xlu0 %1830
    %v1833 = vmul.f32 %v1815, %v1831
    %1835 = vrot.lane.b32.xlu0 %v1833, 64
    %v1836 = vpop.permute.xlu0 %1835
    %1838 = vst.msk [vmem:[%s644] sm:$0x3] %vm326, %v1836
    %1839 = vst.msk [vmem:[%s642] sm:$0x3] %vm329, %v1836
    %v1840 = vld [vmem:[%s749] sm:$0x3]
    %v1841 = vsel %vm221, %v1836, 0
    %1843 = vmatprep.subr.mxu0 0.0
    %1844 = vmatpush1.msra.mxu0 %v1074
    %1845 = vmatprep.subr.mxu0 0.0
    %1846 = vmatpush1.msra.mxu0 %v1075
    %1847 = vmatprep.subr.mxu0 0.0
    %1848 = vmatpush1.msra.mxu0 %v1076
    %1849 = vmatprep.subr.mxu0 0.0
    %1850 = vmatpush1.msra.mxu0 %v1077
    %1851 = vmatprep.subr.mxu0 0.0
    %1852 = vmatpush1.msra.mxu0 0.0
    %1853 = vmatprep.subr.mxu0 0.0
    %1854 = vmatpush1.msra.mxu0 0.0
    %1855 = vmatprep.subr.mxu0 0.0
    %1856 = vmatpush1.msra.mxu0 0.0
    %1857 = vmatprep.subr.mxu0 0.0
    %1858 = vmatpush1.msra.mxu0 0.0
    %1859 = vmatprep.subr.mxu0 0.0
    %1860 = vmatpush1.msra.mxu0 0.0
    %1861 = vmatprep.subr.mxu0 0.0
    %1862 = vmatpush1.msra.mxu0 0.0
    %1863 = vmatprep.subr.mxu0 0.0
    %1864 = vmatpush1.msra.mxu0 0.0
    %1865 = vmatprep.subr.mxu0 0.0
    %1866 = vmatpush1.msra.mxu0 0.0
    %1867 = vmatprep.subr.mxu0 0.0
    %1868 = vmatpush1.msra.mxu0 0.0
    %1869 = vmatprep.subr.mxu0 0.0
    %1870 = vmatpush1.msra.mxu0 0.0
    %1871 = vmatprep.subr.mxu0 0.0
    %1872 = vmatpush1.msra.mxu0 0.0
    %1873 = vmatprep.subr.mxu0 0.0
    %1874 = vmatpush1.msra.mxu0 0.0
    %1875 = vmatprep.subr.mxu0 0.0
    %1876 = vmatpush1.msra.mxu0 0.0
    %1877 = vmatprep.subr.mxu0 0.0
    %1878 = vmatpush1.msra.mxu0 0.0
    %1879 = vmatprep.subr.mxu0 0.0
    %1880 = vmatpush1.msra.mxu0 0.0
    %1881 = vmatprep.subr.mxu0 0.0
    %1882 = vmatpush1.msra.mxu0 0.0
    %1883 = vmatprep.subr.mxu0 0.0
    %1884 = vmatpush1.msra.mxu0 0.0
    %1885 = vmatprep.subr.mxu0 0.0
    %1886 = vmatpush1.msra.mxu0 0.0
    %1887 = vmatprep.subr.mxu0 0.0
    %1888 = vmatpush1.msra.mxu0 0.0
    %1889 = vmatprep.subr.mxu0 0.0
    %1890 = vmatpush1.msra.mxu0 0.0
    %1891 = vmatprep.subr.mxu0 0.0
    %1892 = vmatpush1.msra.mxu0 0.0
    %1893 = vmatprep.subr.mxu0 0.0
    %1894 = vmatpush1.msra.mxu0 0.0
    %1895 = vmatprep.subr.mxu0 0.0
    %1896 = vmatpush1.msra.mxu0 0.0
    %1897 = vmatprep.subr.mxu0 0.0
    %1898 = vmatpush1.msra.mxu0 0.0
    %1899 = vmatprep.subr.mxu0 0.0
    %1900 = vmatpush1.msra.mxu0 0.0
    %1901 = vmatprep.subr.mxu0 0.0
    %1902 = vmatpush1.msra.mxu0 0.0
    %1903 = vmatprep.subr.mxu0 0.0
    %1904 = vmatpush1.msra.mxu0 0.0
    %1905 = vmatprep.subr.mxu0 0.0
    %1906 = vmatpush1.msra.mxu0 0.0
    %1907 = vmatprep.mubr.f32.mxu0 0.0
    %1908 = vmatmul.mubr.f32.gmra.mrb[0].mxu0 %v1841
    %v1909 = vpop.f32.mrb[0].mxu0
    %v1910 = vadd.f32 0.0, %v1909
    %v1911 = vpop.f32.mrb[0].mxu0
    %1912 = vdwg.mxu0
    %v1913 = vadd.f32 %v1840, %v1910
    %v1914 = vmul.f32 %v1913, 0.5
    %v1915 = vtanh.pop %v1914
    %v1916 = vmul.f32 %v1915, 0.5
    %v1917 = vadd.f32 %v1916, 0.5
    %v1918 = vtanh.pop %v1913
    %v1919 = vmul.f32 %v1917, %v1827
    %1921 = vrot.lane.b32.xlu0 %v1918, 32
    %v1922 = vpop.permute.xlu0 %1921
    %v1924 = vmul.f32 %v1917, %v1922
    %1926 = vrot.lane.b32.xlu0 %v1924, 32
    %v1927 = vpop.permute.xlu0 %1926
    %v1929 = vadd.f32 %v1919, %v1927
    %v1930 = vtanh.pop %v1929
    %1932 = vrot.lane.b32.xlu0 %v1930, 32
    %v1933 = vpop.permute.xlu0 %1932
    %v1935 = vmul.f32 %v1917, %v1933
    %1937 = vrot.lane.b32.xlu0 %v1935, 64
    %v1938 = vpop.permute.xlu0 %1937
    %1940 = vst.msk [vmem:[%s539] sm:$0x3] %vm326, %v1938
    %1941 = vst.msk [vmem:[%s537] sm:$0x3] %vm329, %v1938
    %v1942 = vld [vmem:[%s852] sm:$0x3]
    %v1943 = vsel %vm221, %v1938, 0
    %1945 = vmatprep.subr.mxu0 0.0
    %1946 = vmatpush1.msra.mxu0 %v1074
    %1947 = vmatprep.subr.mxu0 0.0
    %1948 = vmatpush1.msra.mxu0 %v1075
    %1949 = vmatprep.subr.mxu0 0.0
    %1950 = vmatpush1.msra.mxu0 %v1076
    %1951 = vmatprep.subr.mxu0 0.0
    %1952 = vmatpush1.msra.mxu0 %v1077
    %1953 = vmatprep.subr.mxu0 0.0
    %1954 = vmatpush1.msra.mxu0 0.0
    %1955 = vmatprep.subr.mxu0 0.0
    %1956 = vmatpush1.msra.mxu0 0.0
    %1957 = vmatprep.subr.mxu0 0.0
    %1958 = vmatpush1.msra.mxu0 0.0
    %1959 = vmatprep.subr.mxu0 0.0
    %1960 = vmatpush1.msra.mxu0 0.0
    %1961 = vmatprep.subr.mxu0 0.0
    %1962 = vmatpush1.msra.mxu0 0.0
    %1963 = vmatprep.subr.mxu0 0.0
    %1964 = vmatpush1.msra.mxu0 0.0
    %1965 = vmatprep.subr.mxu0 0.0
    %1966 = vmatpush1.msra.mxu0 0.0
    %1967 = vmatprep.subr.mxu0 0.0
    %1968 = vmatpush1.msra.mxu0 0.0
    %1969 = vmatprep.subr.mxu0 0.0
    %1970 = vmatpush1.msra.mxu0 0.0
    %1971 = vmatprep.subr.mxu0 0.0
    %1972 = vmatpush1.msra.mxu0 0.0
    %1973 = vmatprep.subr.mxu0 0.0
    %1974 = vmatpush1.msra.mxu0 0.0
    %1975 = vmatprep.subr.mxu0 0.0
    %1976 = vmatpush1.msra.mxu0 0.0
    %1977 = vmatprep.subr.mxu0 0.0
    %1978 = vmatpush1.msra.mxu0 0.0
    %1979 = vmatprep.subr.mxu0 0.0
    %1980 = vmatpush1.msra.mxu0 0.0
    %1981 = vmatprep.subr.mxu0 0.0
    %1982 = vmatpush1.msra.mxu0 0.0
    %1983 = vmatprep.subr.mxu0 0.0
    %1984 = vmatpush1.msra.mxu0 0.0
    %1985 = vmatprep.subr.mxu0 0.0
    %1986 = vmatpush1.msra.mxu0 0.0
    %1987 = vmatprep.subr.mxu0 0.0
    %1988 = vmatpush1.msra.mxu0 0.0
    %1989 = vmatprep.subr.mxu0 0.0
    %1990 = vmatpush1.msra.mxu0 0.0
    %1991 = vmatprep.subr.mxu0 0.0
    %1992 = vmatpush1.msra.mxu0 0.0
    %1993 = vmatprep.subr.mxu0 0.0
    %1994 = vmatpush1.msra.mxu0 0.0
    %1995 = vmatprep.subr.mxu0 0.0
    %1996 = vmatpush1.msra.mxu0 0.0
    %1997 = vmatprep.subr.mxu0 0.0
    %1998 = vmatpush1.msra.mxu0 0.0
    %1999 = vmatprep.subr.mxu0 0.0
    %2000 = vmatpush1.msra.mxu0 0.0
    %2001 = vmatprep.subr.mxu0 0.0
    %2002 = vmatpush1.msra.mxu0 0.0
    %2003 = vmatprep.subr.mxu0 0.0
    %2004 = vmatpush1.msra.mxu0 0.0
    %2005 = vmatprep.subr.mxu0 0.0
    %2006 = vmatpush1.msra.mxu0 0.0
    %2007 = vmatprep.subr.mxu0 0.0
    %2008 = vmatpush1.msra.mxu0 0.0
    %2009 = vmatprep.mubr.f32.mxu0 0.0
    %2010 = vmatmul.mubr.f32.gmra.mrb[0].mxu0 %v1943
    %v2011 = vpop.f32.mrb[0].mxu0
    %v2012 = vadd.f32 0.0, %v2011
    %v2013 = vpop.f32.mrb[0].mxu0
    %2014 = vdwg.mxu0
    %v2015 = vadd.f32 %v1942, %v2012
    %v2016 = vmul.f32 %v2015, 0.5
    %v2017 = vtanh.pop %v2016
    %v2018 = vmul.f32 %v2017, 0.5
    %v2019 = vadd.f32 %v2018, 0.5
    %v2020 = vtanh.pop %v2015
    %v2021 = vmul.f32 %v2019, %v1929
    %2023 = vrot.lane.b32.xlu0 %v2020, 32
    %v2024 = vpop.permute.xlu0 %2023
    %v2026 = vmul.f32 %v2019, %v2024
    %2028 = vrot.lane.b32.xlu0 %v2026, 32
    %v2029 = vpop.permute.xlu0 %2028
    %v2031 = vadd.f32 %v2021, %v2029
    %v2032 = vtanh.pop %v2031
    %2034 = vrot.lane.b32.xlu0 %v2032, 32
    %v2035 = vpop.permute.xlu0 %2034
    %v2037 = vmul.f32 %v2019, %v2035
    %2039 = vrot.lane.b32.xlu0 %v2037, 64
    %v2040 = vpop.permute.xlu0 %2039
    %2042 = vst.msk [vmem:[%s434] sm:$0x3] %vm326, %v2040
    %2043 = vst.msk [vmem:[%s432] sm:$0x3] %vm329, %v2040
    %v2044 = vld [vmem:[%s955] sm:$0x3]
    %v2045 = vsel %vm221, %v2040, 0
    %2047 = vmatprep.subr.mxu0 0.0
    %2048 = vmatpush1.msra.mxu0 %v1074
    %2049 = vmatprep.subr.mxu0 0.0
    %2050 = vmatpush1.msra.mxu0 %v1075
    %2051 = vmatprep.subr.mxu0 0.0
    %2052 = vmatpush1.msra.mxu0 %v1076
    %2053 = vmatprep.subr.mxu0 0.0
    %2054 = vmatpush1.msra.mxu0 %v1077
    %2055 = vmatprep.subr.mxu0 0.0
    %2056 = vmatpush1.msra.mxu0 0.0
    %2057 = vmatprep.subr.mxu0 0.0
    %2058 = vmatpush1.msra.mxu0 0.0
    %2059 = vmatprep.subr.mxu0 0.0
    %2060 = vmatpush1.msra.mxu0 0.0
    %2061 = vmatprep.subr.mxu0 0.0
    %2062 = vmatpush1.msra.mxu0 0.0
    %2063 = vmatprep.subr.mxu0 0.0
    %2064 = vmatpush1.msra.mxu0 0.0
    %2065 = vmatprep.subr.mxu0 0.0
    %2066 = vmatpush1.msra.mxu0 0.0
    %2067 = vmatprep.subr.mxu0 0.0
    %2068 = vmatpush1.msra.mxu0 0.0
    %2069 = vmatprep.subr.mxu0 0.0
    %2070 = vmatpush1.msra.mxu0 0.0
    %2071 = vmatprep.subr.mxu0 0.0
    %2072 = vmatpush1.msra.mxu0 0.0
    %2073 = vmatprep.subr.mxu0 0.0
    %2074 = vmatpush1.msra.mxu0 0.0
    %2075 = vmatprep.subr.mxu0 0.0
    %2076 = vmatpush1.msra.mxu0 0.0
    %2077 = vmatprep.subr.mxu0 0.0
    %2078 = vmatpush1.msra.mxu0 0.0
    %2079 = vmatprep.subr.mxu0 0.0
    %2080 = vmatpush1.msra.mxu0 0.0
    %2081 = vmatprep.subr.mxu0 0.0
    %2082 = vmatpush1.msra.mxu0 0.0
    %2083 = vmatprep.subr.mxu0 0.0
    %2084 = vmatpush1.msra.mxu0 0.0
    %2085 = vmatprep.subr.mxu0 0.0
    %2086 = vmatpush1.msra.mxu0 0.0
    %2087 = vmatprep.subr.mxu0 0.0
    %2088 = vmatpush1.msra.mxu0 0.0
    %2089 = vmatprep.subr.mxu0 0.0
    %2090 = vmatpush1.msra.mxu0 0.0
    %2091 = vmatprep.subr.mxu0 0.0
    %2092 = vmatpush1.msra.mxu0 0.0
    %2093 = vmatprep.subr.mxu0 0.0
    %2094 = vmatpush1.msra.mxu0 0.0
    %2095 = vmatprep.subr.mxu0 0.0
    %2096 = vmatpush1.msra.mxu0 0.0
    %2097 = vmatprep.subr.mxu0 0.0
    %2098 = vmatpush1.msra.mxu0 0.0
    %2099 = vmatprep.subr.mxu0 0.0
    %2100 = vmatpush1.msra.mxu0 0.0
    %2101 = vmatprep.subr.mxu0 0.0
    %2102 = vmatpush1.msra.mxu0 0.0
    %2103 = vmatprep.subr.mxu0 0.0
    %2104 = vmatpush1.msra.mxu0 0.0
    %2105 = vmatprep.subr.mxu0 0.0
    %2106 = vmatpush1.msra.mxu0 0.0
    %2107 = vmatprep.subr.mxu0 0.0
    %2108 = vmatpush1.msra.mxu0 0.0
    %2109 = vmatprep.subr.mxu0 0.0
    %2110 = vmatpush1.msra.mxu0 0.0
    %2111 = vmatprep.mubr.f32.mxu0 0.0
    %2112 = vmatmul.mubr.f32.gmra.mrb[0].mxu0 %v2045
    %v2113 = vpop.f32.mrb[0].mxu0
    %v2114 = vadd.f32 0.0, %v2113
    %v2115 = vpop.f32.mrb[0].mxu0
    %2116 = vdwg.mxu0
    %v2117 = vadd.f32 %v2044, %v2114
    %v2118 = vmul.f32 %v2117, 0.5
    %v2119 = vtanh.pop %v2118
    %v2120 = vmul.f32 %v2119, 0.5
    %v2121 = vadd.f32 %v2120, 0.5
    %v2122 = vtanh.pop %v2117
    %v2123 = vmul.f32 %v2121, %v2031
    %2125 = vrot.lane.b32.xlu0 %v2122, 32
    %v2126 = vpop.permute.xlu0 %2125
    %v2128 = vmul.f32 %v2121, %v2126
    %2130 = vrot.lane.b32.xlu0 %v2128, 32
    %v2131 = vpop.permute.xlu0 %2130
    %v2133 = vadd.f32 %v2123, %v2131
    %v2134 = vtanh.pop %v2133
    %2136 = vrot.lane.b32.xlu0 %v2134, 32
    %v2137 = vpop.permute.xlu0 %2136
    %v2139 = vmul.f32 %v2121, %v2137
    %2141 = vrot.lane.b32.xlu0 %v2139, 64
    %v2142 = vpop.permute.xlu0 %2141
    %2144 = vst.msk [vmem:[%s328] sm:$0x3] %vm326, %v2142
    %2145 = vst.msk [vmem:[#allocation3] sm:$0x3] %vm329, %v2142
    %v2146 = vld [vmem:[#allocation3] sm:$0x3]
    %v2147 = vld [vmem:[#allocation3 + $0x2] sm:$0x3]
    %v2148 = vld [vmem:[#allocation3 + $0x4] sm:$0x3]
    %v2149 = vld [vmem:[#allocation3 + $0x6] sm:$0x3]
    %v2150 = vld [vmem:[#allocation3 + $0x8] sm:$0x3]
    %v2151 = vld [vmem:[#allocation3 + $0xa] sm:$0x3]
    %v2152 = vld [vmem:[#allocation3 + $0xc] sm:$0x3]
    %v2153 = vld [vmem:[#allocation3 + $0xe] sm:$0x3]
    %v2154 = vld [vmem:[%s9] sm:$0x1]
    %v2155 = vld [vmem:[#allocation4] sm:$0x1]
    %v2157 = vlaneseq
    %v2158 = vshrl.u32 %v2157, 7
    %v2159 = vsub.s32 0, %v2158
    %v2160 = vrot.slane %v2154, %v2159
    %v2162 = vmul.f32 %v2146, %v2160
    %v2163 = vmul.f32 %v2147, %v2160
    %v2164 = vmul.f32 %v2148, %v2160
    %v2165 = vmul.f32 %v2149, %v2160
    %v2166 = vmul.f32 %v2150, %v2160
    %v2167 = vmul.f32 %v2151, %v2160
    %v2168 = vmul.f32 %v2152, %v2160
    %v2169 = vmul.f32 %v2153, %v2160
    %vm2170 = vcmask 254976
    %v2171 = vsel %vm2170, %v2162, 0.0
    %2172 = vadd.xlane.f32.xlu0 %v2171
    %v2173 = vpop.xlane.xlu0 %2172
    %v2174 = vsel %vm2170, %v2163, 0.0
    %2175 = vadd.xlane.f32.xlu0 %v2174
    %v2176 = vpop.xlane.xlu0 %2175
    %v2177 = vsel %vm2170, %v2164, 0.0
    %2178 = vadd.xlane.f32.xlu0 %v2177
    %v2179 = vpop.xlane.xlu0 %2178
    %v2180 = vsel %vm2170, %v2165, 0.0
    %2181 = vadd.xlane.f32.xlu0 %v2180
    %v2182 = vpop.xlane.xlu0 %2181
    %v2183 = vsel %vm2170, %v2166, 0.0
    %2184 = vadd.xlane.f32.xlu0 %v2183
    %v2185 = vpop.xlane.xlu0 %2184
    %v2186 = vsel %vm2170, %v2167, 0.0
    %2187 = vadd.xlane.f32.xlu0 %v2186
    %v2188 = vpop.xlane.xlu0 %2187
    %v2189 = vsel %vm2170, %v2168, 0.0
    %2190 = vadd.xlane.f32.xlu0 %v2189
    %v2191 = vpop.xlane.xlu0 %2190
    %v2192 = vsel %vm2170, %v2169, 0.0
    %2193 = vadd.xlane.f32.xlu0 %v2192
    %v2194 = vpop.xlane.xlu0 %2193
    %v2196 = vlaneseq
    %v2197 = vshrl.u32 %v2196, 7
    %v2198 = vsub.s32 0, %v2197
    %v2199 = vrot.slane %v2155, %v2198
    %2200 = vset.pattern.permute.xlu0 0
    %2201 = vperm.xlu0 %2200, %v2199
    %v2202 = vpop.permute.xlu0 %2201
    %v2204 = vadd.f32 %v2173, %v2202
    %v2205 = vadd.f32 %v2176, %v2202
    %v2206 = vadd.f32 %v2179, %v2202
    %v2207 = vadd.f32 %v2182, %v2202
    %v2208 = vadd.f32 %v2185, %v2202
    %v2209 = vadd.f32 %v2188, %v2202
    %v2210 = vadd.f32 %v2191, %v2202
    %v2211 = vadd.f32 %v2194, %v2202
    %v2220 = vlaneseq
    %v2221 = vand.u32 %v2220, 127
    %v2222 = vlaneseq
    %v2223 = vshrl.u32 %v2222, 7
    %v2224 = vsub.s32 %v2221, %v2223
    %v2225 = vrot.slane %v2204, %v2224
    %v2226 = vlaneseq
    %v2227 = vshrl.u32 %v2226, 7
    %v2228 = vsub.s32 %v2221, %v2227
    %v2229 = vrot.slane %v2205, %v2228
    %v2230 = vlaneseq
    %v2231 = vshrl.u32 %v2230, 7
    %v2232 = vsub.s32 %v2221, %v2231
    %v2233 = vrot.slane %v2206, %v2232
    %v2234 = vlaneseq
    %v2235 = vshrl.u32 %v2234, 7
    %v2236 = vsub.s32 %v2221, %v2235
    %v2237 = vrot.slane %v2207, %v2236
    %v2238 = vlaneseq
    %v2239 = vshrl.u32 %v2238, 7
    %v2240 = vsub.s32 %v2221, %v2239
    %v2241 = vrot.slane %v2208, %v2240
    %v2242 = vlaneseq
    %v2243 = vshrl.u32 %v2242, 7
    %v2244 = vsub.s32 %v2221, %v2243
    %v2245 = vrot.slane %v2209, %v2244
    %v2246 = vlaneseq
    %v2247 = vshrl.u32 %v2246, 7
    %v2248 = vsub.s32 %v2221, %v2247
    %v2249 = vrot.slane %v2210, %v2248
    %v2250 = vlaneseq
    %v2251 = vshrl.u32 %v2250, 7
    %v2252 = vsub.s32 %v2221, %v2251
    %v2253 = vrot.slane %v2211, %v2252
    %vm2254 = vcmask 1041409
    %v2255 = vsel %vm2254, %v2229, %v2225
    %vm2256 = vcmask 1042434
    %v2257 = vsel %vm2256, %v2233, %v2255
    %vm2258 = vcmask 1043459
    %v2259 = vsel %vm2258, %v2237, %v2257
    %vm2260 = vcmask 1044484
    %v2261 = vsel %vm2260, %v2241, %v2259
    %vm2262 = vcmask 1045509
    %v2263 = vsel %vm2262, %v2245, %v2261
    %vm2264 = vcmask 1046534
    %v2265 = vsel %vm2264, %v2249, %v2263
    %vm2266 = vcmask 1047559
    %v2267 = vsel %vm2266, %v2253, %v2265
    %vm2269 = vcmask 15360
    %2270 = vst.msk [vmem:[%s11] sm:$0xff] %vm2269, %v2267
    // Predicated region
    $region62: #{tpu_custom_call.1} parent=1 // pred_check
      _
    $region63: #{tpu_custom_call.1} parent=1 // pred_check_branch
      %2272 = sbr.rel (0) target = $region65
    $region64: #{tpu_custom_call.1} parent=1 // pred_region
      _
    $region65: #{tpu_custom_call.1} parent=1 // pred_fallthru
      _
    // Predicated region
    $region66: #{tpu_custom_call.1} parent=1 // pred_check
      _
    $region67: #{tpu_custom_call.1} parent=1 // pred_check_branch
      %2274 = sbr.rel (0) target = $region69
    $region68: #{tpu_custom_call.1} parent=1 // pred_region
      _
    $region69: #{tpu_custom_call.1} parent=1 // pred_fallthru
      _
    %2275 = vsyncpa [#allocation6], 1
    %2276 = vsyncpa [#allocation8], 1
    %2277 = vsyncpa [#allocation11], 1

</llo_original>
